<compile_context>
chip_gen: v7x
topology: tpu7x:2x2x1
jax: 0.10.0
libtpu: 0.0.40
codegen_flags: <defaults>
</compile_context>

<pallas_src>
from functools import partial

import jax
import jax.numpy as jnp
from jax.experimental import pallas as pl
from jax.experimental.pallas import tpu as pltpu


# ---------------------------------------------------------------------------
# Kernel: one grid step = nb batch elements, packed (D, nb*H, W*C) layout.
# ---------------------------------------------------------------------------
def _basic_block_kernel(x_ref, wb1_ref, b1_ref, wb2_ref, b2_ref, o_ref,
                        pad_ref, *, D, H, nb, WC):
    """Fused BasicBlock forward.

    x_ref  : (D, nb*H, WC)       input tile, f32 (residual source)
    wb*_ref: (3, 3, WC, WC)      W-banded conv weights, bf16 (BN scale folded)
    b*_ref : (1, WC)             per-channel BN bias tiled over W, f32
    o_ref  : (D, nb*H, WC)       output tile, f32
    pad_ref: (D+2, nb*H, WC)     bf16 scratch, zero D-halo planes, reused for
                                 both convs (intermediate y stays in VMEM)
    """
    nbH = nb * H
    M = D * nbH

    # h-position of each (b, h) sublane row, for the kh boundary masks.
    row = jax.lax.broadcasted_iota(jnp.int32, (M, 1), 0)
    h_pos = row % H
    not_first_h = h_pos != 0          # rows that may receive the kh=0 tap
    not_last_h = h_pos != (H - 1)     # rows that may receive the kh=2 tap

    zero_row = jnp.zeros((1, WC), jnp.float32)

    def shift_down(p):                # result[r] = p[r-1], result[0] = 0
        return jnp.concatenate([zero_row, p[:M - 1, :]], axis=0)

    def shift_up(p):                  # result[r] = p[r+1], result[M-1] = 0
        return jnp.concatenate([p[1:, :], zero_row], axis=0)

    def conv3x3x3(wb_ref):
        # W handled inside the banded (WC, WC) weights, D by the zero halo
        # planes (outer-dim slices -> no relayout), H by 2 row-shifts + masks.
        acc = jnp.zeros((M, WC), jnp.float32)
        for kh in range(3):
            part = jnp.zeros((M, WC), jnp.float32)
            for kd in range(3):
                slab = pad_ref[kd:kd + D].reshape(M, WC)   # outer-axis slice
                part = part + jnp.dot(slab, wb_ref[kd, kh],
                                      preferred_element_type=jnp.float32)
            if kh == 0:
                part = jnp.where(not_first_h, shift_down(part), 0.0)
            elif kh == 2:
                part = jnp.where(not_last_h, shift_up(part), 0.0)
            acc = acc + part
        return acc

    # Only the two D-halo planes need clearing (they are never written
    # elsewhere); ~2 vregs, done every step so megacore grid-splitting and the
    # uninitialized first-use stay correct.
    pad_ref[0] = jnp.zeros((nbH, WC), jnp.bfloat16)
    pad_ref[D + 1] = jnp.zeros((nbH, WC), jnp.bfloat16)

    # Stage input in bf16 for the MXU (residual is re-read from x_ref in f32).
    pad_ref[1:D + 1] = x_ref[...].astype(jnp.bfloat16)

    # conv1 + bn1 (scale folded into the weights) + relu; y stays in VMEM.
    y = jnp.maximum(conv3x3x3(wb1_ref) + b1_ref[...], 0.0)
    pad_ref[1:D + 1] = y.reshape(D, nbH, WC).astype(jnp.bfloat16)

    # conv2 + bn2 + residual add + relu.
    out = conv3x3x3(wb2_ref) + b2_ref[...] + x_ref[...].reshape(M, WC)
    # TODO(synk): emit bf16 output if the consumer accepts it (halves HBM
    #             writeback for this mem-bound block).
    o_ref[...] = jnp.maximum(out, 0.0).reshape(D, nbH, WC).astype(o_ref.dtype)


# ---------------------------------------------------------------------------
# Wrapper-side weight / BN preprocessing (tiny, one-time).
# ---------------------------------------------------------------------------
def _fold_bn(gamma, beta, mean, var, eps=1e-5):
    scale = gamma * jax.lax.rsqrt(var + eps)
    bias = beta - mean * scale
    return scale, bias


def _banded_weights(w_dhwio, scale, W):
    """(3,3,3,Cin,Cout) DHWIO weights (BN scale folded into Cout) ->
    (3, 3, W*Cin, W*Cout) block-Toeplitz bf16 matrix: the (kw, ci) contraction
    rides the MXU K dimension; W zero-padding is handled by dropping the pad
    rows so the activation lane axis stays dense (W*C)."""
    kD, kH, kW, Cin, Cout = w_dhwio.shape
    wf = (w_dhwio * scale).reshape(kD, kH, kW * Cin, Cout).astype(jnp.float32)
    wb = jnp.zeros((kD, kH, (W + 2) * Cin, W * Cout), jnp.float32)
    for w in range(W):
        wb = wb.at[:, :, w * Cin:(w + kW) * Cin,
                   w * Cout:(w + 1) * Cout].set(wf)
    return wb[:, :, Cin:(W + 1) * Cin, :].astype(jnp.bfloat16)


def _pick_nb(N, D, H, target_m=128):
    """Smallest divisor of N giving M = nb*D*H >= target_m (else N).
    target_m=128 fills v5e's MXU and half of v6e/v7x while keeping the f32
    accumulator at 16 vregs (no spills)."""
    nb = N
    for cand in range(1, N + 1):
        if N % cand == 0:
            nb = cand
            if cand * D * H >= target_m:
                break
    return nb


def _basic_block_packed(x_packed, wb1, b1p, wb2, b2p, *, N, D, H, WC, nb):
    """Packed-layout entry point: x_packed/out are (D, N*H, W*C) f32."""
    kernel = partial(_basic_block_kernel, D=D, H=H, nb=nb, WC=WC)
    return pl.pallas_call(
        kernel,
        out_shape=jax.ShapeDtypeStruct((D, N * H, WC), jnp.float32),
        grid=(N // nb,),
        in_specs=[
            pl.BlockSpec((D, nb * H, WC), lambda n: (0, n, 0)),
            pl.BlockSpec((3, 3, WC, WC), lambda n: (0, 0, 0, 0)),
            pl.BlockSpec((1, WC), lambda n: (0, 0)),
            pl.BlockSpec((3, 3, WC, WC), lambda n: (0, 0, 0, 0)),
            pl.BlockSpec((1, WC), lambda n: (0, 0)),
        ],
        out_specs=pl.BlockSpec((D, nb * H, WC), lambda n: (0, n, 0)),
        scratch_shapes=[
            pltpu.VMEM((D + 2, nb * H, WC), jnp.bfloat16),   # shared padded buf
        ],
        compiler_params=pltpu.CompilerParams(
            # Batch-group axis shards across TensorCores (v7x megacore).
            dimension_semantics=("parallel",),
            # Explicit limit (v5e default scoped VMEM is 16 MiB); usage here is
            # ~1.5 MiB at the test shape, double-buffers included.
            vmem_limit_bytes=32 * 1024 * 1024,
        ),
    )(x_packed, wb1, b1p, wb2, b2p)


@jax.jit
def basic_block_forward(x_ncdhw, params):
    """BasicBlock forward (stride=1, downsample=None). Input NCDHW like PyTorch."""
    N, C, D, H, W = x_ncdhw.shape
    if (params["w1"].shape != (3, 3, 3, C, C)
            or params["w2"].shape != (3, 3, 3, C, C)):
        raise ValueError(
            "This kernel implements the stride=1 / downsample=None BasicBlock: "
            "requires in_planes == planes and 3x3x3 kernels.")
    WC = W * C
    nb = _pick_nb(N, D, H)

    # NCDHW -> packed (D, N*H, W*C): lane axis W*C, sublane axis (n, h).
    x = jnp.transpose(x_ncdhw, (2, 0, 3, 4, 1)).reshape(D, N * H, WC)

    s1, b1 = _fold_bn(params["bn1_gamma"], params["bn1_beta"],
                      params["bn1_mean"], params["bn1_var"])
    s2, b2 = _fold_bn(params["bn2_gamma"], params["bn2_beta"],
                      params["bn2_mean"], params["bn2_var"])

    wb1 = _banded_weights(params["w1"], s1, W)
    wb2 = _banded_weights(params["w2"], s2, W)
    b1p = jnp.tile(b1, W).reshape(1, WC).astype(jnp.float32)
    b2p = jnp.tile(b2, W).reshape(1, WC).astype(jnp.float32)

    out = _basic_block_packed(x, wb1, b1p, wb2, b2p,
                              N=N, D=D, H=H, WC=WC, nb=nb)

    # packed (D, N*H, W*C) -> NCDHW
    return jnp.transpose(out.reshape(D, N, H, W, C), (1, 4, 0, 2, 3))


# ---------------------------------------------------------------------------
# Pure-JAX reference (lax conv, unfused BN) for the correctness check.
# ---------------------------------------------------------------------------
def _reference_forward(x_ncdhw, params, eps=1e-5):
    x = jnp.transpose(x_ncdhw, (0, 2, 3, 4, 1))
    dn = ("NDHWC", "DHWIO", "NDHWC")

    def conv(inp, w):
        return jax.lax.conv_general_dilated(
            inp, w, window_strides=(1, 1, 1), padding="SAME",
            dimension_numbers=dn)

    def bn(z, g, b, m, v):
        return (z - m) * (g * jax.lax.rsqrt(v + eps)) + b

    y = jnp.maximum(
        bn(conv(x, params["w1"]), params["bn1_gamma"], params["bn1_beta"],
           params["bn1_mean"], params["bn1_var"]), 0.0)
    out = bn(conv(y, params["w2"]), params["bn2_gamma"], params["bn2_beta"],
             params["bn2_mean"], params["bn2_var"]) + x
    out = jnp.maximum(out, 0.0)
    return jnp.transpose(out, (0, 4, 1, 2, 3))


def make_params(key, in_planes, planes):
    ks = jax.random.split(key, 8)
    # PyTorch Conv3d weights are (out, in, kD, kH, kW); we build DHWIO directly.
    w1 = 0.1 * jax.random.normal(ks[0], (3, 3, 3, in_planes, planes), jnp.float32)
    w2 = 0.1 * jax.random.normal(ks[1], (3, 3, 3, planes, planes), jnp.float32)
    return {
        "w1": w1,
        "w2": w2,
        "bn1_gamma": 1.0 + 0.1 * jax.random.normal(ks[2], (planes,), jnp.float32),
        "bn1_beta": 0.1 * jax.random.normal(ks[3], (planes,), jnp.float32),
        "bn1_mean": 0.05 * jax.random.normal(ks[4], (planes,), jnp.float32),
        "bn1_var": jnp.abs(1.0 + 0.1 * jax.random.normal(ks[5], (planes,), jnp.float32)),
        "bn2_gamma": 1.0 + 0.1 * jax.random.normal(ks[6], (planes,), jnp.float32),
        "bn2_beta": 0.1 * jax.random.normal(ks[7], (planes,), jnp.float32),
        "bn2_mean": jnp.zeros((planes,), jnp.float32),
        "bn2_var": jnp.ones((planes,), jnp.float32),
    }


if __name__ == "__main__":
    # downsample=None and residual add => in_planes == planes, stride == 1.
    # C=16, W=8 keeps the packed lane axis W*C = 128 (lane-dense stores).
    N, C, D, H, W = 2, 16, 8, 8, 8
    key = jax.random.PRNGKey(0)
    kx, kp = jax.random.split(key)
    x = jax.random.normal(kx, (N, C, D, H, W), jnp.float32)  # NCDHW like PyTorch
    params = make_params(kp, in_planes=C, planes=C)

    out = jax.block_until_ready(basic_block_forward(x, params))
    ref = jax.block_until_ready(_reference_forward(x, params))

    assert out.shape == (N, C, D, H, W)
    # bf16 MXU inputs with f32 accumulation -> relaxed tolerance vs f32 ref.
    assert jnp.allclose(out, ref, atol=1e-1, rtol=5e-2), \
        float(jnp.max(jnp.abs(out - ref)))

    print("KERNEL_OK")
</pallas_src>

<mosaic_0001>
module attributes {stable_mosaic.version = 11 : i64} {
  func.func @_basic_block_kernel(%arg0: i32, %arg1: memref<8x16x128xf32, #tpu.memory_space<vmem>>, %arg2: memref<3x3x128x128xbf16, #tpu.memory_space<vmem>>, %arg3: memref<1x128xf32, #tpu.memory_space<vmem>>, %arg4: memref<3x3x128x128xbf16, #tpu.memory_space<vmem>>, %arg5: memref<1x128xf32, #tpu.memory_space<vmem>>, %arg6: memref<8x16x128xf32, #tpu.memory_space<vmem>>, %arg7: memref<10x16x128xbf16, #tpu.memory_space<vmem>>) attributes {dimension_semantics = [#tpu.dimension_semantics<parallel>], iteration_bounds = array<i64: 1>, scalar_prefetch = 0 : i64, scratch_operands = 1 : i64, tpu.core_type = #tpu.core_type<tc>, window_params = [{transform_indices = @transform_0, window_bounds = array<i64: 8, 16, 128>}, {pipeline_mode = #tpu.pipeline_mode<synchronous>, transform_indices = @transform_1, window_bounds = array<i64: 3, 3, 128, 128>}, {pipeline_mode = #tpu.pipeline_mode<synchronous>, transform_indices = @transform_2, window_bounds = array<i64: 1, 128>}, {pipeline_mode = #tpu.pipeline_mode<synchronous>, transform_indices = @transform_3, window_bounds = array<i64: 3, 3, 128, 128>}, {pipeline_mode = #tpu.pipeline_mode<synchronous>, transform_indices = @transform_4, window_bounds = array<i64: 1, 128>}, {transform_indices = @transform_5, window_bounds = array<i64: 8, 16, 128>}]} {
    %0 = tpu.iota {dimensions = array<i32: 0>} : vector<128x1xi32>
    %c8_i32 = arith.constant 8 : i32
    %c0_i32 = arith.constant 0 : i32
    %1 = arith.cmpi eq, %c8_i32, %c0_i32 : i32
    %c1_i32 = arith.constant 1 : i32
    %2 = arith.select %1, %c1_i32, %c8_i32 : i32
    %3 = vector.broadcast %2 : i32 to vector<128x1xi32>
    %4 = arith.remsi %0, %3 : vector<128x1xi32>
    %c0_i32_0 = arith.constant 0 : i32
    %5 = vector.broadcast %c0_i32_0 : i32 to vector<128x1xi32>
    %6 = arith.cmpi ne, %4, %5 : vector<128x1xi32>
    %c0_i32_1 = arith.constant 0 : i32
    %7 = vector.broadcast %c0_i32_1 : i32 to vector<128x1xi32>
    %8 = arith.cmpi slt, %4, %7 : vector<128x1xi32>
    %c0_i32_2 = arith.constant 0 : i32
    %9 = arith.cmpi slt, %2, %c0_i32_2 : i32
    %10 = vector.broadcast %9 : i1 to vector<128x1xi1>
    %11 = vector.broadcast %10 : vector<128x1xi1> to vector<128x1xi1>
    %12 = arith.xori %8, %11 : vector<128x1xi1>
    %13 = arith.andi %12, %6 : vector<128x1xi1>
    %14 = vector.broadcast %2 : i32 to vector<128x1xi32>
    %15 = arith.addi %4, %14 : vector<128x1xi32>
    %16 = arith.select %13, %15, %4 : vector<128x1xi1>, vector<128x1xi32>
    %c0_i32_3 = arith.constant 0 : i32
    %17 = vector.broadcast %c0_i32_3 : i32 to vector<128x1xi32>
    %18 = arith.cmpi ne, %16, %17 : vector<128x1xi32>
    %c7_i32 = arith.constant 7 : i32
    %19 = vector.broadcast %c7_i32 : i32 to vector<128x1xi32>
    %20 = arith.cmpi ne, %16, %19 : vector<128x1xi32>
    %cst = arith.constant 0.000000e+00 : f32
    %21 = vector.broadcast %cst : f32 to vector<1x128xf32>
    %cst_4 = arith.constant 0.000000e+00 : bf16
    %22 = vector.broadcast %cst_4 : bf16 to vector<16x128xbf16>
    %c0 = arith.constant 0 : index
    %c0_5 = arith.constant 0 : index
    %c0_6 = arith.constant 0 : index
    %23 = vector.load %arg7[%c0, %c0_5, %c0_6] : memref<10x16x128xbf16, #tpu.memory_space<vmem>>, vector<1x16x128xbf16>
    %24 = vector.shape_cast %23 : vector<1x16x128xbf16> to vector<16x128xbf16>
    %25 = vector.shape_cast %22 : vector<16x128xbf16> to vector<1x16x128xbf16>
    tpu.vector_store %arg7[%c0, %c0_5, %c0_6], %25 {strides = array<i32>} : memref<10x16x128xbf16, #tpu.memory_space<vmem>>, vector<1x16x128xbf16>,
    %cst_7 = arith.constant 0.000000e+00 : bf16
    %26 = vector.broadcast %cst_7 : bf16 to vector<16x128xbf16>
    %c9 = arith.constant 9 : index
    %c0_8 = arith.constant 0 : index
    %c0_9 = arith.constant 0 : index
    %27 = vector.load %arg7[%c9, %c0_8, %c0_9] : memref<10x16x128xbf16, #tpu.memory_space<vmem>>, vector<1x16x128xbf16>
    %28 = vector.shape_cast %27 : vector<1x16x128xbf16> to vector<16x128xbf16>
    %29 = vector.shape_cast %26 : vector<16x128xbf16> to vector<1x16x128xbf16>
    tpu.vector_store %arg7[%c9, %c0_8, %c0_9], %29 {strides = array<i32>} : memref<10x16x128xbf16, #tpu.memory_space<vmem>>, vector<1x16x128xbf16>,
    %c0_10 = arith.constant 0 : index
    %c0_11 = arith.constant 0 : index
    %c0_12 = arith.constant 0 : index
    %30 = vector.load %arg1[%c0_10, %c0_11, %c0_12] : memref<8x16x128xf32, #tpu.memory_space<vmem>>, vector<8x16x128xf32>
    %31 = arith.truncf %30 : vector<8x16x128xf32> to vector<8x16x128xbf16>
    %c1 = arith.constant 1 : index
    %c0_13 = arith.constant 0 : index
    %c0_14 = arith.constant 0 : index
    %32 = vector.load %arg7[%c1, %c0_13, %c0_14] : memref<10x16x128xbf16, #tpu.memory_space<vmem>>, vector<8x16x128xbf16>
    tpu.vector_store %arg7[%c1, %c0_13, %c0_14], %31 {strides = array<i32>} : memref<10x16x128xbf16, #tpu.memory_space<vmem>>, vector<8x16x128xbf16>,
    %cst_15 = arith.constant 0.000000e+00 : f32
    %33 = vector.broadcast %cst_15 : f32 to vector<128x128xf32>
    %cst_16 = arith.constant 0.000000e+00 : f32
    %34 = vector.broadcast %cst_16 : f32 to vector<128x128xf32>
    %c0_17 = arith.constant 0 : index
    %c0_18 = arith.constant 0 : index
    %c0_19 = arith.constant 0 : index
    %35 = vector.load %arg7[%c0_17, %c0_18, %c0_19] : memref<10x16x128xbf16, #tpu.memory_space<vmem>>, vector<8x16x128xbf16>
    %36 = vector.shape_cast %35 : vector<8x16x128xbf16> to vector<128x128xbf16>
    %c0_20 = arith.constant 0 : index
    %c0_21 = arith.constant 0 : index
    %c0_22 = arith.constant 0 : index
    %c0_23 = arith.constant 0 : index
    %37 = vector.load %arg2[%c0_20, %c0_21, %c0_22, %c0_23] : memref<3x3x128x128xbf16, #tpu.memory_space<vmem>>, vector<1x1x128x128xbf16>
    %38 = vector.shape_cast %37 : vector<1x1x128x128xbf16> to vector<128x128xbf16>
    %cst_24 = arith.constant dense<0.000000e+00> : vector<128x128xf32>
    %39 = tpu.matmul %36, %38, %cst_24 {dimension_numbers = #tpu.dot_dimension_numbers<[1], [0], [0], [1], [0, 0, 1, 1], [], []>} : vector<128x128xbf16>, vector<128x128xbf16>, vector<128x128xf32> -> vector<128x128xf32>
    %40 = arith.addf %34, %39 : vector<128x128xf32>
    %c1_25 = arith.constant 1 : index
    %c0_26 = arith.constant 0 : index
    %c0_27 = arith.constant 0 : index
    %41 = vector.load %arg7[%c1_25, %c0_26, %c0_27] : memref<10x16x128xbf16, #tpu.memory_space<vmem>>, vector<8x16x128xbf16>
    %42 = vector.shape_cast %41 : vector<8x16x128xbf16> to vector<128x128xbf16>
    %c1_28 = arith.constant 1 : index
    %c0_29 = arith.constant 0 : index
    %c0_30 = arith.constant 0 : index
    %c0_31 = arith.constant 0 : index
    %43 = vector.load %arg2[%c1_28, %c0_29, %c0_30, %c0_31] : memref<3x3x128x128xbf16, #tpu.memory_space<vmem>>, vector<1x1x128x128xbf16>
    %44 = vector.shape_cast %43 : vector<1x1x128x128xbf16> to vector<128x128xbf16>
    %cst_32 = arith.constant dense<0.000000e+00> : vector<128x128xf32>
    %45 = tpu.matmul %42, %44, %cst_32 {dimension_numbers = #tpu.dot_dimension_numbers<[1], [0], [0], [1], [0, 0, 1, 1], [], []>} : vector<128x128xbf16>, vector<128x128xbf16>, vector<128x128xf32> -> vector<128x128xf32>
    %46 = arith.addf %40, %45 : vector<128x128xf32>
    %c2 = arith.constant 2 : index
    %c0_33 = arith.constant 0 : index
    %c0_34 = arith.constant 0 : index
    %47 = vector.load %arg7[%c2, %c0_33, %c0_34] : memref<10x16x128xbf16, #tpu.memory_space<vmem>>, vector<8x16x128xbf16>
    %48 = vector.shape_cast %47 : vector<8x16x128xbf16> to vector<128x128xbf16>
    %c2_35 = arith.constant 2 : index
    %c0_36 = arith.constant 0 : index
    %c0_37 = arith.constant 0 : index
    %c0_38 = arith.constant 0 : index
    %49 = vector.load %arg2[%c2_35, %c0_36, %c0_37, %c0_38] : memref<3x3x128x128xbf16, #tpu.memory_space<vmem>>, vector<1x1x128x128xbf16>
    %50 = vector.shape_cast %49 : vector<1x1x128x128xbf16> to vector<128x128xbf16>
    %cst_39 = arith.constant dense<0.000000e+00> : vector<128x128xf32>
    %51 = tpu.matmul %48, %50, %cst_39 {dimension_numbers = #tpu.dot_dimension_numbers<[1], [0], [0], [1], [0, 0, 1, 1], [], []>} : vector<128x128xbf16>, vector<128x128xbf16>, vector<128x128xf32> -> vector<128x128xf32>
    %52 = arith.addf %46, %51 : vector<128x128xf32>
    %53 = vector.extract_strided_slice %52 {offsets = [0, 0], sizes = [127, 128], strides = [1, 1]} : vector<128x128xf32> to vector<127x128xf32>
    %54 = tpu.concatenate %21, %53 in 0 : vector<1x128xf32>, vector<127x128xf32> -> vector<128x128xf32>
    %cst_40 = arith.constant 0.000000e+00 : f32
    %55 = vector.shape_cast %18 : vector<128x1xi1> to vector<128x1xi1>
    %56 = vector.broadcast %55 : vector<128x1xi1> to vector<128x128xi1>
    %57 = vector.broadcast %cst_40 : f32 to vector<128x128xf32>
    %58 = arith.select %56, %54, %57 : vector<128x128xi1>, vector<128x128xf32>
    %59 = arith.addf %33, %58 : vector<128x128xf32>
    %cst_41 = arith.constant 0.000000e+00 : f32
    %60 = vector.broadcast %cst_41 : f32 to vector<128x128xf32>
    %c0_42 = arith.constant 0 : index
    %c0_43 = arith.constant 0 : index
    %c0_44 = arith.constant 0 : index
    %61 = vector.load %arg7[%c0_42, %c0_43, %c0_44] : memref<10x16x128xbf16, #tpu.memory_space<vmem>>, vector<8x16x128xbf16>
    %62 = vector.shape_cast %61 : vector<8x16x128xbf16> to vector<128x128xbf16>
    %c0_45 = arith.constant 0 : index
    %c1_46 = arith.constant 1 : index
    %c0_47 = arith.constant 0 : index
    %c0_48 = arith.constant 0 : index
    %63 = vector.load %arg2[%c0_45, %c1_46, %c0_47, %c0_48] : memref<3x3x128x128xbf16, #tpu.memory_space<vmem>>, vector<1x1x128x128xbf16>
    %64 = vector.shape_cast %63 : vector<1x1x128x128xbf16> to vector<128x128xbf16>
    %cst_49 = arith.constant dense<0.000000e+00> : vector<128x128xf32>
    %65 = tpu.matmul %62, %64, %cst_49 {dimension_numbers = #tpu.dot_dimension_numbers<[1], [0], [0], [1], [0, 0, 1, 1], [], []>} : vector<128x128xbf16>, vector<128x128xbf16>, vector<128x128xf32> -> vector<128x128xf32>
    %66 = arith.addf %60, %65 : vector<128x128xf32>
    %c1_50 = arith.constant 1 : index
    %c0_51 = arith.constant 0 : index
    %c0_52 = arith.constant 0 : index
    %67 = vector.load %arg7[%c1_50, %c0_51, %c0_52] : memref<10x16x128xbf16, #tpu.memory_space<vmem>>, vector<8x16x128xbf16>
    %68 = vector.shape_cast %67 : vector<8x16x128xbf16> to vector<128x128xbf16>
    %c1_53 = arith.constant 1 : index
    %c1_54 = arith.constant 1 : index
    %c0_55 = arith.constant 0 : index
    %c0_56 = arith.constant 0 : index
    %69 = vector.load %arg2[%c1_53, %c1_54, %c0_55, %c0_56] : memref<3x3x128x128xbf16, #tpu.memory_space<vmem>>, vector<1x1x128x128xbf16>
    %70 = vector.shape_cast %69 : vector<1x1x128x128xbf16> to vector<128x128xbf16>
    %cst_57 = arith.constant dense<0.000000e+00> : vector<128x128xf32>
    %71 = tpu.matmul %68, %70, %cst_57 {dimension_numbers = #tpu.dot_dimension_numbers<[1], [0], [0], [1], [0, 0, 1, 1], [], []>} : vector<128x128xbf16>, vector<128x128xbf16>, vector<128x128xf32> -> vector<128x128xf32>
    %72 = arith.addf %66, %71 : vector<128x128xf32>
    %c2_58 = arith.constant 2 : index
    %c0_59 = arith.constant 0 : index
    %c0_60 = arith.constant 0 : index
    %73 = vector.load %arg7[%c2_58, %c0_59, %c0_60] : memref<10x16x128xbf16, #tpu.memory_space<vmem>>, vector<8x16x128xbf16>
    %74 = vector.shape_cast %73 : vector<8x16x128xbf16> to vector<128x128xbf16>
    %c2_61 = arith.constant 2 : index
    %c1_62 = arith.constant 1 : index
    %c0_63 = arith.constant 0 : index
    %c0_64 = arith.constant 0 : index
    %75 = vector.load %arg2[%c2_61, %c1_62, %c0_63, %c0_64] : memref<3x3x128x128xbf16, #tpu.memory_space<vmem>>, vector<1x1x128x128xbf16>
    %76 = vector.shape_cast %75 : vector<1x1x128x128xbf16> to vector<128x128xbf16>
    %cst_65 = arith.constant dense<0.000000e+00> : vector<128x128xf32>
    %77 = tpu.matmul %74, %76, %cst_65 {dimension_numbers = #tpu.dot_dimension_numbers<[1], [0], [0], [1], [0, 0, 1, 1], [], []>} : vector<128x128xbf16>, vector<128x128xbf16>, vector<128x128xf32> -> vector<128x128xf32>
    %78 = arith.addf %72, %77 : vector<128x128xf32>
    %79 = arith.addf %59, %78 : vector<128x128xf32>
    %cst_66 = arith.constant 0.000000e+00 : f32
    %80 = vector.broadcast %cst_66 : f32 to vector<128x128xf32>
    %c0_67 = arith.constant 0 : index
    %c0_68 = arith.constant 0 : index
    %c0_69 = arith.constant 0 : index
    %81 = vector.load %arg7[%c0_67, %c0_68, %c0_69] : memref<10x16x128xbf16, #tpu.memory_space<vmem>>, vector<8x16x128xbf16>
    %82 = vector.shape_cast %81 : vector<8x16x128xbf16> to vector<128x128xbf16>
    %c0_70 = arith.constant 0 : index
    %c2_71 = arith.constant 2 : index
    %c0_72 = arith.constant 0 : index
    %c0_73 = arith.constant 0 : index
    %83 = vector.load %arg2[%c0_70, %c2_71, %c0_72, %c0_73] : memref<3x3x128x128xbf16, #tpu.memory_space<vmem>>, vector<1x1x128x128xbf16>
    %84 = vector.shape_cast %83 : vector<1x1x128x128xbf16> to vector<128x128xbf16>
    %cst_74 = arith.constant dense<0.000000e+00> : vector<128x128xf32>
    %85 = tpu.matmul %82, %84, %cst_74 {dimension_numbers = #tpu.dot_dimension_numbers<[1], [0], [0], [1], [0, 0, 1, 1], [], []>} : vector<128x128xbf16>, vector<128x128xbf16>, vector<128x128xf32> -> vector<128x128xf32>
    %86 = arith.addf %80, %85 : vector<128x128xf32>
    %c1_75 = arith.constant 1 : index
    %c0_76 = arith.constant 0 : index
    %c0_77 = arith.constant 0 : index
    %87 = vector.load %arg7[%c1_75, %c0_76, %c0_77] : memref<10x16x128xbf16, #tpu.memory_space<vmem>>, vector<8x16x128xbf16>
    %88 = vector.shape_cast %87 : vector<8x16x128xbf16> to vector<128x128xbf16>
    %c1_78 = arith.constant 1 : index
    %c2_79 = arith.constant 2 : index
    %c0_80 = arith.constant 0 : index
    %c0_81 = arith.constant 0 : index
    %89 = vector.load %arg2[%c1_78, %c2_79, %c0_80, %c0_81] : memref<3x3x128x128xbf16, #tpu.memory_space<vmem>>, vector<1x1x128x128xbf16>
    %90 = vector.shape_cast %89 : vector<1x1x128x128xbf16> to vector<128x128xbf16>
    %cst_82 = arith.constant dense<0.000000e+00> : vector<128x128xf32>
    %91 = tpu.matmul %88, %90, %cst_82 {dimension_numbers = #tpu.dot_dimension_numbers<[1], [0], [0], [1], [0, 0, 1, 1], [], []>} : vector<128x128xbf16>, vector<128x128xbf16>, vector<128x128xf32> -> vector<128x128xf32>
    %92 = arith.addf %86, %91 : vector<128x128xf32>
    %c2_83 = arith.constant 2 : index
    %c0_84 = arith.constant 0 : index
    %c0_85 = arith.constant 0 : index
    %93 = vector.load %arg7[%c2_83, %c0_84, %c0_85] : memref<10x16x128xbf16, #tpu.memory_space<vmem>>, vector<8x16x128xbf16>
    %94 = vector.shape_cast %93 : vector<8x16x128xbf16> to vector<128x128xbf16>
    %c2_86 = arith.constant 2 : index
    %c2_87 = arith.constant 2 : index
    %c0_88 = arith.constant 0 : index
    %c0_89 = arith.constant 0 : index
    %95 = vector.load %arg2[%c2_86, %c2_87, %c0_88, %c0_89] : memref<3x3x128x128xbf16, #tpu.memory_space<vmem>>, vector<1x1x128x128xbf16>
    %96 = vector.shape_cast %95 : vector<1x1x128x128xbf16> to vector<128x128xbf16>
    %cst_90 = arith.constant dense<0.000000e+00> : vector<128x128xf32>
    %97 = tpu.matmul %94, %96, %cst_90 {dimension_numbers = #tpu.dot_dimension_numbers<[1], [0], [0], [1], [0, 0, 1, 1], [], []>} : vector<128x128xbf16>, vector<128x128xbf16>, vector<128x128xf32> -> vector<128x128xf32>
    %98 = arith.addf %92, %97 : vector<128x128xf32>
    %99 = vector.extract_strided_slice %98 {offsets = [1, 0], sizes = [127, 128], strides = [1, 1]} : vector<128x128xf32> to vector<127x128xf32>
    %100 = tpu.concatenate %99, %21 in 0 : vector<127x128xf32>, vector<1x128xf32> -> vector<128x128xf32>
    %cst_91 = arith.constant 0.000000e+00 : f32
    %101 = vector.shape_cast %20 : vector<128x1xi1> to vector<128x1xi1>
    %102 = vector.broadcast %101 : vector<128x1xi1> to vector<128x128xi1>
    %103 = vector.broadcast %cst_91 : f32 to vector<128x128xf32>
    %104 = arith.select %102, %100, %103 : vector<128x128xi1>, vector<128x128xf32>
    %105 = arith.addf %79, %104 : vector<128x128xf32>
    %c0_92 = arith.constant 0 : index
    %c0_93 = arith.constant 0 : index
    %106 = vector.load %arg3[%c0_92, %c0_93] : memref<1x128xf32, #tpu.memory_space<vmem>>, vector<1x128xf32>
    %107 = vector.broadcast %106 : vector<1x128xf32> to vector<128x128xf32>
    %108 = arith.addf %105, %107 : vector<128x128xf32>
    %cst_94 = arith.constant 0.000000e+00 : f32
    %109 = vector.broadcast %cst_94 : f32 to vector<128x128xf32>
    %110 = arith.maximumf %108, %109 : vector<128x128xf32>
    %111 = vector.shape_cast %110 : vector<128x128xf32> to vector<8x16x128xf32>
    %112 = arith.truncf %111 : vector<8x16x128xf32> to vector<8x16x128xbf16>
    %c1_95 = arith.constant 1 : index
    %c0_96 = arith.constant 0 : index
    %c0_97 = arith.constant 0 : index
    %113 = vector.load %arg7[%c1_95, %c0_96, %c0_97] : memref<10x16x128xbf16, #tpu.memory_space<vmem>>, vector<8x16x128xbf16>
    tpu.vector_store %arg7[%c1_95, %c0_96, %c0_97], %112 {strides = array<i32>} : memref<10x16x128xbf16, #tpu.memory_space<vmem>>, vector<8x16x128xbf16>,
    %cst_98 = arith.constant 0.000000e+00 : f32
    %114 = vector.broadcast %cst_98 : f32 to vector<128x128xf32>
    %cst_99 = arith.constant 0.000000e+00 : f32
    %115 = vector.broadcast %cst_99 : f32 to vector<128x128xf32>
    %c0_100 = arith.constant 0 : index
    %c0_101 = arith.constant 0 : index
    %c0_102 = arith.constant 0 : index
    %116 = vector.load %arg7[%c0_100, %c0_101, %c0_102] : memref<10x16x128xbf16, #tpu.memory_space<vmem>>, vector<8x16x128xbf16>
    %117 = vector.shape_cast %116 : vector<8x16x128xbf16> to vector<128x128xbf16>
    %c0_103 = arith.constant 0 : index
    %c0_104 = arith.constant 0 : index
    %c0_105 = arith.constant 0 : index
    %c0_106 = arith.constant 0 : index
    %118 = vector.load %arg4[%c0_103, %c0_104, %c0_105, %c0_106] : memref<3x3x128x128xbf16, #tpu.memory_space<vmem>>, vector<1x1x128x128xbf16>
    %119 = vector.shape_cast %118 : vector<1x1x128x128xbf16> to vector<128x128xbf16>
    %cst_107 = arith.constant dense<0.000000e+00> : vector<128x128xf32>
    %120 = tpu.matmul %117, %119, %cst_107 {dimension_numbers = #tpu.dot_dimension_numbers<[1], [0], [0], [1], [0, 0, 1, 1], [], []>} : vector<128x128xbf16>, vector<128x128xbf16>, vector<128x128xf32> -> vector<128x128xf32>
    %121 = arith.addf %115, %120 : vector<128x128xf32>
    %c1_108 = arith.constant 1 : index
    %c0_109 = arith.constant 0 : index
    %c0_110 = arith.constant 0 : index
    %122 = vector.load %arg7[%c1_108, %c0_109, %c0_110] : memref<10x16x128xbf16, #tpu.memory_space<vmem>>, vector<8x16x128xbf16>
    %123 = vector.shape_cast %122 : vector<8x16x128xbf16> to vector<128x128xbf16>
    %c1_111 = arith.constant 1 : index
    %c0_112 = arith.constant 0 : index
    %c0_113 = arith.constant 0 : index
    %c0_114 = arith.constant 0 : index
    %124 = vector.load %arg4[%c1_111, %c0_112, %c0_113, %c0_114] : memref<3x3x128x128xbf16, #tpu.memory_space<vmem>>, vector<1x1x128x128xbf16>
    %125 = vector.shape_cast %124 : vector<1x1x128x128xbf16> to vector<128x128xbf16>
    %cst_115 = arith.constant dense<0.000000e+00> : vector<128x128xf32>
    %126 = tpu.matmul %123, %125, %cst_115 {dimension_numbers = #tpu.dot_dimension_numbers<[1], [0], [0], [1], [0, 0, 1, 1], [], []>} : vector<128x128xbf16>, vector<128x128xbf16>, vector<128x128xf32> -> vector<128x128xf32>
    %127 = arith.addf %121, %126 : vector<128x128xf32>
    %c2_116 = arith.constant 2 : index
    %c0_117 = arith.constant 0 : index
    %c0_118 = arith.constant 0 : index
    %128 = vector.load %arg7[%c2_116, %c0_117, %c0_118] : memref<10x16x128xbf16, #tpu.memory_space<vmem>>, vector<8x16x128xbf16>
    %129 = vector.shape_cast %128 : vector<8x16x128xbf16> to vector<128x128xbf16>
    %c2_119 = arith.constant 2 : index
    %c0_120 = arith.constant 0 : index
    %c0_121 = arith.constant 0 : index
    %c0_122 = arith.constant 0 : index
    %130 = vector.load %arg4[%c2_119, %c0_120, %c0_121, %c0_122] : memref<3x3x128x128xbf16, #tpu.memory_space<vmem>>, vector<1x1x128x128xbf16>
    %131 = vector.shape_cast %130 : vector<1x1x128x128xbf16> to vector<128x128xbf16>
    %cst_123 = arith.constant dense<0.000000e+00> : vector<128x128xf32>
    %132 = tpu.matmul %129, %131, %cst_123 {dimension_numbers = #tpu.dot_dimension_numbers<[1], [0], [0], [1], [0, 0, 1, 1], [], []>} : vector<128x128xbf16>, vector<128x128xbf16>, vector<128x128xf32> -> vector<128x128xf32>
    %133 = arith.addf %127, %132 : vector<128x128xf32>
    %134 = vector.extract_strided_slice %133 {offsets = [0, 0], sizes = [127, 128], strides = [1, 1]} : vector<128x128xf32> to vector<127x128xf32>
    %135 = tpu.concatenate %21, %134 in 0 : vector<1x128xf32>, vector<127x128xf32> -> vector<128x128xf32>
    %cst_124 = arith.constant 0.000000e+00 : f32
    %136 = vector.shape_cast %18 : vector<128x1xi1> to vector<128x1xi1>
    %137 = vector.broadcast %136 : vector<128x1xi1> to vector<128x128xi1>
    %138 = vector.broadcast %cst_124 : f32 to vector<128x128xf32>
    %139 = arith.select %137, %135, %138 : vector<128x128xi1>, vector<128x128xf32>
    %140 = arith.addf %114, %139 : vector<128x128xf32>
    %cst_125 = arith.constant 0.000000e+00 : f32
    %141 = vector.broadcast %cst_125 : f32 to vector<128x128xf32>
    %c0_126 = arith.constant 0 : index
    %c0_127 = arith.constant 0 : index
    %c0_128 = arith.constant 0 : index
    %142 = vector.load %arg7[%c0_126, %c0_127, %c0_128] : memref<10x16x128xbf16, #tpu.memory_space<vmem>>, vector<8x16x128xbf16>
    %143 = vector.shape_cast %142 : vector<8x16x128xbf16> to vector<128x128xbf16>
    %c0_129 = arith.constant 0 : index
    %c1_130 = arith.constant 1 : index
    %c0_131 = arith.constant 0 : index
    %c0_132 = arith.constant 0 : index
    %144 = vector.load %arg4[%c0_129, %c1_130, %c0_131, %c0_132] : memref<3x3x128x128xbf16, #tpu.memory_space<vmem>>, vector<1x1x128x128xbf16>
    %145 = vector.shape_cast %144 : vector<1x1x128x128xbf16> to vector<128x128xbf16>
    %cst_133 = arith.constant dense<0.000000e+00> : vector<128x128xf32>
    %146 = tpu.matmul %143, %145, %cst_133 {dimension_numbers = #tpu.dot_dimension_numbers<[1], [0], [0], [1], [0, 0, 1, 1], [], []>} : vector<128x128xbf16>, vector<128x128xbf16>, vector<128x128xf32> -> vector<128x128xf32>
    %147 = arith.addf %141, %146 : vector<128x128xf32>
    %c1_134 = arith.constant 1 : index
    %c0_135 = arith.constant 0 : index
    %c0_136 = arith.constant 0 : index
    %148 = vector.load %arg7[%c1_134, %c0_135, %c0_136] : memref<10x16x128xbf16, #tpu.memory_space<vmem>>, vector<8x16x128xbf16>
    %149 = vector.shape_cast %148 : vector<8x16x128xbf16> to vector<128x128xbf16>
    %c1_137 = arith.constant 1 : index
    %c1_138 = arith.constant 1 : index
    %c0_139 = arith.constant 0 : index
    %c0_140 = arith.constant 0 : index
    %150 = vector.load %arg4[%c1_137, %c1_138, %c0_139, %c0_140] : memref<3x3x128x128xbf16, #tpu.memory_space<vmem>>, vector<1x1x128x128xbf16>
    %151 = vector.shape_cast %150 : vector<1x1x128x128xbf16> to vector<128x128xbf16>
    %cst_141 = arith.constant dense<0.000000e+00> : vector<128x128xf32>
    %152 = tpu.matmul %149, %151, %cst_141 {dimension_numbers = #tpu.dot_dimension_numbers<[1], [0], [0], [1], [0, 0, 1, 1], [], []>} : vector<128x128xbf16>, vector<128x128xbf16>, vector<128x128xf32> -> vector<128x128xf32>
    %153 = arith.addf %147, %152 : vector<128x128xf32>
    %c2_142 = arith.constant 2 : index
    %c0_143 = arith.constant 0 : index
    %c0_144 = arith.constant 0 : index
    %154 = vector.load %arg7[%c2_142, %c0_143, %c0_144] : memref<10x16x128xbf16, #tpu.memory_space<vmem>>, vector<8x16x128xbf16>
    %155 = vector.shape_cast %154 : vector<8x16x128xbf16> to vector<128x128xbf16>
    %c2_145 = arith.constant 2 : index
    %c1_146 = arith.constant 1 : index
    %c0_147 = arith.constant 0 : index
    %c0_148 = arith.constant 0 : index
    %156 = vector.load %arg4[%c2_145, %c1_146, %c0_147, %c0_148] : memref<3x3x128x128xbf16, #tpu.memory_space<vmem>>, vector<1x1x128x128xbf16>
    %157 = vector.shape_cast %156 : vector<1x1x128x128xbf16> to vector<128x128xbf16>
    %cst_149 = arith.constant dense<0.000000e+00> : vector<128x128xf32>
    %158 = tpu.matmul %155, %157, %cst_149 {dimension_numbers = #tpu.dot_dimension_numbers<[1], [0], [0], [1], [0, 0, 1, 1], [], []>} : vector<128x128xbf16>, vector<128x128xbf16>, vector<128x128xf32> -> vector<128x128xf32>
    %159 = arith.addf %153, %158 : vector<128x128xf32>
    %160 = arith.addf %140, %159 : vector<128x128xf32>
    %cst_150 = arith.constant 0.000000e+00 : f32
    %161 = vector.broadcast %cst_150 : f32 to vector<128x128xf32>
    %c0_151 = arith.constant 0 : index
    %c0_152 = arith.constant 0 : index
    %c0_153 = arith.constant 0 : index
    %162 = vector.load %arg7[%c0_151, %c0_152, %c0_153] : memref<10x16x128xbf16, #tpu.memory_space<vmem>>, vector<8x16x128xbf16>
    %163 = vector.shape_cast %162 : vector<8x16x128xbf16> to vector<128x128xbf16>
    %c0_154 = arith.constant 0 : index
    %c2_155 = arith.constant 2 : index
    %c0_156 = arith.constant 0 : index
    %c0_157 = arith.constant 0 : index
    %164 = vector.load %arg4[%c0_154, %c2_155, %c0_156, %c0_157] : memref<3x3x128x128xbf16, #tpu.memory_space<vmem>>, vector<1x1x128x128xbf16>
    %165 = vector.shape_cast %164 : vector<1x1x128x128xbf16> to vector<128x128xbf16>
    %cst_158 = arith.constant dense<0.000000e+00> : vector<128x128xf32>
    %166 = tpu.matmul %163, %165, %cst_158 {dimension_numbers = #tpu.dot_dimension_numbers<[1], [0], [0], [1], [0, 0, 1, 1], [], []>} : vector<128x128xbf16>, vector<128x128xbf16>, vector<128x128xf32> -> vector<128x128xf32>
    %167 = arith.addf %161, %166 : vector<128x128xf32>
    %c1_159 = arith.constant 1 : index
    %c0_160 = arith.constant 0 : index
    %c0_161 = arith.constant 0 : index
    %168 = vector.load %arg7[%c1_159, %c0_160, %c0_161] : memref<10x16x128xbf16, #tpu.memory_space<vmem>>, vector<8x16x128xbf16>
    %169 = vector.shape_cast %168 : vector<8x16x128xbf16> to vector<128x128xbf16>
    %c1_162 = arith.constant 1 : index
    %c2_163 = arith.constant 2 : index
    %c0_164 = arith.constant 0 : index
    %c0_165 = arith.constant 0 : index
    %170 = vector.load %arg4[%c1_162, %c2_163, %c0_164, %c0_165] : memref<3x3x128x128xbf16, #tpu.memory_space<vmem>>, vector<1x1x128x128xbf16>
    %171 = vector.shape_cast %170 : vector<1x1x128x128xbf16> to vector<128x128xbf16>
    %cst_166 = arith.constant dense<0.000000e+00> : vector<128x128xf32>
    %172 = tpu.matmul %169, %171, %cst_166 {dimension_numbers = #tpu.dot_dimension_numbers<[1], [0], [0], [1], [0, 0, 1, 1], [], []>} : vector<128x128xbf16>, vector<128x128xbf16>, vector<128x128xf32> -> vector<128x128xf32>
    %173 = arith.addf %167, %172 : vector<128x128xf32>
    %c2_167 = arith.constant 2 : index
    %c0_168 = arith.constant 0 : index
    %c0_169 = arith.constant 0 : index
    %174 = vector.load %arg7[%c2_167, %c0_168, %c0_169] : memref<10x16x128xbf16, #tpu.memory_space<vmem>>, vector<8x16x128xbf16>
    %175 = vector.shape_cast %174 : vector<8x16x128xbf16> to vector<128x128xbf16>
    %c2_170 = arith.constant 2 : index
    %c2_171 = arith.constant 2 : index
    %c0_172 = arith.constant 0 : index
    %c0_173 = arith.constant 0 : index
    %176 = vector.load %arg4[%c2_170, %c2_171, %c0_172, %c0_173] : memref<3x3x128x128xbf16, #tpu.memory_space<vmem>>, vector<1x1x128x128xbf16>
    %177 = vector.shape_cast %176 : vector<1x1x128x128xbf16> to vector<128x128xbf16>
    %cst_174 = arith.constant dense<0.000000e+00> : vector<128x128xf32>
    %178 = tpu.matmul %175, %177, %cst_174 {dimension_numbers = #tpu.dot_dimension_numbers<[1], [0], [0], [1], [0, 0, 1, 1], [], []>} : vector<128x128xbf16>, vector<128x128xbf16>, vector<128x128xf32> -> vector<128x128xf32>
    %179 = arith.addf %173, %178 : vector<128x128xf32>
    %180 = vector.extract_strided_slice %179 {offsets = [1, 0], sizes = [127, 128], strides = [1, 1]} : vector<128x128xf32> to vector<127x128xf32>
    %181 = tpu.concatenate %180, %21 in 0 : vector<127x128xf32>, vector<1x128xf32> -> vector<128x128xf32>
    %cst_175 = arith.constant 0.000000e+00 : f32
    %182 = vector.shape_cast %20 : vector<128x1xi1> to vector<128x1xi1>
    %183 = vector.broadcast %182 : vector<128x1xi1> to vector<128x128xi1>
    %184 = vector.broadcast %cst_175 : f32 to vector<128x128xf32>
    %185 = arith.select %183, %181, %184 : vector<128x128xi1>, vector<128x128xf32>
    %186 = arith.addf %160, %185 : vector<128x128xf32>
    %c0_176 = arith.constant 0 : index
    %c0_177 = arith.constant 0 : index
    %187 = vector.load %arg5[%c0_176, %c0_177] : memref<1x128xf32, #tpu.memory_space<vmem>>, vector<1x128xf32>
    %188 = vector.broadcast %187 : vector<1x128xf32> to vector<128x128xf32>
    %189 = arith.addf %186, %188 : vector<128x128xf32>
    %c0_178 = arith.constant 0 : index
    %c0_179 = arith.constant 0 : index
    %c0_180 = arith.constant 0 : index
    %190 = vector.load %arg1[%c0_178, %c0_179, %c0_180] : memref<8x16x128xf32, #tpu.memory_space<vmem>>, vector<8x16x128xf32>
    %191 = vector.shape_cast %190 : vector<8x16x128xf32> to vector<128x128xf32>
    %192 = arith.addf %189, %191 : vector<128x128xf32>
    %cst_181 = arith.constant 0.000000e+00 : f32
    %193 = vector.broadcast %cst_181 : f32 to vector<128x128xf32>
    %194 = arith.maximumf %192, %193 : vector<128x128xf32>
    %195 = vector.shape_cast %194 : vector<128x128xf32> to vector<8x16x128xf32>
    %c0_182 = arith.constant 0 : index
    %c0_183 = arith.constant 0 : index
    %c0_184 = arith.constant 0 : index
    %196 = vector.load %arg6[%c0_182, %c0_183, %c0_184] : memref<8x16x128xf32, #tpu.memory_space<vmem>>, vector<8x16x128xf32>
    tpu.vector_store %arg6[%c0_182, %c0_183, %c0_184], %195 {strides = array<i32>} : memref<8x16x128xf32, #tpu.memory_space<vmem>>, vector<8x16x128xf32>,
    return
  }
  func.func @transform_0(%arg0: i32) -> (i32, i32, i32) {
    %c0_i32 = arith.constant 0 : i32
    %c0_i32_0 = arith.constant 0 : i32
    %c0_i32_1 = arith.constant 0 : i32
    return %c0_i32, %arg0, %c0_i32_0 : i32, i32, i32
  }
  func.func @transform_1(%arg0: i32) -> (i32, i32, i32, i32) {
    %c0_i32 = arith.constant 0 : i32
    %c0_i32_0 = arith.constant 0 : i32
    %c0_i32_1 = arith.constant 0 : i32
    %c0_i32_2 = arith.constant 0 : i32
    %c0_i32_3 = arith.constant 0 : i32
    return %c0_i32, %c0_i32_0, %c0_i32_1, %c0_i32_2 : i32, i32, i32, i32
  }
  func.func @transform_2(%arg0: i32) -> (i32, i32) {
    %c0_i32 = arith.constant 0 : i32
    %c0_i32_0 = arith.constant 0 : i32
    %c0_i32_1 = arith.constant 0 : i32
    return %c0_i32, %c0_i32_0 : i32, i32
  }
  func.func @transform_3(%arg0: i32) -> (i32, i32, i32, i32) {
    %c0_i32 = arith.constant 0 : i32
    %c0_i32_0 = arith.constant 0 : i32
    %c0_i32_1 = arith.constant 0 : i32
    %c0_i32_2 = arith.constant 0 : i32
    %c0_i32_3 = arith.constant 0 : i32
    return %c0_i32, %c0_i32_0, %c0_i32_1, %c0_i32_2 : i32, i32, i32, i32
  }
  func.func @transform_4(%arg0: i32) -> (i32, i32) {
    %c0_i32 = arith.constant 0 : i32
    %c0_i32_0 = arith.constant 0 : i32
    %c0_i32_1 = arith.constant 0 : i32
    return %c0_i32, %c0_i32_0 : i32, i32
  }
  func.func @transform_5(%arg0: i32) -> (i32, i32, i32) {
    %c0_i32 = arith.constant 0 : i32
    %c0_i32_0 = arith.constant 0 : i32
    %c0_i32_1 = arith.constant 0 : i32
    return %c0_i32, %arg0, %c0_i32_0 : i32, i32, i32
  }
}

</mosaic_0001>

<llo_original>
// kernel: tile.19
$region0: #{tile.19}
  %s0 = inlined_call_operand.vmem [shape: f32[8,16], index: 0, kind: input, shape index: {}]
  %s1 = inlined_call_operand.vmem [shape: f32[1,128], index: 1, kind: output, shape index: {}]
  $region1: #{tile.19} parent=0
    #allocation0 [shape = 'u8[4096]{0}', space=vmem, size = 0x1000, scoped, tag = 'scoped mem for output reshape']
    %v2 = vld [vmem:[%s0] sm:$0x1]
    %vm3 = vcmask 130048
    %4 = vst.msk [vmem:[#allocation0] sm:$0x1] %vm3, %v2
    %s5 = scalar_lea.vmem %s0, 7
    %v6 = vld [vmem:[%s5] sm:$0x1]
    %7 = vrot.lane.b32.xlu0 %v6, 112
    %v8 = vpop.permute.xlu0 %7
    %vm9 = vcmask 1048448
    %10 = vst.msk [vmem:[#allocation0] sm:$0x1] %vm9, %v8
    %s11 = scalar_lea.vmem %s0, 6
    %v12 = vld [vmem:[%s11] sm:$0x1]
    %13 = vrot.lane.b32.xlu0 %v12, 96
    %v14 = vpop.permute.xlu0 %13
    %vm15 = vcmask 917248
    %16 = vst.msk [vmem:[#allocation0] sm:$0x1] %vm15, %v14
    %s17 = scalar_lea.vmem %s0, 5
    %v18 = vld [vmem:[%s17] sm:$0x1]
    %19 = vrot.lane.b32.xlu0 %v18, 80
    %v20 = vpop.permute.xlu0 %19
    %vm21 = vcmask 786048
    %22 = vst.msk [vmem:[#allocation0] sm:$0x1] %vm21, %v20
    %s23 = scalar_lea.vmem %s0, 4
    %v24 = vld [vmem:[%s23] sm:$0x1]
    %25 = vrot.lane.b32.xlu0 %v24, 64
    %v26 = vpop.permute.xlu0 %25
    %vm27 = vcmask 654848
    %28 = vst.msk [vmem:[#allocation0] sm:$0x1] %vm27, %v26
    %s29 = scalar_lea.vmem %s0, 3
    %v30 = vld [vmem:[%s29] sm:$0x1]
    %31 = vrot.lane.b32.xlu0 %v30, 48
    %v32 = vpop.permute.xlu0 %31
    %vm33 = vcmask 523648
    %34 = vst.msk [vmem:[#allocation0] sm:$0x1] %vm33, %v32
    %s35 = scalar_lea.vmem %s0, 2
    %v36 = vld [vmem:[%s35] sm:$0x1]
    %37 = vrot.lane.b32.xlu0 %v36, 32
    %v38 = vpop.permute.xlu0 %37
    %vm39 = vcmask 392448
    %40 = vst.msk [vmem:[#allocation0] sm:$0x1] %vm39, %v38
    %s41 = scalar_lea.vmem %s0, 1
    %v42 = vld [vmem:[%s41] sm:$0x1]
    %43 = vrot.lane.b32.xlu0 %v42, 16
    %v44 = vpop.permute.xlu0 %43
    %vm45 = vcmask 261248
    %46 = vst.msk [vmem:[#allocation0] sm:$0x1] %vm45, %v44
    %s48 = sshllo.u32 0, 1
    %v50 = vld [vmem:[#allocation0] sm:%s48]
    %s51 = sshllo.u32 0, 1
    %52 = vst [vmem:[%s1] sm:%s51] %v50

// kernel: tile.18
$region0: #{tile.18}
  #allocation0 [shape = 's32[1]{0}', space=sflag, size = 0x4, scoped, tag = 'scoped memory for tile.18']
  %s0 = inlined_call_operand.vmem [shape: f32[16], index: 0, kind: input, shape index: {}]
  %s1 = inlined_call_operand.vmem [shape: f32[8,16], index: 1, kind: output, shape index: {}]
  // Predicated region
  $region2: #{tile.18} parent=0 // pred_check
    _
  $region3: #{tile.18} parent=0 // pred_check_branch
    %3 = sbr.rel (0) target = $region5
  $region4: #{tile.18} parent=0 // pred_region
    _
  $region5: #{tile.18} parent=0 // pred_fallthru
    _
  %v4 = vld [vmem:[%s0] ss:$0 sm:$0xff]
  %5 = vst [vmem:[%s1] sm:$0xff] %v4

// kernel: basic_block_forward.1
$region0: #{basic_block_forward.1}
  #allocation0 [shape = 'u32[]', space=smem, size = 0x4, offset = 0x4, fixed_abs, tag = 'smem constant byte address 0x4 - core index']
  #allocation1 [shape = 'u32[144,128]{1,0:T(1,128)}', space=vmem, size = 0x12000, scoped, tag = 'internal scratch']
  #allocation2 [shape = 'bf16[10,16,128]{2,1,0:T(16,128)(2,1)}', space=vmem, size = 0xa000, scoped, tag = 'scratch operand']
  %s0 = inlined_call_operand.vmem [shape: f32[8,16,128], index: 0, kind: input, shape index: {}]
  %s1 = inlined_call_operand.vmem [shape: bf16[3,3,128,128], index: 1, kind: input, shape index: {}]
  %s2 = inlined_call_operand.vmem [shape: f32[1,128], index: 2, kind: input, shape index: {}]
  %s3 = inlined_call_operand.vmem [shape: bf16[3,3,128,128], index: 3, kind: input, shape index: {}]
  %s4 = inlined_call_operand.vmem [shape: f32[1,128], index: 4, kind: input, shape index: {}]
  %s5 = inlined_call_operand.vmem [shape: f32[8,16,128], index: 5, kind: output, shape index: {}]
  %s6 = sld [smem:[#allocation0]]
  $region30: #{basic_block_forward.1} parent=0
    _
  %s8 = ssub.s32 1, %s6
  %s9 = scalar_select 0, %s8, %s6
  // Predicated region
  $region2: #{basic_block_forward.1} parent=0 // pred_check
    _
  $region3: #{basic_block_forward.1} parent=0 // pred_check_branch
    %11 = sbr.rel (0) target = $region5
  $region4: #{basic_block_forward.1} parent=0 // pred_region
    _
  $region5: #{basic_block_forward.1} parent=0 // pred_fallthru
    _
  // Predicated region
  $region6: #{basic_block_forward.1} parent=0 // pred_check
    _
  $region7: #{basic_block_forward.1} parent=0 // pred_check_branch
    %13 = sbr.rel (0) target = $region9
  $region8: #{basic_block_forward.1} parent=0 // pred_region
    _
  $region9: #{basic_block_forward.1} parent=0 // pred_fallthru
    _
  // Predicated region
  $region10: #{basic_block_forward.1} parent=0 // pred_check
    _
  $region11: #{basic_block_forward.1} parent=0 // pred_check_branch
    %15 = sbr.rel (0) target = $region13
  $region12: #{basic_block_forward.1} parent=0 // pred_region
    _
  $region13: #{basic_block_forward.1} parent=0 // pred_fallthru
    _
  // Predicated region
  $region14: #{basic_block_forward.1} parent=0 // pred_check
    _
  $region15: #{basic_block_forward.1} parent=0 // pred_check_branch
    %17 = sbr.rel (0) target = $region17
  $region16: #{basic_block_forward.1} parent=0 // pred_region
    _
  $region17: #{basic_block_forward.1} parent=0 // pred_fallthru
    _
  // Predicated region
  $region18: #{basic_block_forward.1} parent=0 // pred_check
    _
  $region19: #{basic_block_forward.1} parent=0 // pred_check_branch
    %19 = sbr.rel (0) target = $region21
  $region20: #{basic_block_forward.1} parent=0 // pred_region
    _
  $region21: #{basic_block_forward.1} parent=0 // pred_fallthru
    _
  %v21 = vlaneseq
  %v22 = vshrl.u32 %v21, 7
  %v23 = vadd.s32 %v22, 8
  %v24 = vadd.s32 %v22, 16
  %v25 = vadd.s32 %v22, 24
  %v26 = vadd.s32 %v22, 32
  %v27 = vadd.s32 %v22, 40
  %v28 = vadd.s32 %v22, 48
  %v29 = vadd.s32 %v22, 56
  %v30 = vadd.s32 %v22, 64
  %v31 = vadd.s32 %v22, 72
  %v32 = vadd.s32 %v22, 80
  %v33 = vadd.s32 %v22, 88
  %v34 = vadd.s32 %v22, 96
  %v35 = vadd.s32 %v22, 104
  %v36 = vadd.s32 %v22, 112
  %v37 = vadd.s32 %v22, 120
  %vm38 = vcmp.lt.s32.totalorder %v22, 0
  %v39 = vsub.s32 0, %v22
  %v40 = vsel %vm38, %v39, %v22
  %v41 = vshrl.u32 %v40, 3
  %v42 = vand.u32 %v40, 7
  %v43 = vsub.s32 0, %v42
  %v44 = vsel %vm38, %v43, %v42
  %vm45 = vcmp.lt.s32.totalorder %v23, 0
  %v46 = vsub.s32 0, %v23
  %v47 = vsel %vm45, %v46, %v23
  %v48 = vshrl.u32 %v47, 3
  %v49 = vand.u32 %v47, 7
  %v50 = vsub.s32 0, %v49
  %v51 = vsel %vm45, %v50, %v49
  %vm52 = vcmp.lt.s32.totalorder %v24, 0
  %v53 = vsub.s32 0, %v24
  %v54 = vsel %vm52, %v53, %v24
  %v55 = vshrl.u32 %v54, 3
  %v56 = vand.u32 %v54, 7
  %v57 = vsub.s32 0, %v56
  %v58 = vsel %vm52, %v57, %v56
  %vm59 = vcmp.lt.s32.totalorder %v25, 0
  %v60 = vsub.s32 0, %v25
  %v61 = vsel %vm59, %v60, %v25
  %v62 = vshrl.u32 %v61, 3
  %v63 = vand.u32 %v61, 7
  %v64 = vsub.s32 0, %v63
  %v65 = vsel %vm59, %v64, %v63
  %vm66 = vcmp.lt.s32.totalorder %v26, 0
  %v67 = vsub.s32 0, %v26
  %v68 = vsel %vm66, %v67, %v26
  %v69 = vshrl.u32 %v68, 3
  %v70 = vand.u32 %v68, 7
  %v71 = vsub.s32 0, %v70
  %v72 = vsel %vm66, %v71, %v70
  %vm73 = vcmp.lt.s32.totalorder %v27, 0
  %v74 = vsub.s32 0, %v27
  %v75 = vsel %vm73, %v74, %v27
  %v76 = vshrl.u32 %v75, 3
  %v77 = vand.u32 %v75, 7
  %v78 = vsub.s32 0, %v77
  %v79 = vsel %vm73, %v78, %v77
  %vm80 = vcmp.lt.s32.totalorder %v28, 0
  %v81 = vsub.s32 0, %v28
  %v82 = vsel %vm80, %v81, %v28
  %v83 = vshrl.u32 %v82, 3
  %v84 = vand.u32 %v82, 7
  %v85 = vsub.s32 0, %v84
  %v86 = vsel %vm80, %v85, %v84
  %vm87 = vcmp.lt.s32.totalorder %v29, 0
  %v88 = vsub.s32 0, %v29
  %v89 = vsel %vm87, %v88, %v29
  %v90 = vshrl.u32 %v89, 3
  %v91 = vand.u32 %v89, 7
  %v92 = vsub.s32 0, %v91
  %v93 = vsel %vm87, %v92, %v91
  %vm94 = vcmp.lt.s32.totalorder %v30, 0
  %v95 = vsub.s32 0, %v30
  %v96 = vsel %vm94, %v95, %v30
  %v97 = vshrl.u32 %v96, 3
  %v98 = vand.u32 %v96, 7
  %v99 = vsub.s32 0, %v98
  %v100 = vsel %vm94, %v99, %v98
  %vm101 = vcmp.lt.s32.totalorder %v31, 0
  %v102 = vsub.s32 0, %v31
  %v103 = vsel %vm101, %v102, %v31
  %v104 = vshrl.u32 %v103, 3
  %v105 = vand.u32 %v103, 7
  %v106 = vsub.s32 0, %v105
  %v107 = vsel %vm101, %v106, %v105
  %vm108 = vcmp.lt.s32.totalorder %v32, 0
  %v109 = vsub.s32 0, %v32
  %v110 = vsel %vm108, %v109, %v32
  %v111 = vshrl.u32 %v110, 3
  %v112 = vand.u32 %v110, 7
  %v113 = vsub.s32 0, %v112
  %v114 = vsel %vm108, %v113, %v112
  %vm115 = vcmp.lt.s32.totalorder %v33, 0
  %v116 = vsub.s32 0, %v33
  %v117 = vsel %vm115, %v116, %v33
  %v118 = vshrl.u32 %v117, 3
  %v119 = vand.u32 %v117, 7
  %v120 = vsub.s32 0, %v119
  %v121 = vsel %vm115, %v120, %v119
  %vm122 = vcmp.lt.s32.totalorder %v34, 0
  %v123 = vsub.s32 0, %v34
  %v124 = vsel %vm122, %v123, %v34
  %v125 = vshrl.u32 %v124, 3
  %v126 = vand.u32 %v124, 7
  %v127 = vsub.s32 0, %v126
  %v128 = vsel %vm122, %v127, %v126
  %vm129 = vcmp.lt.s32.totalorder %v35, 0
  %v130 = vsub.s32 0, %v35
  %v131 = vsel %vm129, %v130, %v35
  %v132 = vshrl.u32 %v131, 3
  %v133 = vand.u32 %v131, 7
  %v134 = vsub.s32 0, %v133
  %v135 = vsel %vm129, %v134, %v133
  %vm136 = vcmp.lt.s32.totalorder %v36, 0
  %v137 = vsub.s32 0, %v36
  %v138 = vsel %vm136, %v137, %v36
  %v139 = vshrl.u32 %v138, 3
  %v140 = vand.u32 %v138, 7
  %v141 = vsub.s32 0, %v140
  %v142 = vsel %vm136, %v141, %v140
  %vm143 = vcmp.lt.s32.totalorder %v37, 0
  %v144 = vsub.s32 0, %v37
  %v145 = vsel %vm143, %v144, %v37
  %v146 = vshrl.u32 %v145, 3
  %v147 = vand.u32 %v145, 7
  %v148 = vsub.s32 0, %v147
  %v149 = vsel %vm143, %v148, %v147
  %vm150 = vcmp.ne.s32.totalorder %v44, 0
  %vm151 = vcmp.ne.s32.totalorder %v51, 0
  %vm152 = vcmp.ne.s32.totalorder %v58, 0
  %vm153 = vcmp.ne.s32.totalorder %v65, 0
  %vm154 = vcmp.ne.s32.totalorder %v72, 0
  %vm155 = vcmp.ne.s32.totalorder %v79, 0
  %vm156 = vcmp.ne.s32.totalorder %v86, 0
  %vm157 = vcmp.ne.s32.totalorder %v93, 0
  %vm158 = vcmp.ne.s32.totalorder %v100, 0
  %vm159 = vcmp.ne.s32.totalorder %v107, 0
  %vm160 = vcmp.ne.s32.totalorder %v114, 0
  %vm161 = vcmp.ne.s32.totalorder %v121, 0
  %vm162 = vcmp.ne.s32.totalorder %v128, 0
  %vm163 = vcmp.ne.s32.totalorder %v135, 0
  %vm164 = vcmp.ne.s32.totalorder %v142, 0
  %vm165 = vcmp.ne.s32.totalorder %v149, 0
  %vm166 = vcmp.lt.s32.totalorder %v44, 0
  %vm167 = vcmp.lt.s32.totalorder %v51, 0
  %vm168 = vcmp.lt.s32.totalorder %v58, 0
  %vm169 = vcmp.lt.s32.totalorder %v65, 0
  %vm170 = vcmp.lt.s32.totalorder %v72, 0
  %vm171 = vcmp.lt.s32.totalorder %v79, 0
  %vm172 = vcmp.lt.s32.totalorder %v86, 0
  %vm173 = vcmp.lt.s32.totalorder %v93, 0
  %vm174 = vcmp.lt.s32.totalorder %v100, 0
  %vm175 = vcmp.lt.s32.totalorder %v107, 0
  %vm176 = vcmp.lt.s32.totalorder %v114, 0
  %vm177 = vcmp.lt.s32.totalorder %v121, 0
  %vm178 = vcmp.lt.s32.totalorder %v128, 0
  %vm179 = vcmp.lt.s32.totalorder %v135, 0
  %vm180 = vcmp.lt.s32.totalorder %v142, 0
  %vm181 = vcmp.lt.s32.totalorder %v149, 0
  %vm182 = vmand %vm166, %vm150
  %vm183 = vmand %vm167, %vm151
  %vm184 = vmand %vm168, %vm152
  %vm185 = vmand %vm169, %vm153
  %vm186 = vmand %vm170, %vm154
  %vm187 = vmand %vm171, %vm155
  %vm188 = vmand %vm172, %vm156
  %vm189 = vmand %vm173, %vm157
  %vm190 = vmand %vm174, %vm158
  %vm191 = vmand %vm175, %vm159
  %vm192 = vmand %vm176, %vm160
  %vm193 = vmand %vm177, %vm161
  %vm194 = vmand %vm178, %vm162
  %vm195 = vmand %vm179, %vm163
  %vm196 = vmand %vm180, %vm164
  %vm197 = vmand %vm181, %vm165
  %v198 = vadd.s32 %v44, 8
  %v199 = vadd.s32 %v51, 8
  %v200 = vadd.s32 %v58, 8
  %v201 = vadd.s32 %v65, 8
  %v202 = vadd.s32 %v72, 8
  %v203 = vadd.s32 %v79, 8
  %v204 = vadd.s32 %v86, 8
  %v205 = vadd.s32 %v93, 8
  %v206 = vadd.s32 %v100, 8
  %v207 = vadd.s32 %v107, 8
  %v208 = vadd.s32 %v114, 8
  %v209 = vadd.s32 %v121, 8
  %v210 = vadd.s32 %v128, 8
  %v211 = vadd.s32 %v135, 8
  %v212 = vadd.s32 %v142, 8
  %v213 = vadd.s32 %v149, 8
  %v214 = vsel %vm182, %v198, %v44
  %v215 = vsel %vm183, %v199, %v51
  %v216 = vsel %vm184, %v200, %v58
  %v217 = vsel %vm185, %v201, %v65
  %v218 = vsel %vm186, %v202, %v72
  %v219 = vsel %vm187, %v203, %v79
  %v220 = vsel %vm188, %v204, %v86
  %v221 = vsel %vm189, %v205, %v93
  %v222 = vsel %vm190, %v206, %v100
  %v223 = vsel %vm191, %v207, %v107
  %v224 = vsel %vm192, %v208, %v114
  %v225 = vsel %vm193, %v209, %v121
  %v226 = vsel %vm194, %v210, %v128
  %v227 = vsel %vm195, %v211, %v135
  %v228 = vsel %vm196, %v212, %v142
  %v229 = vsel %vm197, %v213, %v149
  %vm230 = vcmp.ne.s32.totalorder %v214, 0
  %vm231 = vcmp.ne.s32.totalorder %v215, 0
  %vm232 = vcmp.ne.s32.totalorder %v216, 0
  %vm233 = vcmp.ne.s32.totalorder %v217, 0
  %vm234 = vcmp.ne.s32.totalorder %v218, 0
  %vm235 = vcmp.ne.s32.totalorder %v219, 0
  %vm236 = vcmp.ne.s32.totalorder %v220, 0
  %vm237 = vcmp.ne.s32.totalorder %v221, 0
  %vm238 = vcmp.ne.s32.totalorder %v222, 0
  %vm239 = vcmp.ne.s32.totalorder %v223, 0
  %vm240 = vcmp.ne.s32.totalorder %v224, 0
  %vm241 = vcmp.ne.s32.totalorder %v225, 0
  %vm242 = vcmp.ne.s32.totalorder %v226, 0
  %vm243 = vcmp.ne.s32.totalorder %v227, 0
  %vm244 = vcmp.ne.s32.totalorder %v228, 0
  %vm245 = vcmp.ne.s32.totalorder %v229, 0
  %vm246 = vcmp.ne.s32.totalorder %v214, 7
  %vm247 = vcmp.ne.s32.totalorder %v215, 7
  %vm248 = vcmp.ne.s32.totalorder %v216, 7
  %vm249 = vcmp.ne.s32.totalorder %v217, 7
  %vm250 = vcmp.ne.s32.totalorder %v218, 7
  %vm251 = vcmp.ne.s32.totalorder %v219, 7
  %vm252 = vcmp.ne.s32.totalorder %v220, 7
  %vm253 = vcmp.ne.s32.totalorder %v221, 7
  %vm254 = vcmp.ne.s32.totalorder %v222, 7
  %vm255 = vcmp.ne.s32.totalorder %v223, 7
  %vm256 = vcmp.ne.s32.totalorder %v224, 7
  %vm257 = vcmp.ne.s32.totalorder %v225, 7
  %vm258 = vcmp.ne.s32.totalorder %v226, 7
  %vm259 = vcmp.ne.s32.totalorder %v227, 7
  %vm260 = vcmp.ne.s32.totalorder %v228, 7
  %vm261 = vcmp.ne.s32.totalorder %v229, 7
  %262 = vst [vmem:[#allocation2] sm:$0xff] 0
  %s263 = scalar_lea.vmem [#allocation2], 72
  %264 = vst [vmem:[%s263] sm:$0xff] 0
  %v265 = vld [vmem:[%s0] sm:$0xff]
  %v266 = vld [vmem:[%s0 + $0x8] sm:$0xff]
  %v267 = vld [vmem:[%s0 + $0x10] sm:$0xff]
  %v268 = vld [vmem:[%s0 + $0x18] sm:$0xff]
  %v269 = vld [vmem:[%s0 + $0x20] sm:$0xff]
  %v270 = vld [vmem:[%s0 + $0x28] sm:$0xff]
  %v271 = vld [vmem:[%s0 + $0x30] sm:$0xff]
  %v272 = vld [vmem:[%s0 + $0x38] sm:$0xff]
  %v273 = vld [vmem:[%s0 + $0x40] sm:$0xff]
  %v274 = vld [vmem:[%s0 + $0x48] sm:$0xff]
  %v275 = vld [vmem:[%s0 + $0x50] sm:$0xff]
  %v276 = vld [vmem:[%s0 + $0x58] sm:$0xff]
  %v277 = vld [vmem:[%s0 + $0x60] sm:$0xff]
  %v278 = vld [vmem:[%s0 + $0x68] sm:$0xff]
  %v279 = vld [vmem:[%s0 + $0x70] sm:$0xff]
  %v280 = vld [vmem:[%s0 + $0x78] sm:$0xff]
  %v281 = vpack.c.bf16 %v266, %v265
  %v282 = vpack.c.bf16 %v268, %v267
  %v283 = vpack.c.bf16 %v270, %v269
  %v284 = vpack.c.bf16 %v272, %v271
  %v285 = vpack.c.bf16 %v274, %v273
  %v286 = vpack.c.bf16 %v276, %v275
  %v287 = vpack.c.bf16 %v278, %v277
  %v288 = vpack.c.bf16 %v280, %v279
  %s289 = scalar_lea.vmem [#allocation2], 8
  %290 = vst [vmem:[%s289] sm:$0xff] %v281
  %291 = vst [vmem:[%s289 + $0x8] sm:$0xff] %v282
  %292 = vst [vmem:[%s289 + $0x10] sm:$0xff] %v283
  %293 = vst [vmem:[%s289 + $0x18] sm:$0xff] %v284
  %294 = vst [vmem:[%s289 + $0x20] sm:$0xff] %v285
  %295 = vst [vmem:[%s289 + $0x28] sm:$0xff] %v286
  %296 = vst [vmem:[%s289 + $0x30] sm:$0xff] %v287
  %297 = vst [vmem:[%s289 + $0x38] sm:$0xff] %v288
  %v298 = vld [vmem:[#allocation2] sm:$0xff]
  %v299 = vld [vmem:[#allocation2 + $0x8] sm:$0xff]
  %v300 = vld [vmem:[#allocation2 + $0x10] sm:$0xff]
  %v301 = vld [vmem:[#allocation2 + $0x18] sm:$0xff]
  %v302 = vld [vmem:[#allocation2 + $0x20] sm:$0xff]
  %v303 = vld [vmem:[#allocation2 + $0x28] sm:$0xff]
  %v304 = vld [vmem:[#allocation2 + $0x30] sm:$0xff]
  %v305 = vld [vmem:[#allocation2 + $0x38] sm:$0xff]
  %v306 = vld [vmem:[%s1] sm:$0xf]
  %v307 = vld [vmem:[%s1 + $0x4] sm:$0xf]
  %v308 = vld [vmem:[%s1 + $0x8] sm:$0xf]
  %v309 = vld [vmem:[%s1 + $0xc] sm:$0xf]
  %v310 = vld [vmem:[%s1 + $0x10] sm:$0xf]
  %v311 = vld [vmem:[%s1 + $0x14] sm:$0xf]
  %v312 = vld [vmem:[%s1 + $0x18] sm:$0xf]
  %v313 = vld [vmem:[%s1 + $0x1c] sm:$0xf]
  %v314 = vld [vmem:[%s1 + $0x20] sm:$0xf]
  %v315 = vld [vmem:[%s1 + $0x24] sm:$0xf]
  %v316 = vld [vmem:[%s1 + $0x28] sm:$0xf]
  %v317 = vld [vmem:[%s1 + $0x2c] sm:$0xf]
  %v318 = vld [vmem:[%s1 + $0x30] sm:$0xf]
  %v319 = vld [vmem:[%s1 + $0x34] sm:$0xf]
  %v320 = vld [vmem:[%s1 + $0x38] sm:$0xf]
  %v321 = vld [vmem:[%s1 + $0x3c] sm:$0xf]
  %v322 = vld [vmem:[%s289] sm:$0xff]
  %v323 = vld [vmem:[%s289 + $0x8] sm:$0xff]
  %v324 = vld [vmem:[%s289 + $0x10] sm:$0xff]
  %v325 = vld [vmem:[%s289 + $0x18] sm:$0xff]
  %v326 = vld [vmem:[%s289 + $0x20] sm:$0xff]
  %v327 = vld [vmem:[%s289 + $0x28] sm:$0xff]
  %v328 = vld [vmem:[%s289 + $0x30] sm:$0xff]
  %v329 = vld [vmem:[%s289 + $0x38] sm:$0xff]
  %s330 = scalar_lea.vmem %s1, 192
  %v331 = vld [vmem:[%s330] sm:$0xf]
  %v332 = vld [vmem:[%s330 + $0x4] sm:$0xf]
  %v333 = vld [vmem:[%s330 + $0x8] sm:$0xf]
  %v334 = vld [vmem:[%s330 + $0xc] sm:$0xf]
  %v335 = vld [vmem:[%s330 + $0x10] sm:$0xf]
  %v336 = vld [vmem:[%s330 + $0x14] sm:$0xf]
  %v337 = vld [vmem:[%s330 + $0x18] sm:$0xf]
  %v338 = vld [vmem:[%s330 + $0x1c] sm:$0xf]
  %v339 = vld [vmem:[%s330 + $0x20] sm:$0xf]
  %v340 = vld [vmem:[%s330 + $0x24] sm:$0xf]
  %v341 = vld [vmem:[%s330 + $0x28] sm:$0xf]
  %v342 = vld [vmem:[%s330 + $0x2c] sm:$0xf]
  %v343 = vld [vmem:[%s330 + $0x30] sm:$0xf]
  %v344 = vld [vmem:[%s330 + $0x34] sm:$0xf]
  %v345 = vld [vmem:[%s330 + $0x38] sm:$0xf]
  %v346 = vld [vmem:[%s330 + $0x3c] sm:$0xf]
  %v363 = vunpack.c.l.b16 %v331
  %v364 = vunpack.c.l.b16 %v332
  %v365 = vunpack.c.l.b16 %v333
  %v366 = vunpack.c.l.b16 %v334
  %v367 = vunpack.c.l.b16 %v335
  %v368 = vunpack.c.l.b16 %v336
  %v369 = vunpack.c.l.b16 %v337
  %v370 = vunpack.c.l.b16 %v338
  %v371 = vunpack.c.l.b16 %v339
  %v372 = vunpack.c.l.b16 %v340
  %v373 = vunpack.c.l.b16 %v341
  %v374 = vunpack.c.l.b16 %v342
  %v375 = vunpack.c.l.b16 %v343
  %v376 = vunpack.c.l.b16 %v344
  %v377 = vunpack.c.l.b16 %v345
  %v378 = vunpack.c.l.b16 %v346
  %v379 = vpack.c.b16 %v364, %v363
  %v380 = vpack.c.b16 %v366, %v365
  %v381 = vpack.c.b16 %v368, %v367
  %v382 = vpack.c.b16 %v370, %v369
  %v383 = vpack.c.b16 %v372, %v371
  %v384 = vpack.c.b16 %v374, %v373
  %v385 = vpack.c.b16 %v376, %v375
  %v386 = vpack.c.b16 %v378, %v377
  %395 = vmatprep.subr.bf16.mxu0 0
  %396 = vmatpush1.bf16.msra.mxu0 %v379
  %397 = vmatprep.subr.bf16.mxu0 0
  %398 = vmatpush1.bf16.msra.mxu0 %v380
  %399 = vmatprep.subr.bf16.mxu0 0
  %400 = vmatpush1.bf16.msra.mxu0 %v381
  %401 = vmatprep.subr.bf16.mxu0 0
  %402 = vmatpush1.bf16.msra.mxu0 %v382
  %403 = vmatprep.subr.bf16.mxu0 0
  %404 = vmatpush1.bf16.msra.mxu0 %v383
  %405 = vmatprep.subr.bf16.mxu0 0
  %406 = vmatpush1.bf16.msra.mxu0 %v384
  %407 = vmatprep.subr.bf16.mxu0 0
  %408 = vmatpush1.bf16.msra.mxu0 %v385
  %409 = vmatprep.subr.bf16.mxu0 0
  %410 = vmatpush1.bf16.msra.mxu0 %v386
  %411 = vmatprep.subr.bf16.mxu0 0
  %412 = vmatpush1.bf16.msra.mxu0 0
  %413 = vmatprep.subr.bf16.mxu0 0
  %414 = vmatpush1.bf16.msra.mxu0 0
  %415 = vmatprep.subr.bf16.mxu0 0
  %416 = vmatpush1.bf16.msra.mxu0 0
  %417 = vmatprep.subr.bf16.mxu0 0
  %418 = vmatpush1.bf16.msra.mxu0 0
  %419 = vmatprep.subr.bf16.mxu0 0
  %420 = vmatpush1.bf16.msra.mxu0 0
  %421 = vmatprep.subr.bf16.mxu0 0
  %422 = vmatpush1.bf16.msra.mxu0 0
  %423 = vmatprep.subr.bf16.mxu0 0
  %424 = vmatpush1.bf16.msra.mxu0 0
  %425 = vmatprep.subr.bf16.mxu0 0
  %426 = vmatpush1.bf16.msra.mxu0 0
  %427 = vmatprep.mubr.bf16.mxu0 0
  %428 = vmatmul.mubr.bf16.gmra.mrb[0].mxu0 %v322
  %v429 = vpop.f32.mrb[0].mxu0
  %v430 = vadd.f32 0.0, %v429
  %v431 = vpop.f32.mrb[0].mxu0
  %v432 = vpop.f32.mrb[0].mxu0
  %v433 = vadd.f32 0.0, %v432
  %v434 = vpop.f32.mrb[0].mxu0
  %435 = vmatprep.mubr.bf16.mxu0 0
  %436 = vmatmul.mubr.bf16.gmra.mrb[0].mxu0 %v323
  %v437 = vpop.f32.mrb[0].mxu0
  %v438 = vadd.f32 0.0, %v437
  %v439 = vpop.f32.mrb[0].mxu0
  %v440 = vpop.f32.mrb[0].mxu0
  %v441 = vadd.f32 0.0, %v440
  %v442 = vpop.f32.mrb[0].mxu0
  %443 = vmatprep.mubr.bf16.mxu0 0
  %444 = vmatmul.mubr.bf16.gmra.mrb[0].mxu0 %v324
  %v445 = vpop.f32.mrb[0].mxu0
  %v446 = vadd.f32 0.0, %v445
  %v447 = vpop.f32.mrb[0].mxu0
  %v448 = vpop.f32.mrb[0].mxu0
  %v449 = vadd.f32 0.0, %v448
  %v450 = vpop.f32.mrb[0].mxu0
  %451 = vmatprep.mubr.bf16.mxu0 0
  %452 = vmatmul.mubr.bf16.gmra.mrb[0].mxu0 %v325
  %v453 = vpop.f32.mrb[0].mxu0
  %v454 = vadd.f32 0.0, %v453
  %v455 = vpop.f32.mrb[0].mxu0
  %v456 = vpop.f32.mrb[0].mxu0
  %v457 = vadd.f32 0.0, %v456
  %v458 = vpop.f32.mrb[0].mxu0
  %459 = vmatprep.mubr.bf16.mxu0 0
  %460 = vmatmul.mubr.bf16.gmra.mrb[0].mxu0 %v326
  %v461 = vpop.f32.mrb[0].mxu0
  %v462 = vadd.f32 0.0, %v461
  %v463 = vpop.f32.mrb[0].mxu0
  %v464 = vpop.f32.mrb[0].mxu0
  %v465 = vadd.f32 0.0, %v464
  %v466 = vpop.f32.mrb[0].mxu0
  %467 = vmatprep.mubr.bf16.mxu0 0
  %468 = vmatmul.mubr.bf16.gmra.mrb[0].mxu0 %v327
  %v469 = vpop.f32.mrb[0].mxu0
  %v470 = vadd.f32 0.0, %v469
  %v471 = vpop.f32.mrb[0].mxu0
  %v472 = vpop.f32.mrb[0].mxu0
  %v473 = vadd.f32 0.0, %v472
  %v474 = vpop.f32.mrb[0].mxu0
  %475 = vmatprep.mubr.bf16.mxu0 0
  %476 = vmatmul.mubr.bf16.gmra.mrb[0].mxu0 %v328
  %v477 = vpop.f32.mrb[0].mxu0
  %v478 = vadd.f32 0.0, %v477
  %v479 = vpop.f32.mrb[0].mxu0
  %v480 = vpop.f32.mrb[0].mxu0
  %v481 = vadd.f32 0.0, %v480
  %v482 = vpop.f32.mrb[0].mxu0
  %483 = vmatprep.mubr.bf16.mxu0 0
  %484 = vmatmul.mubr.bf16.gmra.mrb[0].mxu0 %v329
  %v485 = vpop.f32.mrb[0].mxu0
  %v486 = vadd.f32 0.0, %v485
  %v487 = vpop.f32.mrb[0].mxu0
  %v488 = vpop.f32.mrb[0].mxu0
  %v489 = vadd.f32 0.0, %v488
  %v490 = vpop.f32.mrb[0].mxu0
  %491 = vdwg.mxu0
  %v508 = vunpack.c.l.b16 %v306
  %v509 = vunpack.c.l.b16 %v307
  %v510 = vunpack.c.l.b16 %v308
  %v511 = vunpack.c.l.b16 %v309
  %v512 = vunpack.c.l.b16 %v310
  %v513 = vunpack.c.l.b16 %v311
  %v514 = vunpack.c.l.b16 %v312
  %v515 = vunpack.c.l.b16 %v313
  %v516 = vunpack.c.l.b16 %v314
  %v517 = vunpack.c.l.b16 %v315
  %v518 = vunpack.c.l.b16 %v316
  %v519 = vunpack.c.l.b16 %v317
  %v520 = vunpack.c.l.b16 %v318
  %v521 = vunpack.c.l.b16 %v319
  %v522 = vunpack.c.l.b16 %v320
  %v523 = vunpack.c.l.b16 %v321
  %v524 = vpack.c.b16 %v509, %v508
  %v525 = vpack.c.b16 %v511, %v510
  %v526 = vpack.c.b16 %v513, %v512
  %v527 = vpack.c.b16 %v515, %v514
  %v528 = vpack.c.b16 %v517, %v516
  %v529 = vpack.c.b16 %v519, %v518
  %v530 = vpack.c.b16 %v521, %v520
  %v531 = vpack.c.b16 %v523, %v522
  %540 = vmatprep.subr.bf16.mxu0 0
  %541 = vmatpush1.bf16.msra.mxu0 %v524
  %542 = vmatprep.subr.bf16.mxu0 0
  %543 = vmatpush1.bf16.msra.mxu0 %v525
  %544 = vmatprep.subr.bf16.mxu0 0
  %545 = vmatpush1.bf16.msra.mxu0 %v526
  %546 = vmatprep.subr.bf16.mxu0 0
  %547 = vmatpush1.bf16.msra.mxu0 %v527
  %548 = vmatprep.subr.bf16.mxu0 0
  %549 = vmatpush1.bf16.msra.mxu0 %v528
  %550 = vmatprep.subr.bf16.mxu0 0
  %551 = vmatpush1.bf16.msra.mxu0 %v529
  %552 = vmatprep.subr.bf16.mxu0 0
  %553 = vmatpush1.bf16.msra.mxu0 %v530
  %554 = vmatprep.subr.bf16.mxu0 0
  %555 = vmatpush1.bf16.msra.mxu0 %v531
  %556 = vmatprep.subr.bf16.mxu0 0
  %557 = vmatpush1.bf16.msra.mxu0 0
  %558 = vmatprep.subr.bf16.mxu0 0
  %559 = vmatpush1.bf16.msra.mxu0 0
  %560 = vmatprep.subr.bf16.mxu0 0
  %561 = vmatpush1.bf16.msra.mxu0 0
  %562 = vmatprep.subr.bf16.mxu0 0
  %563 = vmatpush1.bf16.msra.mxu0 0
  %564 = vmatprep.subr.bf16.mxu0 0
  %565 = vmatpush1.bf16.msra.mxu0 0
  %566 = vmatprep.subr.bf16.mxu0 0
  %567 = vmatpush1.bf16.msra.mxu0 0
  %568 = vmatprep.subr.bf16.mxu0 0
  %569 = vmatpush1.bf16.msra.mxu0 0
  %570 = vmatprep.subr.bf16.mxu0 0
  %571 = vmatpush1.bf16.msra.mxu0 0
  %572 = vmatprep.mubr.bf16.mxu0 0
  %573 = vmatmul.mubr.bf16.gmra.mrb[0].mxu0 %v298
  %v574 = vpop.f32.mrb[0].mxu0
  %v575 = vadd.f32 %v430, %v574
  %v576 = vpop.f32.mrb[0].mxu0
  %v577 = vpop.f32.mrb[0].mxu0
  %v578 = vadd.f32 %v433, %v577
  %v579 = vpop.f32.mrb[0].mxu0
  %580 = vmatprep.mubr.bf16.mxu0 0
  %581 = vmatmul.mubr.bf16.gmra.mrb[0].mxu0 %v299
  %v582 = vpop.f32.mrb[0].mxu0
  %v583 = vadd.f32 %v438, %v582
  %v584 = vpop.f32.mrb[0].mxu0
  %v585 = vpop.f32.mrb[0].mxu0
  %v586 = vadd.f32 %v441, %v585
  %v587 = vpop.f32.mrb[0].mxu0
  %588 = vmatprep.mubr.bf16.mxu0 0
  %589 = vmatmul.mubr.bf16.gmra.mrb[0].mxu0 %v300
  %v590 = vpop.f32.mrb[0].mxu0
  %v591 = vadd.f32 %v446, %v590
  %v592 = vpop.f32.mrb[0].mxu0
  %v593 = vpop.f32.mrb[0].mxu0
  %v594 = vadd.f32 %v449, %v593
  %v595 = vpop.f32.mrb[0].mxu0
  %596 = vmatprep.mubr.bf16.mxu0 0
  %597 = vmatmul.mubr.bf16.gmra.mrb[0].mxu0 %v301
  %v598 = vpop.f32.mrb[0].mxu0
  %v599 = vadd.f32 %v454, %v598
  %v600 = vpop.f32.mrb[0].mxu0
  %v601 = vpop.f32.mrb[0].mxu0
  %v602 = vadd.f32 %v457, %v601
  %v603 = vpop.f32.mrb[0].mxu0
  %604 = vmatprep.mubr.bf16.mxu0 0
  %605 = vmatmul.mubr.bf16.gmra.mrb[0].mxu0 %v302
  %v606 = vpop.f32.mrb[0].mxu0
  %v607 = vadd.f32 %v462, %v606
  %v608 = vpop.f32.mrb[0].mxu0
  %v609 = vpop.f32.mrb[0].mxu0
  %v610 = vadd.f32 %v465, %v609
  %v611 = vpop.f32.mrb[0].mxu0
  %612 = vmatprep.mubr.bf16.mxu0 0
  %613 = vmatmul.mubr.bf16.gmra.mrb[0].mxu0 %v303
  %v614 = vpop.f32.mrb[0].mxu0
  %v615 = vadd.f32 %v470, %v614
  %v616 = vpop.f32.mrb[0].mxu0
  %v617 = vpop.f32.mrb[0].mxu0
  %v618 = vadd.f32 %v473, %v617
  %v619 = vpop.f32.mrb[0].mxu0
  %620 = vmatprep.mubr.bf16.mxu0 0
  %621 = vmatmul.mubr.bf16.gmra.mrb[0].mxu0 %v304
  %v622 = vpop.f32.mrb[0].mxu0
  %v623 = vadd.f32 %v478, %v622
  %v624 = vpop.f32.mrb[0].mxu0
  %v625 = vpop.f32.mrb[0].mxu0
  %v626 = vadd.f32 %v481, %v625
  %v627 = vpop.f32.mrb[0].mxu0
  %628 = vmatprep.mubr.bf16.mxu0 0
  %629 = vmatmul.mubr.bf16.gmra.mrb[0].mxu0 %v305
  %v630 = vpop.f32.mrb[0].mxu0
  %v631 = vadd.f32 %v486, %v630
  %v632 = vpop.f32.mrb[0].mxu0
  %v633 = vpop.f32.mrb[0].mxu0
  %v634 = vadd.f32 %v489, %v633
  %v635 = vpop.f32.mrb[0].mxu0
  %636 = vdwg.mxu0
  %s637 = scalar_lea.vmem [#allocation2], 16
  %v638 = vld [vmem:[%s637] sm:$0xff]
  %v639 = vld [vmem:[%s637 + $0x8] sm:$0xff]
  %v640 = vld [vmem:[%s637 + $0x10] sm:$0xff]
  %v641 = vld [vmem:[%s637 + $0x18] sm:$0xff]
  %v642 = vld [vmem:[%s637 + $0x20] sm:$0xff]
  %v643 = vld [vmem:[%s637 + $0x28] sm:$0xff]
  %v644 = vld [vmem:[%s637 + $0x30] sm:$0xff]
  %v645 = vld [vmem:[%s637 + $0x38] sm:$0xff]
  %s646 = scalar_lea.vmem %s1, 384
  %v647 = vld [vmem:[%s646] sm:$0xf]
  %v648 = vld [vmem:[%s646 + $0x4] sm:$0xf]
  %v649 = vld [vmem:[%s646 + $0x8] sm:$0xf]
  %v650 = vld [vmem:[%s646 + $0xc] sm:$0xf]
  %v651 = vld [vmem:[%s646 + $0x10] sm:$0xf]
  %v652 = vld [vmem:[%s646 + $0x14] sm:$0xf]
  %v653 = vld [vmem:[%s646 + $0x18] sm:$0xf]
  %v654 = vld [vmem:[%s646 + $0x1c] sm:$0xf]
  %v655 = vld [vmem:[%s646 + $0x20] sm:$0xf]
  %v656 = vld [vmem:[%s646 + $0x24] sm:$0xf]
  %v657 = vld [vmem:[%s646 + $0x28] sm:$0xf]
  %v658 = vld [vmem:[%s646 + $0x2c] sm:$0xf]
  %v659 = vld [vmem:[%s646 + $0x30] sm:$0xf]
  %v660 = vld [vmem:[%s646 + $0x34] sm:$0xf]
  %v661 = vld [vmem:[%s646 + $0x38] sm:$0xf]
  %v662 = vld [vmem:[%s646 + $0x3c] sm:$0xf]
  %v679 = vunpack.c.l.b16 %v647
  %v680 = vunpack.c.l.b16 %v648
  %v681 = vunpack.c.l.b16 %v649
  %v682 = vunpack.c.l.b16 %v650
  %v683 = vunpack.c.l.b16 %v651
  %v684 = vunpack.c.l.b16 %v652
  %v685 = vunpack.c.l.b16 %v653
  %v686 = vunpack.c.l.b16 %v654
  %v687 = vunpack.c.l.b16 %v655
  %v688 = vunpack.c.l.b16 %v656
  %v689 = vunpack.c.l.b16 %v657
  %v690 = vunpack.c.l.b16 %v658
  %v691 = vunpack.c.l.b16 %v659
  %v692 = vunpack.c.l.b16 %v660
  %v693 = vunpack.c.l.b16 %v661
  %v694 = vunpack.c.l.b16 %v662
  %v695 = vpack.c.b16 %v680, %v679
  %v696 = vpack.c.b16 %v682, %v681
  %v697 = vpack.c.b16 %v684, %v683
  %v698 = vpack.c.b16 %v686, %v685
  %v699 = vpack.c.b16 %v688, %v687
  %v700 = vpack.c.b16 %v690, %v689
  %v701 = vpack.c.b16 %v692, %v691
  %v702 = vpack.c.b16 %v694, %v693
  %711 = vmatprep.subr.bf16.mxu0 0
  %712 = vmatpush1.bf16.msra.mxu0 %v695
  %713 = vmatprep.subr.bf16.mxu0 0
  %714 = vmatpush1.bf16.msra.mxu0 %v696
  %715 = vmatprep.subr.bf16.mxu0 0
  %716 = vmatpush1.bf16.msra.mxu0 %v697
  %717 = vmatprep.subr.bf16.mxu0 0
  %718 = vmatpush1.bf16.msra.mxu0 %v698
  %719 = vmatprep.subr.bf16.mxu0 0
  %720 = vmatpush1.bf16.msra.mxu0 %v699
  %721 = vmatprep.subr.bf16.mxu0 0
  %722 = vmatpush1.bf16.msra.mxu0 %v700
  %723 = vmatprep.subr.bf16.mxu0 0
  %724 = vmatpush1.bf16.msra.mxu0 %v701
  %725 = vmatprep.subr.bf16.mxu0 0
  %726 = vmatpush1.bf16.msra.mxu0 %v702
  %727 = vmatprep.subr.bf16.mxu0 0
  %728 = vmatpush1.bf16.msra.mxu0 0
  %729 = vmatprep.subr.bf16.mxu0 0
  %730 = vmatpush1.bf16.msra.mxu0 0
  %731 = vmatprep.subr.bf16.mxu0 0
  %732 = vmatpush1.bf16.msra.mxu0 0
  %733 = vmatprep.subr.bf16.mxu0 0
  %734 = vmatpush1.bf16.msra.mxu0 0
  %735 = vmatprep.subr.bf16.mxu0 0
  %736 = vmatpush1.bf16.msra.mxu0 0
  %737 = vmatprep.subr.bf16.mxu0 0
  %738 = vmatpush1.bf16.msra.mxu0 0
  %739 = vmatprep.subr.bf16.mxu0 0
  %740 = vmatpush1.bf16.msra.mxu0 0
  %741 = vmatprep.subr.bf16.mxu0 0
  %742 = vmatpush1.bf16.msra.mxu0 0
  %743 = vmatprep.mubr.bf16.mxu0 0
  %744 = vmatmul.mubr.bf16.gmra.mrb[0].mxu0 %v638
  %v745 = vpop.f32.mrb[0].mxu0
  %v746 = vadd.f32 0.0, %v745
  %v747 = vpop.f32.mrb[0].mxu0
  %v748 = vpop.f32.mrb[0].mxu0
  %v749 = vadd.f32 0.0, %v748
  %v750 = vpop.f32.mrb[0].mxu0
  %751 = vmatprep.mubr.bf16.mxu0 0
  %752 = vmatmul.mubr.bf16.gmra.mrb[0].mxu0 %v639
  %v753 = vpop.f32.mrb[0].mxu0
  %v754 = vadd.f32 0.0, %v753
  %v755 = vpop.f32.mrb[0].mxu0
  %v756 = vpop.f32.mrb[0].mxu0
  %v757 = vadd.f32 0.0, %v756
  %v758 = vpop.f32.mrb[0].mxu0
  %759 = vmatprep.mubr.bf16.mxu0 0
  %760 = vmatmul.mubr.bf16.gmra.mrb[0].mxu0 %v640
  %v761 = vpop.f32.mrb[0].mxu0
  %v762 = vadd.f32 0.0, %v761
  %v763 = vpop.f32.mrb[0].mxu0
  %v764 = vpop.f32.mrb[0].mxu0
  %v765 = vadd.f32 0.0, %v764
  %v766 = vpop.f32.mrb[0].mxu0
  %767 = vmatprep.mubr.bf16.mxu0 0
  %768 = vmatmul.mubr.bf16.gmra.mrb[0].mxu0 %v641
  %v769 = vpop.f32.mrb[0].mxu0
  %v770 = vadd.f32 0.0, %v769
  %v771 = vpop.f32.mrb[0].mxu0
  %v772 = vpop.f32.mrb[0].mxu0
  %v773 = vadd.f32 0.0, %v772
  %v774 = vpop.f32.mrb[0].mxu0
  %775 = vmatprep.mubr.bf16.mxu0 0
  %776 = vmatmul.mubr.bf16.gmra.mrb[0].mxu0 %v642
  %v777 = vpop.f32.mrb[0].mxu0
  %v778 = vadd.f32 0.0, %v777
  %v779 = vpop.f32.mrb[0].mxu0
  %v780 = vpop.f32.mrb[0].mxu0
  %v781 = vadd.f32 0.0, %v780
  %v782 = vpop.f32.mrb[0].mxu0
  %783 = vmatprep.mubr.bf16.mxu0 0
  %784 = vmatmul.mubr.bf16.gmra.mrb[0].mxu0 %v643
  %v785 = vpop.f32.mrb[0].mxu0
  %v786 = vadd.f32 0.0, %v785
  %v787 = vpop.f32.mrb[0].mxu0
  %v788 = vpop.f32.mrb[0].mxu0
  %v789 = vadd.f32 0.0, %v788
  %v790 = vpop.f32.mrb[0].mxu0
  %791 = vmatprep.mubr.bf16.mxu0 0
  %792 = vmatmul.mubr.bf16.gmra.mrb[0].mxu0 %v644
  %v793 = vpop.f32.mrb[0].mxu0
  %v794 = vadd.f32 0.0, %v793
  %v795 = vpop.f32.mrb[0].mxu0
  %v796 = vpop.f32.mrb[0].mxu0
  %v797 = vadd.f32 0.0, %v796
  %v798 = vpop.f32.mrb[0].mxu0
  %799 = vmatprep.mubr.bf16.mxu0 0
  %800 = vmatmul.mubr.bf16.gmra.mrb[0].mxu0 %v645
  %v801 = vpop.f32.mrb[0].mxu0
  %v802 = vadd.f32 0.0, %v801
  %v803 = vpop.f32.mrb[0].mxu0
  %v804 = vpop.f32.mrb[0].mxu0
  %v805 = vadd.f32 0.0, %v804
  %v806 = vpop.f32.mrb[0].mxu0
  %807 = vdwg.mxu0
  %v808 = vadd.f32 %v575, %v746
  %v809 = vadd.f32 %v578, %v749
  %v810 = vadd.f32 %v583, %v754
  %v811 = vadd.f32 %v586, %v757
  %v812 = vadd.f32 %v591, %v762
  %v813 = vadd.f32 %v594, %v765
  %v814 = vadd.f32 %v599, %v770
  %v815 = vadd.f32 %v602, %v773
  %v816 = vadd.f32 %v607, %v778
  %v817 = vadd.f32 %v610, %v781
  %v818 = vadd.f32 %v615, %v786
  %v819 = vadd.f32 %v618, %v789
  %v820 = vadd.f32 %v623, %v794
  %v821 = vadd.f32 %v626, %v797
  %v822 = vadd.f32 %v631, %v802
  %v823 = vadd.f32 %v634, %v805
  %vm840 = vcmask 1040384
  %v841 = vrot.slane %v808, 7
  %v842 = vrot.slane %v809, 7
  %v843 = vsel %vm840, %v841, %v842
  %v844 = vrot.slane %v810, 7
  %v845 = vsel %vm840, %v842, %v844
  %v846 = vrot.slane %v811, 7
  %v847 = vsel %vm840, %v844, %v846
  %v848 = vrot.slane %v812, 7
  %v849 = vsel %vm840, %v846, %v848
  %v850 = vrot.slane %v813, 7
  %v851 = vsel %vm840, %v848, %v850
  %v852 = vrot.slane %v814, 7
  %v853 = vsel %vm840, %v850, %v852
  %v854 = vrot.slane %v815, 7
  %v855 = vsel %vm840, %v852, %v854
  %v856 = vrot.slane %v816, 7
  %v857 = vsel %vm840, %v854, %v856
  %v858 = vrot.slane %v817, 7
  %v859 = vsel %vm840, %v856, %v858
  %v860 = vrot.slane %v818, 7
  %v861 = vsel %vm840, %v858, %v860
  %v862 = vrot.slane %v819, 7
  %v863 = vsel %vm840, %v860, %v862
  %v864 = vrot.slane %v820, 7
  %v865 = vsel %vm840, %v862, %v864
  %v866 = vrot.slane %v821, 7
  %v867 = vsel %vm840, %v864, %v866
  %v868 = vrot.slane %v822, 7
  %v869 = vsel %vm840, %v866, %v868
  %v870 = vrot.slane %v823, 7
  %v871 = vsel %vm840, %v868, %v870
  %v888 = vsel %vm840, 0.0, %v841
  %v889 = vsel %vm230, 1, 0
  %v890 = vsel %vm231, 1, 0
  %v891 = vsel %vm232, 1, 0
  %v892 = vsel %vm233, 1, 0
  %v893 = vsel %vm234, 1, 0
  %v894 = vsel %vm235, 1, 0
  %v895 = vsel %vm236, 1, 0
  %v896 = vsel %vm237, 1, 0
  %v897 = vsel %vm238, 1, 0
  %v898 = vsel %vm239, 1, 0
  %v899 = vsel %vm240, 1, 0
  %v900 = vsel %vm241, 1, 0
  %v901 = vsel %vm242, 1, 0
  %v902 = vsel %vm243, 1, 0
  %v903 = vsel %vm244, 1, 0
  %v904 = vsel %vm245, 1, 0
  %vm905 = vcmp.eq.s32.totalorder %v889, 1
  %vm906 = vcmp.eq.s32.totalorder %v890, 1
  %vm907 = vcmp.eq.s32.totalorder %v891, 1
  %vm908 = vcmp.eq.s32.totalorder %v892, 1
  %vm909 = vcmp.eq.s32.totalorder %v893, 1
  %vm910 = vcmp.eq.s32.totalorder %v894, 1
  %vm911 = vcmp.eq.s32.totalorder %v895, 1
  %vm912 = vcmp.eq.s32.totalorder %v896, 1
  %vm913 = vcmp.eq.s32.totalorder %v897, 1
  %vm914 = vcmp.eq.s32.totalorder %v898, 1
  %vm915 = vcmp.eq.s32.totalorder %v899, 1
  %vm916 = vcmp.eq.s32.totalorder %v900, 1
  %vm917 = vcmp.eq.s32.totalorder %v901, 1
  %vm918 = vcmp.eq.s32.totalorder %v902, 1
  %vm919 = vcmp.eq.s32.totalorder %v903, 1
  %vm920 = vcmp.eq.s32.totalorder %v904, 1
  %v921 = vsel %vm905, %v888, 0.0
  %v922 = vsel %vm906, %v843, 0.0
  %v923 = vsel %vm907, %v845, 0.0
  %v924 = vsel %vm908, %v847, 0.0
  %v925 = vsel %vm909, %v849, 0.0
  %v926 = vsel %vm910, %v851, 0.0
  %v927 = vsel %vm911, %v853, 0.0
  %v928 = vsel %vm912, %v855, 0.0
  %v929 = vsel %vm913, %v857, 0.0
  %v930 = vsel %vm914, %v859, 0.0
  %v931 = vsel %vm915, %v861, 0.0
  %v932 = vsel %vm916, %v863, 0.0
  %v933 = vsel %vm917, %v865, 0.0
  %v934 = vsel %vm918, %v867, 0.0
  %v935 = vsel %vm919, %v869, 0.0
  %v936 = vsel %vm920, %v871, 0.0
  %v937 = vadd.f32 %v921, 0.0
  %v938 = vadd.f32 %v922, 0.0
  %v939 = vadd.f32 %v923, 0.0
  %v940 = vadd.f32 %v924, 0.0
  %v941 = vadd.f32 %v925, 0.0
  %v942 = vadd.f32 %v926, 0.0
  %v943 = vadd.f32 %v927, 0.0
  %v944 = vadd.f32 %v928, 0.0
  %v945 = vadd.f32 %v929, 0.0
  %v946 = vadd.f32 %v930, 0.0
  %v947 = vadd.f32 %v931, 0.0
  %v948 = vadd.f32 %v932, 0.0
  %v949 = vadd.f32 %v933, 0.0
  %v950 = vadd.f32 %v934, 0.0
  %v951 = vadd.f32 %v935, 0.0
  %v952 = vadd.f32 %v936, 0.0
  %s953 = scalar_lea.vmem %s1, 64
  %v954 = vld [vmem:[%s953] sm:$0xf]
  %v955 = vld [vmem:[%s953 + $0x4] sm:$0xf]
  %v956 = vld [vmem:[%s953 + $0x8] sm:$0xf]
  %v957 = vld [vmem:[%s953 + $0xc] sm:$0xf]
  %v958 = vld [vmem:[%s953 + $0x10] sm:$0xf]
  %v959 = vld [vmem:[%s953 + $0x14] sm:$0xf]
  %v960 = vld [vmem:[%s953 + $0x18] sm:$0xf]
  %v961 = vld [vmem:[%s953 + $0x1c] sm:$0xf]
  %v962 = vld [vmem:[%s953 + $0x20] sm:$0xf]
  %v963 = vld [vmem:[%s953 + $0x24] sm:$0xf]
  %v964 = vld [vmem:[%s953 + $0x28] sm:$0xf]
  %v965 = vld [vmem:[%s953 + $0x2c] sm:$0xf]
  %v966 = vld [vmem:[%s953 + $0x30] sm:$0xf]
  %v967 = vld [vmem:[%s953 + $0x34] sm:$0xf]
  %v968 = vld [vmem:[%s953 + $0x38] sm:$0xf]
  %v969 = vld [vmem:[%s953 + $0x3c] sm:$0xf]
  %s970 = scalar_lea.vmem %s1, 256
  %v971 = vld [vmem:[%s970] sm:$0xf]
  %v972 = vld [vmem:[%s970 + $0x4] sm:$0xf]
  %v973 = vld [vmem:[%s970 + $0x8] sm:$0xf]
  %v974 = vld [vmem:[%s970 + $0xc] sm:$0xf]
  %v975 = vld [vmem:[%s970 + $0x10] sm:$0xf]
  %v976 = vld [vmem:[%s970 + $0x14] sm:$0xf]
  %v977 = vld [vmem:[%s970 + $0x18] sm:$0xf]
  %v978 = vld [vmem:[%s970 + $0x1c] sm:$0xf]
  %v979 = vld [vmem:[%s970 + $0x20] sm:$0xf]
  %v980 = vld [vmem:[%s970 + $0x24] sm:$0xf]
  %v981 = vld [vmem:[%s970 + $0x28] sm:$0xf]
  %v982 = vld [vmem:[%s970 + $0x2c] sm:$0xf]
  %v983 = vld [vmem:[%s970 + $0x30] sm:$0xf]
  %v984 = vld [vmem:[%s970 + $0x34] sm:$0xf]
  %v985 = vld [vmem:[%s970 + $0x38] sm:$0xf]
  %v986 = vld [vmem:[%s970 + $0x3c] sm:$0xf]
  %v1003 = vunpack.c.l.b16 %v971
  %v1004 = vunpack.c.l.b16 %v972
  %v1005 = vunpack.c.l.b16 %v973
  %v1006 = vunpack.c.l.b16 %v974
  %v1007 = vunpack.c.l.b16 %v975
  %v1008 = vunpack.c.l.b16 %v976
  %v1009 = vunpack.c.l.b16 %v977
  %v1010 = vunpack.c.l.b16 %v978
  %v1011 = vunpack.c.l.b16 %v979
  %v1012 = vunpack.c.l.b16 %v980
  %v1013 = vunpack.c.l.b16 %v981
  %v1014 = vunpack.c.l.b16 %v982
  %v1015 = vunpack.c.l.b16 %v983
  %v1016 = vunpack.c.l.b16 %v984
  %v1017 = vunpack.c.l.b16 %v985
  %v1018 = vunpack.c.l.b16 %v986
  %v1019 = vpack.c.b16 %v1004, %v1003
  %v1020 = vpack.c.b16 %v1006, %v1005
  %v1021 = vpack.c.b16 %v1008, %v1007
  %v1022 = vpack.c.b16 %v1010, %v1009
  %v1023 = vpack.c.b16 %v1012, %v1011
  %v1024 = vpack.c.b16 %v1014, %v1013
  %v1025 = vpack.c.b16 %v1016, %v1015
  %v1026 = vpack.c.b16 %v1018, %v1017
  %1035 = vmatprep.subr.bf16.mxu0 0
  %1036 = vmatpush1.bf16.msra.mxu0 %v1019
  %1037 = vmatprep.subr.bf16.mxu0 0
  %1038 = vmatpush1.bf16.msra.mxu0 %v1020
  %1039 = vmatprep.subr.bf16.mxu0 0
  %1040 = vmatpush1.bf16.msra.mxu0 %v1021
  %1041 = vmatprep.subr.bf16.mxu0 0
  %1042 = vmatpush1.bf16.msra.mxu0 %v1022
  %1043 = vmatprep.subr.bf16.mxu0 0
  %1044 = vmatpush1.bf16.msra.mxu0 %v1023
  %1045 = vmatprep.subr.bf16.mxu0 0
  %1046 = vmatpush1.bf16.msra.mxu0 %v1024
  %1047 = vmatprep.subr.bf16.mxu0 0
  %1048 = vmatpush1.bf16.msra.mxu0 %v1025
  %1049 = vmatprep.subr.bf16.mxu0 0
  %1050 = vmatpush1.bf16.msra.mxu0 %v1026
  %1051 = vmatprep.subr.bf16.mxu0 0
  %1052 = vmatpush1.bf16.msra.mxu0 0
  %1053 = vmatprep.subr.bf16.mxu0 0
  %1054 = vmatpush1.bf16.msra.mxu0 0
  %1055 = vmatprep.subr.bf16.mxu0 0
  %1056 = vmatpush1.bf16.msra.mxu0 0
  %1057 = vmatprep.subr.bf16.mxu0 0
  %1058 = vmatpush1.bf16.msra.mxu0 0
  %1059 = vmatprep.subr.bf16.mxu0 0
  %1060 = vmatpush1.bf16.msra.mxu0 0
  %1061 = vmatprep.subr.bf16.mxu0 0
  %1062 = vmatpush1.bf16.msra.mxu0 0
  %1063 = vmatprep.subr.bf16.mxu0 0
  %1064 = vmatpush1.bf16.msra.mxu0 0
  %1065 = vmatprep.subr.bf16.mxu0 0
  %1066 = vmatpush1.bf16.msra.mxu0 0
  %1067 = vmatprep.mubr.bf16.mxu0 0
  %1068 = vmatmul.mubr.bf16.gmra.mrb[0].mxu0 %v322
  %v1069 = vpop.f32.mrb[0].mxu0
  %v1070 = vadd.f32 0.0, %v1069
  %v1071 = vpop.f32.mrb[0].mxu0
  %v1072 = vpop.f32.mrb[0].mxu0
  %v1073 = vadd.f32 0.0, %v1072
  %v1074 = vpop.f32.mrb[0].mxu0
  %1075 = vmatprep.mubr.bf16.mxu0 0
  %1076 = vmatmul.mubr.bf16.gmra.mrb[0].mxu0 %v323
  %v1077 = vpop.f32.mrb[0].mxu0
  %v1078 = vadd.f32 0.0, %v1077
  %v1079 = vpop.f32.mrb[0].mxu0
  %v1080 = vpop.f32.mrb[0].mxu0
  %v1081 = vadd.f32 0.0, %v1080
  %v1082 = vpop.f32.mrb[0].mxu0
  %1083 = vmatprep.mubr.bf16.mxu0 0
  %1084 = vmatmul.mubr.bf16.gmra.mrb[0].mxu0 %v324
  %v1085 = vpop.f32.mrb[0].mxu0
  %v1086 = vadd.f32 0.0, %v1085
  %v1087 = vpop.f32.mrb[0].mxu0
  %v1088 = vpop.f32.mrb[0].mxu0
  %v1089 = vadd.f32 0.0, %v1088
  %v1090 = vpop.f32.mrb[0].mxu0
  %1091 = vmatprep.mubr.bf16.mxu0 0
  %1092 = vmatmul.mubr.bf16.gmra.mrb[0].mxu0 %v325
  %v1093 = vpop.f32.mrb[0].mxu0
  %v1094 = vadd.f32 0.0, %v1093
  %v1095 = vpop.f32.mrb[0].mxu0
  %v1096 = vpop.f32.mrb[0].mxu0
  %v1097 = vadd.f32 0.0, %v1096
  %v1098 = vpop.f32.mrb[0].mxu0
  %1099 = vmatprep.mubr.bf16.mxu0 0
  %1100 = vmatmul.mubr.bf16.gmra.mrb[0].mxu0 %v326
  %v1101 = vpop.f32.mrb[0].mxu0
  %v1102 = vadd.f32 0.0, %v1101
  %v1103 = vpop.f32.mrb[0].mxu0
  %v1104 = vpop.f32.mrb[0].mxu0
  %v1105 = vadd.f32 0.0, %v1104
  %v1106 = vpop.f32.mrb[0].mxu0
  %1107 = vmatprep.mubr.bf16.mxu0 0
  %1108 = vmatmul.mubr.bf16.gmra.mrb[0].mxu0 %v327
  %v1109 = vpop.f32.mrb[0].mxu0
  %v1110 = vadd.f32 0.0, %v1109
  %v1111 = vpop.f32.mrb[0].mxu0
  %v1112 = vpop.f32.mrb[0].mxu0
  %v1113 = vadd.f32 0.0, %v1112
  %v1114 = vpop.f32.mrb[0].mxu0
  %1115 = vmatprep.mubr.bf16.mxu0 0
  %1116 = vmatmul.mubr.bf16.gmra.mrb[0].mxu0 %v328
  %v1117 = vpop.f32.mrb[0].mxu0
  %v1118 = vadd.f32 0.0, %v1117
  %v1119 = vpop.f32.mrb[0].mxu0
  %v1120 = vpop.f32.mrb[0].mxu0
  %v1121 = vadd.f32 0.0, %v1120
  %v1122 = vpop.f32.mrb[0].mxu0
  %1123 = vmatprep.mubr.bf16.mxu0 0
  %1124 = vmatmul.mubr.bf16.gmra.mrb[0].mxu0 %v329
  %v1125 = vpop.f32.mrb[0].mxu0
  %v1126 = vadd.f32 0.0, %v1125
  %v1127 = vpop.f32.mrb[0].mxu0
  %v1128 = vpop.f32.mrb[0].mxu0
  %v1129 = vadd.f32 0.0, %v1128
  %v1130 = vpop.f32.mrb[0].mxu0
  %1131 = vdwg.mxu0
  %v1148 = vunpack.c.l.b16 %v954
  %v1149 = vunpack.c.l.b16 %v955
  %v1150 = vunpack.c.l.b16 %v956
  %v1151 = vunpack.c.l.b16 %v957
  %v1152 = vunpack.c.l.b16 %v958
  %v1153 = vunpack.c.l.b16 %v959
  %v1154 = vunpack.c.l.b16 %v960
  %v1155 = vunpack.c.l.b16 %v961
  %v1156 = vunpack.c.l.b16 %v962
  %v1157 = vunpack.c.l.b16 %v963
  %v1158 = vunpack.c.l.b16 %v964
  %v1159 = vunpack.c.l.b16 %v965
  %v1160 = vunpack.c.l.b16 %v966
  %v1161 = vunpack.c.l.b16 %v967
  %v1162 = vunpack.c.l.b16 %v968
  %v1163 = vunpack.c.l.b16 %v969
  %v1164 = vpack.c.b16 %v1149, %v1148
  %v1165 = vpack.c.b16 %v1151, %v1150
  %v1166 = vpack.c.b16 %v1153, %v1152
  %v1167 = vpack.c.b16 %v1155, %v1154
  %v1168 = vpack.c.b16 %v1157, %v1156
  %v1169 = vpack.c.b16 %v1159, %v1158
  %v1170 = vpack.c.b16 %v1161, %v1160
  %v1171 = vpack.c.b16 %v1163, %v1162
  %1180 = vmatprep.subr.bf16.mxu0 0
  %1181 = vmatpush1.bf16.msra.mxu0 %v1164
  %1182 = vmatprep.subr.bf16.mxu0 0
  %1183 = vmatpush1.bf16.msra.mxu0 %v1165
  %1184 = vmatprep.subr.bf16.mxu0 0
  %1185 = vmatpush1.bf16.msra.mxu0 %v1166
  %1186 = vmatprep.subr.bf16.mxu0 0
  %1187 = vmatpush1.bf16.msra.mxu0 %v1167
  %1188 = vmatprep.subr.bf16.mxu0 0
  %1189 = vmatpush1.bf16.msra.mxu0 %v1168
  %1190 = vmatprep.subr.bf16.mxu0 0
  %1191 = vmatpush1.bf16.msra.mxu0 %v1169
  %1192 = vmatprep.subr.bf16.mxu0 0
  %1193 = vmatpush1.bf16.msra.mxu0 %v1170
  %1194 = vmatprep.subr.bf16.mxu0 0
  %1195 = vmatpush1.bf16.msra.mxu0 %v1171
  %1196 = vmatprep.subr.bf16.mxu0 0
  %1197 = vmatpush1.bf16.msra.mxu0 0
  %1198 = vmatprep.subr.bf16.mxu0 0
  %1199 = vmatpush1.bf16.msra.mxu0 0
  %1200 = vmatprep.subr.bf16.mxu0 0
  %1201 = vmatpush1.bf16.msra.mxu0 0
  %1202 = vmatprep.subr.bf16.mxu0 0
  %1203 = vmatpush1.bf16.msra.mxu0 0
  %1204 = vmatprep.subr.bf16.mxu0 0
  %1205 = vmatpush1.bf16.msra.mxu0 0
  %1206 = vmatprep.subr.bf16.mxu0 0
  %1207 = vmatpush1.bf16.msra.mxu0 0
  %1208 = vmatprep.subr.bf16.mxu0 0
  %1209 = vmatpush1.bf16.msra.mxu0 0
  %1210 = vmatprep.subr.bf16.mxu0 0
  %1211 = vmatpush1.bf16.msra.mxu0 0
  %1212 = vmatprep.mubr.bf16.mxu0 0
  %1213 = vmatmul.mubr.bf16.gmra.mrb[0].mxu0 %v298
  %v1214 = vpop.f32.mrb[0].mxu0
  %v1215 = vadd.f32 %v1070, %v1214
  %v1216 = vpop.f32.mrb[0].mxu0
  %v1217 = vpop.f32.mrb[0].mxu0
  %v1218 = vadd.f32 %v1073, %v1217
  %v1219 = vpop.f32.mrb[0].mxu0
  %1220 = vmatprep.mubr.bf16.mxu0 0
  %1221 = vmatmul.mubr.bf16.gmra.mrb[0].mxu0 %v299
  %v1222 = vpop.f32.mrb[0].mxu0
  %v1223 = vadd.f32 %v1078, %v1222
  %v1224 = vpop.f32.mrb[0].mxu0
  %v1225 = vpop.f32.mrb[0].mxu0
  %v1226 = vadd.f32 %v1081, %v1225
  %v1227 = vpop.f32.mrb[0].mxu0
  %1228 = vmatprep.mubr.bf16.mxu0 0
  %1229 = vmatmul.mubr.bf16.gmra.mrb[0].mxu0 %v300
  %v1230 = vpop.f32.mrb[0].mxu0
  %v1231 = vadd.f32 %v1086, %v1230
  %v1232 = vpop.f32.mrb[0].mxu0
  %v1233 = vpop.f32.mrb[0].mxu0
  %v1234 = vadd.f32 %v1089, %v1233
  %v1235 = vpop.f32.mrb[0].mxu0
  %1236 = vmatprep.mubr.bf16.mxu0 0
  %1237 = vmatmul.mubr.bf16.gmra.mrb[0].mxu0 %v301
  %v1238 = vpop.f32.mrb[0].mxu0
  %v1239 = vadd.f32 %v1094, %v1238
  %v1240 = vpop.f32.mrb[0].mxu0
  %v1241 = vpop.f32.mrb[0].mxu0
  %v1242 = vadd.f32 %v1097, %v1241
  %v1243 = vpop.f32.mrb[0].mxu0
  %1244 = vmatprep.mubr.bf16.mxu0 0
  %1245 = vmatmul.mubr.bf16.gmra.mrb[0].mxu0 %v302
  %v1246 = vpop.f32.mrb[0].mxu0
  %v1247 = vadd.f32 %v1102, %v1246
  %v1248 = vpop.f32.mrb[0].mxu0
  %v1249 = vpop.f32.mrb[0].mxu0
  %v1250 = vadd.f32 %v1105, %v1249
  %v1251 = vpop.f32.mrb[0].mxu0
  %1252 = vmatprep.mubr.bf16.mxu0 0
  %1253 = vmatmul.mubr.bf16.gmra.mrb[0].mxu0 %v303
  %v1254 = vpop.f32.mrb[0].mxu0
  %v1255 = vadd.f32 %v1110, %v1254
  %v1256 = vpop.f32.mrb[0].mxu0
  %v1257 = vpop.f32.mrb[0].mxu0
  %v1258 = vadd.f32 %v1113, %v1257
  %v1259 = vpop.f32.mrb[0].mxu0
  %1260 = vmatprep.mubr.bf16.mxu0 0
  %1261 = vmatmul.mubr.bf16.gmra.mrb[0].mxu0 %v304
  %v1262 = vpop.f32.mrb[0].mxu0
  %v1263 = vadd.f32 %v1118, %v1262
  %v1264 = vpop.f32.mrb[0].mxu0
  %v1265 = vpop.f32.mrb[0].mxu0
  %v1266 = vadd.f32 %v1121, %v1265
  %v1267 = vpop.f32.mrb[0].mxu0
  %1268 = vmatprep.mubr.bf16.mxu0 0
  %1269 = vmatmul.mubr.bf16.gmra.mrb[0].mxu0 %v305
  %v1270 = vpop.f32.mrb[0].mxu0
  %v1271 = vadd.f32 %v1126, %v1270
  %v1272 = vpop.f32.mrb[0].mxu0
  %v1273 = vpop.f32.mrb[0].mxu0
  %v1274 = vadd.f32 %v1129, %v1273
  %v1275 = vpop.f32.mrb[0].mxu0
  %1276 = vdwg.mxu0
  %s1277 = scalar_lea.vmem %s1, 448
  %v1278 = vld [vmem:[%s1277] sm:$0xf]
  %v1279 = vld [vmem:[%s1277 + $0x4] sm:$0xf]
  %v1280 = vld [vmem:[%s1277 + $0x8] sm:$0xf]
  %v1281 = vld [vmem:[%s1277 + $0xc] sm:$0xf]
  %v1282 = vld [vmem:[%s1277 + $0x10] sm:$0xf]
  %v1283 = vld [vmem:[%s1277 + $0x14] sm:$0xf]
  %v1284 = vld [vmem:[%s1277 + $0x18] sm:$0xf]
  %v1285 = vld [vmem:[%s1277 + $0x1c] sm:$0xf]
  %v1286 = vld [vmem:[%s1277 + $0x20] sm:$0xf]
  %v1287 = vld [vmem:[%s1277 + $0x24] sm:$0xf]
  %v1288 = vld [vmem:[%s1277 + $0x28] sm:$0xf]
  %v1289 = vld [vmem:[%s1277 + $0x2c] sm:$0xf]
  %v1290 = vld [vmem:[%s1277 + $0x30] sm:$0xf]
  %v1291 = vld [vmem:[%s1277 + $0x34] sm:$0xf]
  %v1292 = vld [vmem:[%s1277 + $0x38] sm:$0xf]
  %v1293 = vld [vmem:[%s1277 + $0x3c] sm:$0xf]
  %v1310 = vunpack.c.l.b16 %v1278
  %v1311 = vunpack.c.l.b16 %v1279
  %v1312 = vunpack.c.l.b16 %v1280
  %v1313 = vunpack.c.l.b16 %v1281
  %v1314 = vunpack.c.l.b16 %v1282
  %v1315 = vunpack.c.l.b16 %v1283
  %v1316 = vunpack.c.l.b16 %v1284
  %v1317 = vunpack.c.l.b16 %v1285
  %v1318 = vunpack.c.l.b16 %v1286
  %v1319 = vunpack.c.l.b16 %v1287
  %v1320 = vunpack.c.l.b16 %v1288
  %v1321 = vunpack.c.l.b16 %v1289
  %v1322 = vunpack.c.l.b16 %v1290
  %v1323 = vunpack.c.l.b16 %v1291
  %v1324 = vunpack.c.l.b16 %v1292
  %v1325 = vunpack.c.l.b16 %v1293
  %v1326 = vpack.c.b16 %v1311, %v1310
  %v1327 = vpack.c.b16 %v1313, %v1312
  %v1328 = vpack.c.b16 %v1315, %v1314
  %v1329 = vpack.c.b16 %v1317, %v1316
  %v1330 = vpack.c.b16 %v1319, %v1318
  %v1331 = vpack.c.b16 %v1321, %v1320
  %v1332 = vpack.c.b16 %v1323, %v1322
  %v1333 = vpack.c.b16 %v1325, %v1324
  %1342 = vmatprep.subr.bf16.mxu0 0
  %1343 = vmatpush1.bf16.msra.mxu0 %v1326
  %1344 = vmatprep.subr.bf16.mxu0 0
  %1345 = vmatpush1.bf16.msra.mxu0 %v1327
  %1346 = vmatprep.subr.bf16.mxu0 0
  %1347 = vmatpush1.bf16.msra.mxu0 %v1328
  %1348 = vmatprep.subr.bf16.mxu0 0
  %1349 = vmatpush1.bf16.msra.mxu0 %v1329
  %1350 = vmatprep.subr.bf16.mxu0 0
  %1351 = vmatpush1.bf16.msra.mxu0 %v1330
  %1352 = vmatprep.subr.bf16.mxu0 0
  %1353 = vmatpush1.bf16.msra.mxu0 %v1331
  %1354 = vmatprep.subr.bf16.mxu0 0
  %1355 = vmatpush1.bf16.msra.mxu0 %v1332
  %1356 = vmatprep.subr.bf16.mxu0 0
  %1357 = vmatpush1.bf16.msra.mxu0 %v1333
  %1358 = vmatprep.subr.bf16.mxu0 0
  %1359 = vmatpush1.bf16.msra.mxu0 0
  %1360 = vmatprep.subr.bf16.mxu0 0
  %1361 = vmatpush1.bf16.msra.mxu0 0
  %1362 = vmatprep.subr.bf16.mxu0 0
  %1363 = vmatpush1.bf16.msra.mxu0 0
  %1364 = vmatprep.subr.bf16.mxu0 0
  %1365 = vmatpush1.bf16.msra.mxu0 0
  %1366 = vmatprep.subr.bf16.mxu0 0
  %1367 = vmatpush1.bf16.msra.mxu0 0
  %1368 = vmatprep.subr.bf16.mxu0 0
  %1369 = vmatpush1.bf16.msra.mxu0 0
  %1370 = vmatprep.subr.bf16.mxu0 0
  %1371 = vmatpush1.bf16.msra.mxu0 0
  %1372 = vmatprep.subr.bf16.mxu0 0
  %1373 = vmatpush1.bf16.msra.mxu0 0
  %1374 = vmatprep.mubr.bf16.mxu0 0
  %1375 = vmatmul.mubr.bf16.gmra.mrb[0].mxu0 %v638
  %v1376 = vpop.f32.mrb[0].mxu0
  %v1377 = vadd.f32 0.0, %v1376
  %v1378 = vpop.f32.mrb[0].mxu0
  %v1379 = vpop.f32.mrb[0].mxu0
  %v1380 = vadd.f32 0.0, %v1379
  %v1381 = vpop.f32.mrb[0].mxu0
  %1382 = vmatprep.mubr.bf16.mxu0 0
  %1383 = vmatmul.mubr.bf16.gmra.mrb[0].mxu0 %v639
  %v1384 = vpop.f32.mrb[0].mxu0
  %v1385 = vadd.f32 0.0, %v1384
  %v1386 = vpop.f32.mrb[0].mxu0
  %v1387 = vpop.f32.mrb[0].mxu0
  %v1388 = vadd.f32 0.0, %v1387
  %v1389 = vpop.f32.mrb[0].mxu0
  %1390 = vmatprep.mubr.bf16.mxu0 0
  %1391 = vmatmul.mubr.bf16.gmra.mrb[0].mxu0 %v640
  %v1392 = vpop.f32.mrb[0].mxu0
  %v1393 = vadd.f32 0.0, %v1392
  %v1394 = vpop.f32.mrb[0].mxu0
  %v1395 = vpop.f32.mrb[0].mxu0
  %v1396 = vadd.f32 0.0, %v1395
  %v1397 = vpop.f32.mrb[0].mxu0
  %1398 = vmatprep.mubr.bf16.mxu0 0
  %1399 = vmatmul.mubr.bf16.gmra.mrb[0].mxu0 %v641
  %v1400 = vpop.f32.mrb[0].mxu0
  %v1401 = vadd.f32 0.0, %v1400
  %v1402 = vpop.f32.mrb[0].mxu0
  %v1403 = vpop.f32.mrb[0].mxu0
  %v1404 = vadd.f32 0.0, %v1403
  %v1405 = vpop.f32.mrb[0].mxu0
  %1406 = vmatprep.mubr.bf16.mxu0 0
  %1407 = vmatmul.mubr.bf16.gmra.mrb[0].mxu0 %v642
  %v1408 = vpop.f32.mrb[0].mxu0
  %v1409 = vadd.f32 0.0, %v1408
  %v1410 = vpop.f32.mrb[0].mxu0
  %v1411 = vpop.f32.mrb[0].mxu0
  %v1412 = vadd.f32 0.0, %v1411
  %v1413 = vpop.f32.mrb[0].mxu0
  %1414 = vmatprep.mubr.bf16.mxu0 0
  %1415 = vmatmul.mubr.bf16.gmra.mrb[0].mxu0 %v643
  %v1416 = vpop.f32.mrb[0].mxu0
  %v1417 = vadd.f32 0.0, %v1416
  %v1418 = vpop.f32.mrb[0].mxu0
  %v1419 = vpop.f32.mrb[0].mxu0
  %v1420 = vadd.f32 0.0, %v1419
  %v1421 = vpop.f32.mrb[0].mxu0
  %1422 = vmatprep.mubr.bf16.mxu0 0
  %1423 = vmatmul.mubr.bf16.gmra.mrb[0].mxu0 %v644
  %v1424 = vpop.f32.mrb[0].mxu0
  %v1425 = vadd.f32 0.0, %v1424
  %v1426 = vpop.f32.mrb[0].mxu0
  %v1427 = vpop.f32.mrb[0].mxu0
  %v1428 = vadd.f32 0.0, %v1427
  %v1429 = vpop.f32.mrb[0].mxu0
  %1430 = vmatprep.mubr.bf16.mxu0 0
  %1431 = vmatmul.mubr.bf16.gmra.mrb[0].mxu0 %v645
  %v1432 = vpop.f32.mrb[0].mxu0
  %v1433 = vadd.f32 0.0, %v1432
  %v1434 = vpop.f32.mrb[0].mxu0
  %v1435 = vpop.f32.mrb[0].mxu0
  %v1436 = vadd.f32 0.0, %v1435
  %v1437 = vpop.f32.mrb[0].mxu0
  %1438 = vdwg.mxu0
  %v1439 = vadd.f32 %v1215, %v1377
  %v1440 = vadd.f32 %v1218, %v1380
  %v1441 = vadd.f32 %v1223, %v1385
  %v1442 = vadd.f32 %v1226, %v1388
  %v1443 = vadd.f32 %v1231, %v1393
  %v1444 = vadd.f32 %v1234, %v1396
  %v1445 = vadd.f32 %v1239, %v1401
  %v1446 = vadd.f32 %v1242, %v1404
  %v1447 = vadd.f32 %v1247, %v1409
  %v1448 = vadd.f32 %v1250, %v1412
  %v1449 = vadd.f32 %v1255, %v1417
  %v1450 = vadd.f32 %v1258, %v1420
  %v1451 = vadd.f32 %v1263, %v1425
  %v1452 = vadd.f32 %v1266, %v1428
  %v1453 = vadd.f32 %v1271, %v1433
  %v1454 = vadd.f32 %v1274, %v1436
  %v1455 = vadd.f32 %v937, %v1439
  %v1456 = vadd.f32 %v938, %v1440
  %v1457 = vadd.f32 %v939, %v1441
  %v1458 = vadd.f32 %v940, %v1442
  %v1459 = vadd.f32 %v941, %v1443
  %v1460 = vadd.f32 %v942, %v1444
  %v1461 = vadd.f32 %v943, %v1445
  %v1462 = vadd.f32 %v944, %v1446
  %v1463 = vadd.f32 %v945, %v1447
  %v1464 = vadd.f32 %v946, %v1448
  %v1465 = vadd.f32 %v947, %v1449
  %v1466 = vadd.f32 %v948, %v1450
  %v1467 = vadd.f32 %v949, %v1451
  %v1468 = vadd.f32 %v950, %v1452
  %v1469 = vadd.f32 %v951, %v1453
  %v1470 = vadd.f32 %v952, %v1454
  %s1471 = scalar_lea.vmem %s1, 128
  %v1472 = vld [vmem:[%s1471] sm:$0xf]
  %v1473 = vld [vmem:[%s1471 + $0x4] sm:$0xf]
  %v1474 = vld [vmem:[%s1471 + $0x8] sm:$0xf]
  %v1475 = vld [vmem:[%s1471 + $0xc] sm:$0xf]
  %v1476 = vld [vmem:[%s1471 + $0x10] sm:$0xf]
  %v1477 = vld [vmem:[%s1471 + $0x14] sm:$0xf]
  %v1478 = vld [vmem:[%s1471 + $0x18] sm:$0xf]
  %v1479 = vld [vmem:[%s1471 + $0x1c] sm:$0xf]
  %v1480 = vld [vmem:[%s1471 + $0x20] sm:$0xf]
  %v1481 = vld [vmem:[%s1471 + $0x24] sm:$0xf]
  %v1482 = vld [vmem:[%s1471 + $0x28] sm:$0xf]
  %v1483 = vld [vmem:[%s1471 + $0x2c] sm:$0xf]
  %v1484 = vld [vmem:[%s1471 + $0x30] sm:$0xf]
  %v1485 = vld [vmem:[%s1471 + $0x34] sm:$0xf]
  %v1486 = vld [vmem:[%s1471 + $0x38] sm:$0xf]
  %v1487 = vld [vmem:[%s1471 + $0x3c] sm:$0xf]
  %s1488 = scalar_lea.vmem %s1, 320
  %v1489 = vld [vmem:[%s1488] sm:$0xf]
  %v1490 = vld [vmem:[%s1488 + $0x4] sm:$0xf]
  %v1491 = vld [vmem:[%s1488 + $0x8] sm:$0xf]
  %v1492 = vld [vmem:[%s1488 + $0xc] sm:$0xf]
  %v1493 = vld [vmem:[%s1488 + $0x10] sm:$0xf]
  %v1494 = vld [vmem:[%s1488 + $0x14] sm:$0xf]
  %v1495 = vld [vmem:[%s1488 + $0x18] sm:$0xf]
  %v1496 = vld [vmem:[%s1488 + $0x1c] sm:$0xf]
  %v1497 = vld [vmem:[%s1488 + $0x20] sm:$0xf]
  %v1498 = vld [vmem:[%s1488 + $0x24] sm:$0xf]
  %v1499 = vld [vmem:[%s1488 + $0x28] sm:$0xf]
  %v1500 = vld [vmem:[%s1488 + $0x2c] sm:$0xf]
  %v1501 = vld [vmem:[%s1488 + $0x30] sm:$0xf]
  %v1502 = vld [vmem:[%s1488 + $0x34] sm:$0xf]
  %v1503 = vld [vmem:[%s1488 + $0x38] sm:$0xf]
  %v1504 = vld [vmem:[%s1488 + $0x3c] sm:$0xf]
  %v1521 = vunpack.c.l.b16 %v1489
  %v1522 = vunpack.c.l.b16 %v1490
  %v1523 = vunpack.c.l.b16 %v1491
  %v1524 = vunpack.c.l.b16 %v1492
  %v1525 = vunpack.c.l.b16 %v1493
  %v1526 = vunpack.c.l.b16 %v1494
  %v1527 = vunpack.c.l.b16 %v1495
  %v1528 = vunpack.c.l.b16 %v1496
  %v1529 = vunpack.c.l.b16 %v1497
  %v1530 = vunpack.c.l.b16 %v1498
  %v1531 = vunpack.c.l.b16 %v1499
  %v1532 = vunpack.c.l.b16 %v1500
  %v1533 = vunpack.c.l.b16 %v1501
  %v1534 = vunpack.c.l.b16 %v1502
  %v1535 = vunpack.c.l.b16 %v1503
  %v1536 = vunpack.c.l.b16 %v1504
  %v1537 = vpack.c.b16 %v1522, %v1521
  %v1538 = vpack.c.b16 %v1524, %v1523
  %v1539 = vpack.c.b16 %v1526, %v1525
  %v1540 = vpack.c.b16 %v1528, %v1527
  %v1541 = vpack.c.b16 %v1530, %v1529
  %v1542 = vpack.c.b16 %v1532, %v1531
  %v1543 = vpack.c.b16 %v1534, %v1533
  %v1544 = vpack.c.b16 %v1536, %v1535
  %1553 = vmatprep.subr.bf16.mxu0 0
  %1554 = vmatpush1.bf16.msra.mxu0 %v1537
  %1555 = vmatprep.subr.bf16.mxu0 0
  %1556 = vmatpush1.bf16.msra.mxu0 %v1538
  %1557 = vmatprep.subr.bf16.mxu0 0
  %1558 = vmatpush1.bf16.msra.mxu0 %v1539
  %1559 = vmatprep.subr.bf16.mxu0 0
  %1560 = vmatpush1.bf16.msra.mxu0 %v1540
  %1561 = vmatprep.subr.bf16.mxu0 0
  %1562 = vmatpush1.bf16.msra.mxu0 %v1541
  %1563 = vmatprep.subr.bf16.mxu0 0
  %1564 = vmatpush1.bf16.msra.mxu0 %v1542
  %1565 = vmatprep.subr.bf16.mxu0 0
  %1566 = vmatpush1.bf16.msra.mxu0 %v1543
  %1567 = vmatprep.subr.bf16.mxu0 0
  %1568 = vmatpush1.bf16.msra.mxu0 %v1544
  %1569 = vmatprep.subr.bf16.mxu0 0
  %1570 = vmatpush1.bf16.msra.mxu0 0
  %1571 = vmatprep.subr.bf16.mxu0 0
  %1572 = vmatpush1.bf16.msra.mxu0 0
  %1573 = vmatprep.subr.bf16.mxu0 0
  %1574 = vmatpush1.bf16.msra.mxu0 0
  %1575 = vmatprep.subr.bf16.mxu0 0
  %1576 = vmatpush1.bf16.msra.mxu0 0
  %1577 = vmatprep.subr.bf16.mxu0 0
  %1578 = vmatpush1.bf16.msra.mxu0 0
  %1579 = vmatprep.subr.bf16.mxu0 0
  %1580 = vmatpush1.bf16.msra.mxu0 0
  %1581 = vmatprep.subr.bf16.mxu0 0
  %1582 = vmatpush1.bf16.msra.mxu0 0
  %1583 = vmatprep.subr.bf16.mxu0 0
  %1584 = vmatpush1.bf16.msra.mxu0 0
  %1585 = vmatprep.mubr.bf16.mxu0 0
  %1586 = vmatmul.mubr.bf16.gmra.mrb[0].mxu0 %v322
  %v1587 = vpop.f32.mrb[0].mxu0
  %v1588 = vadd.f32 0.0, %v1587
  %v1589 = vpop.f32.mrb[0].mxu0
  %v1590 = vpop.f32.mrb[0].mxu0
  %v1591 = vadd.f32 0.0, %v1590
  %v1592 = vpop.f32.mrb[0].mxu0
  %1593 = vmatprep.mubr.bf16.mxu0 0
  %1594 = vmatmul.mubr.bf16.gmra.mrb[0].mxu0 %v323
  %v1595 = vpop.f32.mrb[0].mxu0
  %v1596 = vadd.f32 0.0, %v1595
  %v1597 = vpop.f32.mrb[0].mxu0
  %v1598 = vpop.f32.mrb[0].mxu0
  %v1599 = vadd.f32 0.0, %v1598
  %v1600 = vpop.f32.mrb[0].mxu0
  %1601 = vmatprep.mubr.bf16.mxu0 0
  %1602 = vmatmul.mubr.bf16.gmra.mrb[0].mxu0 %v324
  %v1603 = vpop.f32.mrb[0].mxu0
  %v1604 = vadd.f32 0.0, %v1603
  %v1605 = vpop.f32.mrb[0].mxu0
  %v1606 = vpop.f32.mrb[0].mxu0
  %v1607 = vadd.f32 0.0, %v1606
  %v1608 = vpop.f32.mrb[0].mxu0
  %1609 = vmatprep.mubr.bf16.mxu0 0
  %1610 = vmatmul.mubr.bf16.gmra.mrb[0].mxu0 %v325
  %v1611 = vpop.f32.mrb[0].mxu0
  %v1612 = vadd.f32 0.0, %v1611
  %v1613 = vpop.f32.mrb[0].mxu0
  %v1614 = vpop.f32.mrb[0].mxu0
  %v1615 = vadd.f32 0.0, %v1614
  %v1616 = vpop.f32.mrb[0].mxu0
  %1617 = vmatprep.mubr.bf16.mxu0 0
  %1618 = vmatmul.mubr.bf16.gmra.mrb[0].mxu0 %v326
  %v1619 = vpop.f32.mrb[0].mxu0
  %v1620 = vadd.f32 0.0, %v1619
  %v1621 = vpop.f32.mrb[0].mxu0
  %v1622 = vpop.f32.mrb[0].mxu0
  %v1623 = vadd.f32 0.0, %v1622
  %v1624 = vpop.f32.mrb[0].mxu0
  %1625 = vmatprep.mubr.bf16.mxu0 0
  %1626 = vmatmul.mubr.bf16.gmra.mrb[0].mxu0 %v327
  %v1627 = vpop.f32.mrb[0].mxu0
  %v1628 = vadd.f32 0.0, %v1627
  %v1629 = vpop.f32.mrb[0].mxu0
  %v1630 = vpop.f32.mrb[0].mxu0
  %v1631 = vadd.f32 0.0, %v1630
  %v1632 = vpop.f32.mrb[0].mxu0
  %1633 = vmatprep.mubr.bf16.mxu0 0
  %1634 = vmatmul.mubr.bf16.gmra.mrb[0].mxu0 %v328
  %v1635 = vpop.f32.mrb[0].mxu0
  %v1636 = vadd.f32 0.0, %v1635
  %v1637 = vpop.f32.mrb[0].mxu0
  %v1638 = vpop.f32.mrb[0].mxu0
  %v1639 = vadd.f32 0.0, %v1638
  %v1640 = vpop.f32.mrb[0].mxu0
  %1641 = vmatprep.mubr.bf16.mxu0 0
  %1642 = vmatmul.mubr.bf16.gmra.mrb[0].mxu0 %v329
  %v1643 = vpop.f32.mrb[0].mxu0
  %v1644 = vadd.f32 0.0, %v1643
  %v1645 = vpop.f32.mrb[0].mxu0
  %v1646 = vpop.f32.mrb[0].mxu0
  %v1647 = vadd.f32 0.0, %v1646
  %v1648 = vpop.f32.mrb[0].mxu0
  %1649 = vdwg.mxu0
  %v1666 = vunpack.c.l.b16 %v1472
  %v1667 = vunpack.c.l.b16 %v1473
  %v1668 = vunpack.c.l.b16 %v1474
  %v1669 = vunpack.c.l.b16 %v1475
  %v1670 = vunpack.c.l.b16 %v1476
  %v1671 = vunpack.c.l.b16 %v1477
  %v1672 = vunpack.c.l.b16 %v1478
  %v1673 = vunpack.c.l.b16 %v1479
  %v1674 = vunpack.c.l.b16 %v1480
  %v1675 = vunpack.c.l.b16 %v1481
  %v1676 = vunpack.c.l.b16 %v1482
  %v1677 = vunpack.c.l.b16 %v1483
  %v1678 = vunpack.c.l.b16 %v1484
  %v1679 = vunpack.c.l.b16 %v1485
  %v1680 = vunpack.c.l.b16 %v1486
  %v1681 = vunpack.c.l.b16 %v1487
  %v1682 = vpack.c.b16 %v1667, %v1666
  %v1683 = vpack.c.b16 %v1669, %v1668
  %v1684 = vpack.c.b16 %v1671, %v1670
  %v1685 = vpack.c.b16 %v1673, %v1672
  %v1686 = vpack.c.b16 %v1675, %v1674
  %v1687 = vpack.c.b16 %v1677, %v1676
  %v1688 = vpack.c.b16 %v1679, %v1678
  %v1689 = vpack.c.b16 %v1681, %v1680
  %1698 = vmatprep.subr.bf16.mxu0 0
  %1699 = vmatpush1.bf16.msra.mxu0 %v1682
  %1700 = vmatprep.subr.bf16.mxu0 0
  %1701 = vmatpush1.bf16.msra.mxu0 %v1683
  %1702 = vmatprep.subr.bf16.mxu0 0
  %1703 = vmatpush1.bf16.msra.mxu0 %v1684
  %1704 = vmatprep.subr.bf16.mxu0 0
  %1705 = vmatpush1.bf16.msra.mxu0 %v1685
  %1706 = vmatprep.subr.bf16.mxu0 0
  %1707 = vmatpush1.bf16.msra.mxu0 %v1686
  %1708 = vmatprep.subr.bf16.mxu0 0
  %1709 = vmatpush1.bf16.msra.mxu0 %v1687
  %1710 = vmatprep.subr.bf16.mxu0 0
  %1711 = vmatpush1.bf16.msra.mxu0 %v1688
  %1712 = vmatprep.subr.bf16.mxu0 0
  %1713 = vmatpush1.bf16.msra.mxu0 %v1689
  %1714 = vmatprep.subr.bf16.mxu0 0
  %1715 = vmatpush1.bf16.msra.mxu0 0
  %1716 = vmatprep.subr.bf16.mxu0 0
  %1717 = vmatpush1.bf16.msra.mxu0 0
  %1718 = vmatprep.subr.bf16.mxu0 0
  %1719 = vmatpush1.bf16.msra.mxu0 0
  %1720 = vmatprep.subr.bf16.mxu0 0
  %1721 = vmatpush1.bf16.msra.mxu0 0
  %1722 = vmatprep.subr.bf16.mxu0 0
  %1723 = vmatpush1.bf16.msra.mxu0 0
  %1724 = vmatprep.subr.bf16.mxu0 0
  %1725 = vmatpush1.bf16.msra.mxu0 0
  %1726 = vmatprep.subr.bf16.mxu0 0
  %1727 = vmatpush1.bf16.msra.mxu0 0
  %1728 = vmatprep.subr.bf16.mxu0 0
  %1729 = vmatpush1.bf16.msra.mxu0 0
  %1730 = vmatprep.mubr.bf16.mxu0 0
  %1731 = vmatmul.mubr.bf16.gmra.mrb[0].mxu0 %v298
  %v1732 = vpop.f32.mrb[0].mxu0
  %v1733 = vadd.f32 %v1588, %v1732
  %v1734 = vpop.f32.mrb[0].mxu0
  %v1735 = vpop.f32.mrb[0].mxu0
  %v1736 = vadd.f32 %v1591, %v1735
  %v1737 = vpop.f32.mrb[0].mxu0
  %1738 = vmatprep.mubr.bf16.mxu0 0
  %1739 = vmatmul.mubr.bf16.gmra.mrb[0].mxu0 %v299
  %v1740 = vpop.f32.mrb[0].mxu0
  %v1741 = vadd.f32 %v1596, %v1740
  %v1742 = vpop.f32.mrb[0].mxu0
  %v1743 = vpop.f32.mrb[0].mxu0
  %v1744 = vadd.f32 %v1599, %v1743
  %v1745 = vpop.f32.mrb[0].mxu0
  %1746 = vmatprep.mubr.bf16.mxu0 0
  %1747 = vmatmul.mubr.bf16.gmra.mrb[0].mxu0 %v300
  %v1748 = vpop.f32.mrb[0].mxu0
  %v1749 = vadd.f32 %v1604, %v1748
  %v1750 = vpop.f32.mrb[0].mxu0
  %v1751 = vpop.f32.mrb[0].mxu0
  %v1752 = vadd.f32 %v1607, %v1751
  %v1753 = vpop.f32.mrb[0].mxu0
  %1754 = vmatprep.mubr.bf16.mxu0 0
  %1755 = vmatmul.mubr.bf16.gmra.mrb[0].mxu0 %v301
  %v1756 = vpop.f32.mrb[0].mxu0
  %v1757 = vadd.f32 %v1612, %v1756
  %v1758 = vpop.f32.mrb[0].mxu0
  %v1759 = vpop.f32.mrb[0].mxu0
  %v1760 = vadd.f32 %v1615, %v1759
  %v1761 = vpop.f32.mrb[0].mxu0
  %1762 = vmatprep.mubr.bf16.mxu0 0
  %1763 = vmatmul.mubr.bf16.gmra.mrb[0].mxu0 %v302
  %v1764 = vpop.f32.mrb[0].mxu0
  %v1765 = vadd.f32 %v1620, %v1764
  %v1766 = vpop.f32.mrb[0].mxu0
  %v1767 = vpop.f32.mrb[0].mxu0
  %v1768 = vadd.f32 %v1623, %v1767
  %v1769 = vpop.f32.mrb[0].mxu0
  %1770 = vmatprep.mubr.bf16.mxu0 0
  %1771 = vmatmul.mubr.bf16.gmra.mrb[0].mxu0 %v303
  %v1772 = vpop.f32.mrb[0].mxu0
  %v1773 = vadd.f32 %v1628, %v1772
  %v1774 = vpop.f32.mrb[0].mxu0
  %v1775 = vpop.f32.mrb[0].mxu0
  %v1776 = vadd.f32 %v1631, %v1775
  %v1777 = vpop.f32.mrb[0].mxu0
  %1778 = vmatprep.mubr.bf16.mxu0 0
  %1779 = vmatmul.mubr.bf16.gmra.mrb[0].mxu0 %v304
  %v1780 = vpop.f32.mrb[0].mxu0
  %v1781 = vadd.f32 %v1636, %v1780
  %v1782 = vpop.f32.mrb[0].mxu0
  %v1783 = vpop.f32.mrb[0].mxu0
  %v1784 = vadd.f32 %v1639, %v1783
  %v1785 = vpop.f32.mrb[0].mxu0
  %1786 = vmatprep.mubr.bf16.mxu0 0
  %1787 = vmatmul.mubr.bf16.gmra.mrb[0].mxu0 %v305
  %v1788 = vpop.f32.mrb[0].mxu0
  %v1789 = vadd.f32 %v1644, %v1788
  %v1790 = vpop.f32.mrb[0].mxu0
  %v1791 = vpop.f32.mrb[0].mxu0
  %v1792 = vadd.f32 %v1647, %v1791
  %v1793 = vpop.f32.mrb[0].mxu0
  %1794 = vdwg.mxu0
  %s1795 = scalar_lea.vmem %s1, 512
  %v1796 = vld [vmem:[%s1795] sm:$0xf]
  %v1797 = vld [vmem:[%s1795 + $0x4] sm:$0xf]
  %v1798 = vld [vmem:[%s1795 + $0x8] sm:$0xf]
  %v1799 = vld [vmem:[%s1795 + $0xc] sm:$0xf]
  %v1800 = vld [vmem:[%s1795 + $0x10] sm:$0xf]
  %v1801 = vld [vmem:[%s1795 + $0x14] sm:$0xf]
  %v1802 = vld [vmem:[%s1795 + $0x18] sm:$0xf]
  %v1803 = vld [vmem:[%s1795 + $0x1c] sm:$0xf]
  %v1804 = vld [vmem:[%s1795 + $0x20] sm:$0xf]
  %v1805 = vld [vmem:[%s1795 + $0x24] sm:$0xf]
  %v1806 = vld [vmem:[%s1795 + $0x28] sm:$0xf]
  %v1807 = vld [vmem:[%s1795 + $0x2c] sm:$0xf]
  %v1808 = vld [vmem:[%s1795 + $0x30] sm:$0xf]
  %v1809 = vld [vmem:[%s1795 + $0x34] sm:$0xf]
  %v1810 = vld [vmem:[%s1795 + $0x38] sm:$0xf]
  %v1811 = vld [vmem:[%s1795 + $0x3c] sm:$0xf]
  %v1828 = vunpack.c.l.b16 %v1796
  %v1829 = vunpack.c.l.b16 %v1797
  %v1830 = vunpack.c.l.b16 %v1798
  %v1831 = vunpack.c.l.b16 %v1799
  %v1832 = vunpack.c.l.b16 %v1800
  %v1833 = vunpack.c.l.b16 %v1801
  %v1834 = vunpack.c.l.b16 %v1802
  %v1835 = vunpack.c.l.b16 %v1803
  %v1836 = vunpack.c.l.b16 %v1804
  %v1837 = vunpack.c.l.b16 %v1805
  %v1838 = vunpack.c.l.b16 %v1806
  %v1839 = vunpack.c.l.b16 %v1807
  %v1840 = vunpack.c.l.b16 %v1808
  %v1841 = vunpack.c.l.b16 %v1809
  %v1842 = vunpack.c.l.b16 %v1810
  %v1843 = vunpack.c.l.b16 %v1811
  %v1844 = vpack.c.b16 %v1829, %v1828
  %v1845 = vpack.c.b16 %v1831, %v1830
  %v1846 = vpack.c.b16 %v1833, %v1832
  %v1847 = vpack.c.b16 %v1835, %v1834
  %v1848 = vpack.c.b16 %v1837, %v1836
  %v1849 = vpack.c.b16 %v1839, %v1838
  %v1850 = vpack.c.b16 %v1841, %v1840
  %v1851 = vpack.c.b16 %v1843, %v1842
  %1860 = vmatprep.subr.bf16.mxu0 0
  %1861 = vmatpush1.bf16.msra.mxu0 %v1844
  %1862 = vmatprep.subr.bf16.mxu0 0
  %1863 = vmatpush1.bf16.msra.mxu0 %v1845
  %1864 = vmatprep.subr.bf16.mxu0 0
  %1865 = vmatpush1.bf16.msra.mxu0 %v1846
  %1866 = vmatprep.subr.bf16.mxu0 0
  %1867 = vmatpush1.bf16.msra.mxu0 %v1847
  %1868 = vmatprep.subr.bf16.mxu0 0
  %1869 = vmatpush1.bf16.msra.mxu0 %v1848
  %1870 = vmatprep.subr.bf16.mxu0 0
  %1871 = vmatpush1.bf16.msra.mxu0 %v1849
  %1872 = vmatprep.subr.bf16.mxu0 0
  %1873 = vmatpush1.bf16.msra.mxu0 %v1850
  %1874 = vmatprep.subr.bf16.mxu0 0
  %1875 = vmatpush1.bf16.msra.mxu0 %v1851
  %1876 = vmatprep.subr.bf16.mxu0 0
  %1877 = vmatpush1.bf16.msra.mxu0 0
  %1878 = vmatprep.subr.bf16.mxu0 0
  %1879 = vmatpush1.bf16.msra.mxu0 0
  %1880 = vmatprep.subr.bf16.mxu0 0
  %1881 = vmatpush1.bf16.msra.mxu0 0
  %1882 = vmatprep.subr.bf16.mxu0 0
  %1883 = vmatpush1.bf16.msra.mxu0 0
  %1884 = vmatprep.subr.bf16.mxu0 0
  %1885 = vmatpush1.bf16.msra.mxu0 0
  %1886 = vmatprep.subr.bf16.mxu0 0
  %1887 = vmatpush1.bf16.msra.mxu0 0
  %1888 = vmatprep.subr.bf16.mxu0 0
  %1889 = vmatpush1.bf16.msra.mxu0 0
  %1890 = vmatprep.subr.bf16.mxu0 0
  %1891 = vmatpush1.bf16.msra.mxu0 0
  %1892 = vmatprep.mubr.bf16.mxu0 0
  %1893 = vmatmul.mubr.bf16.gmra.mrb[0].mxu0 %v638
  %v1894 = vpop.f32.mrb[0].mxu0
  %v1895 = vadd.f32 0.0, %v1894
  %v1896 = vpop.f32.mrb[0].mxu0
  %v1897 = vpop.f32.mrb[0].mxu0
  %v1898 = vadd.f32 0.0, %v1897
  %v1899 = vpop.f32.mrb[0].mxu0
  %1900 = vmatprep.mubr.bf16.mxu0 0
  %1901 = vmatmul.mubr.bf16.gmra.mrb[0].mxu0 %v639
  %v1902 = vpop.f32.mrb[0].mxu0
  %v1903 = vadd.f32 0.0, %v1902
  %v1904 = vpop.f32.mrb[0].mxu0
  %v1905 = vpop.f32.mrb[0].mxu0
  %v1906 = vadd.f32 0.0, %v1905
  %v1907 = vpop.f32.mrb[0].mxu0
  %1908 = vmatprep.mubr.bf16.mxu0 0
  %1909 = vmatmul.mubr.bf16.gmra.mrb[0].mxu0 %v640
  %v1910 = vpop.f32.mrb[0].mxu0
  %v1911 = vadd.f32 0.0, %v1910
  %v1912 = vpop.f32.mrb[0].mxu0
  %v1913 = vpop.f32.mrb[0].mxu0
  %v1914 = vadd.f32 0.0, %v1913
  %v1915 = vpop.f32.mrb[0].mxu0
  %1916 = vmatprep.mubr.bf16.mxu0 0
  %1917 = vmatmul.mubr.bf16.gmra.mrb[0].mxu0 %v641
  %v1918 = vpop.f32.mrb[0].mxu0
  %v1919 = vadd.f32 0.0, %v1918
  %v1920 = vpop.f32.mrb[0].mxu0
  %v1921 = vpop.f32.mrb[0].mxu0
  %v1922 = vadd.f32 0.0, %v1921
  %v1923 = vpop.f32.mrb[0].mxu0
  %1924 = vmatprep.mubr.bf16.mxu0 0
  %1925 = vmatmul.mubr.bf16.gmra.mrb[0].mxu0 %v642
  %v1926 = vpop.f32.mrb[0].mxu0
  %v1927 = vadd.f32 0.0, %v1926
  %v1928 = vpop.f32.mrb[0].mxu0
  %v1929 = vpop.f32.mrb[0].mxu0
  %v1930 = vadd.f32 0.0, %v1929
  %v1931 = vpop.f32.mrb[0].mxu0
  %1932 = vmatprep.mubr.bf16.mxu0 0
  %1933 = vmatmul.mubr.bf16.gmra.mrb[0].mxu0 %v643
  %v1934 = vpop.f32.mrb[0].mxu0
  %v1935 = vadd.f32 0.0, %v1934
  %v1936 = vpop.f32.mrb[0].mxu0
  %v1937 = vpop.f32.mrb[0].mxu0
  %v1938 = vadd.f32 0.0, %v1937
  %v1939 = vpop.f32.mrb[0].mxu0
  %1940 = vmatprep.mubr.bf16.mxu0 0
  %1941 = vmatmul.mubr.bf16.gmra.mrb[0].mxu0 %v644
  %v1942 = vpop.f32.mrb[0].mxu0
  %v1943 = vadd.f32 0.0, %v1942
  %v1944 = vpop.f32.mrb[0].mxu0
  %v1945 = vpop.f32.mrb[0].mxu0
  %v1946 = vadd.f32 0.0, %v1945
  %v1947 = vpop.f32.mrb[0].mxu0
  %1948 = vmatprep.mubr.bf16.mxu0 0
  %1949 = vmatmul.mubr.bf16.gmra.mrb[0].mxu0 %v645
  %v1950 = vpop.f32.mrb[0].mxu0
  %v1951 = vadd.f32 0.0, %v1950
  %v1952 = vpop.f32.mrb[0].mxu0
  %v1953 = vpop.f32.mrb[0].mxu0
  %v1954 = vadd.f32 0.0, %v1953
  %v1955 = vpop.f32.mrb[0].mxu0
  %1956 = vdwg.mxu0
  %v1957 = vadd.f32 %v1733, %v1895
  %v1958 = vadd.f32 %v1736, %v1898
  %v1959 = vadd.f32 %v1741, %v1903
  %v1960 = vadd.f32 %v1744, %v1906
  %v1961 = vadd.f32 %v1749, %v1911
  %v1962 = vadd.f32 %v1752, %v1914
  %v1963 = vadd.f32 %v1757, %v1919
  %v1964 = vadd.f32 %v1760, %v1922
  %v1965 = vadd.f32 %v1765, %v1927
  %v1966 = vadd.f32 %v1768, %v1930
  %v1967 = vadd.f32 %v1773, %v1935
  %v1968 = vadd.f32 %v1776, %v1938
  %v1969 = vadd.f32 %v1781, %v1943
  %v1970 = vadd.f32 %v1784, %v1946
  %v1971 = vadd.f32 %v1789, %v1951
  %v1972 = vadd.f32 %v1792, %v1954
  %vm1989 = vcmask 1046528
  %v1990 = vrot.slane %v1957, 1
  %v1991 = vrot.slane %v1958, 1
  %v1992 = vsel %vm1989, %v1990, %v1991
  %v1993 = vrot.slane %v1959, 1
  %v1994 = vsel %vm1989, %v1991, %v1993
  %v1995 = vrot.slane %v1960, 1
  %v1996 = vsel %vm1989, %v1993, %v1995
  %v1997 = vrot.slane %v1961, 1
  %v1998 = vsel %vm1989, %v1995, %v1997
  %v1999 = vrot.slane %v1962, 1
  %v2000 = vsel %vm1989, %v1997, %v1999
  %v2001 = vrot.slane %v1963, 1
  %v2002 = vsel %vm1989, %v1999, %v2001
  %v2003 = vrot.slane %v1964, 1
  %v2004 = vsel %vm1989, %v2001, %v2003
  %v2005 = vrot.slane %v1965, 1
  %v2006 = vsel %vm1989, %v2003, %v2005
  %v2007 = vrot.slane %v1966, 1
  %v2008 = vsel %vm1989, %v2005, %v2007
  %v2009 = vrot.slane %v1967, 1
  %v2010 = vsel %vm1989, %v2007, %v2009
  %v2011 = vrot.slane %v1968, 1
  %v2012 = vsel %vm1989, %v2009, %v2011
  %v2013 = vrot.slane %v1969, 1
  %v2014 = vsel %vm1989, %v2011, %v2013
  %v2015 = vrot.slane %v1970, 1
  %v2016 = vsel %vm1989, %v2013, %v2015
  %v2017 = vrot.slane %v1971, 1
  %v2018 = vsel %vm1989, %v2015, %v2017
  %v2019 = vrot.slane %v1972, 1
  %v2020 = vsel %vm1989, %v2017, %v2019
  %v2037 = vsel %vm1989, %v2019, 0.0
  %v2038 = vsel %vm246, 1, 0
  %v2039 = vsel %vm247, 1, 0
  %v2040 = vsel %vm248, 1, 0
  %v2041 = vsel %vm249, 1, 0
  %v2042 = vsel %vm250, 1, 0
  %v2043 = vsel %vm251, 1, 0
  %v2044 = vsel %vm252, 1, 0
  %v2045 = vsel %vm253, 1, 0
  %v2046 = vsel %vm254, 1, 0
  %v2047 = vsel %vm255, 1, 0
  %v2048 = vsel %vm256, 1, 0
  %v2049 = vsel %vm257, 1, 0
  %v2050 = vsel %vm258, 1, 0
  %v2051 = vsel %vm259, 1, 0
  %v2052 = vsel %vm260, 1, 0
  %v2053 = vsel %vm261, 1, 0
  %vm2054 = vcmp.eq.s32.totalorder %v2038, 1
  %vm2055 = vcmp.eq.s32.totalorder %v2039, 1
  %vm2056 = vcmp.eq.s32.totalorder %v2040, 1
  %vm2057 = vcmp.eq.s32.totalorder %v2041, 1
  %vm2058 = vcmp.eq.s32.totalorder %v2042, 1
  %vm2059 = vcmp.eq.s32.totalorder %v2043, 1
  %vm2060 = vcmp.eq.s32.totalorder %v2044, 1
  %vm2061 = vcmp.eq.s32.totalorder %v2045, 1
  %vm2062 = vcmp.eq.s32.totalorder %v2046, 1
  %vm2063 = vcmp.eq.s32.totalorder %v2047, 1
  %vm2064 = vcmp.eq.s32.totalorder %v2048, 1
  %vm2065 = vcmp.eq.s32.totalorder %v2049, 1
  %vm2066 = vcmp.eq.s32.totalorder %v2050, 1
  %vm2067 = vcmp.eq.s32.totalorder %v2051, 1
  %vm2068 = vcmp.eq.s32.totalorder %v2052, 1
  %vm2069 = vcmp.eq.s32.totalorder %v2053, 1
  %v2070 = vsel %vm2054, %v1992, 0.0
  %v2071 = vsel %vm2055, %v1994, 0.0
  %v2072 = vsel %vm2056, %v1996, 0.0
  %v2073 = vsel %vm2057, %v1998, 0.0
  %v2074 = vsel %vm2058, %v2000, 0.0
  %v2075 = vsel %vm2059, %v2002, 0.0
  %v2076 = vsel %vm2060, %v2004, 0.0
  %v2077 = vsel %vm2061, %v2006, 0.0
  %v2078 = vsel %vm2062, %v2008, 0.0
  %v2079 = vsel %vm2063, %v2010, 0.0
  %v2080 = vsel %vm2064, %v2012, 0.0
  %v2081 = vsel %vm2065, %v2014, 0.0
  %v2082 = vsel %vm2066, %v2016, 0.0
  %v2083 = vsel %vm2067, %v2018, 0.0
  %v2084 = vsel %vm2068, %v2020, 0.0
  %v2085 = vsel %vm2069, %v2037, 0.0
  %v2086 = vadd.f32 %v1455, %v2070
  %v2087 = vadd.f32 %v1456, %v2071
  %v2088 = vadd.f32 %v1457, %v2072
  %v2089 = vadd.f32 %v1458, %v2073
  %v2090 = vadd.f32 %v1459, %v2074
  %v2091 = vadd.f32 %v1460, %v2075
  %v2092 = vadd.f32 %v1461, %v2076
  %v2093 = vadd.f32 %v1462, %v2077
  %v2094 = vadd.f32 %v1463, %v2078
  %v2095 = vadd.f32 %v1464, %v2079
  %v2096 = vadd.f32 %v1465, %v2080
  %v2097 = vadd.f32 %v1466, %v2081
  %v2098 = vadd.f32 %v1467, %v2082
  %v2099 = vadd.f32 %v1468, %v2083
  %v2100 = vadd.f32 %v1469, %v2084
  %v2101 = vadd.f32 %v1470, %v2085
  %v2102 = vld [vmem:[%s2] sm:$0x1]
  %v2104 = vlaneseq
  %v2105 = vshrl.u32 %v2104, 7
  %v2106 = vsub.s32 0, %v2105
  %v2107 = vrot.slane %v2102, %v2106
  %v2109 = vadd.f32 %v2086, %v2107
  %v2110 = vadd.f32 %v2087, %v2107
  %v2111 = vadd.f32 %v2088, %v2107
  %v2112 = vadd.f32 %v2089, %v2107
  %v2113 = vadd.f32 %v2090, %v2107
  %v2114 = vadd.f32 %v2091, %v2107
  %v2115 = vadd.f32 %v2092, %v2107
  %v2116 = vadd.f32 %v2093, %v2107
  %v2117 = vadd.f32 %v2094, %v2107
  %v2118 = vadd.f32 %v2095, %v2107
  %v2119 = vadd.f32 %v2096, %v2107
  %v2120 = vadd.f32 %v2097, %v2107
  %v2121 = vadd.f32 %v2098, %v2107
  %v2122 = vadd.f32 %v2099, %v2107
  %v2123 = vadd.f32 %v2100, %v2107
  %v2124 = vadd.f32 %v2101, %v2107
  %v2125 = vmax.f32 %v2109, 0.0
  %v2126 = vmax.f32 %v2110, 0.0
  %v2127 = vmax.f32 %v2111, 0.0
  %v2128 = vmax.f32 %v2112, 0.0
  %v2129 = vmax.f32 %v2113, 0.0
  %v2130 = vmax.f32 %v2114, 0.0
  %v2131 = vmax.f32 %v2115, 0.0
  %v2132 = vmax.f32 %v2116, 0.0
  %v2133 = vmax.f32 %v2117, 0.0
  %v2134 = vmax.f32 %v2118, 0.0
  %v2135 = vmax.f32 %v2119, 0.0
  %v2136 = vmax.f32 %v2120, 0.0
  %v2137 = vmax.f32 %v2121, 0.0
  %v2138 = vmax.f32 %v2122, 0.0
  %v2139 = vmax.f32 %v2123, 0.0
  %v2140 = vmax.f32 %v2124, 0.0
  %v2141 = vpack.c.bf16 %v2126, %v2125
  %v2142 = vpack.c.bf16 %v2128, %v2127
  %v2143 = vpack.c.bf16 %v2130, %v2129
  %v2144 = vpack.c.bf16 %v2132, %v2131
  %v2145 = vpack.c.bf16 %v2134, %v2133
  %v2146 = vpack.c.bf16 %v2136, %v2135
  %v2147 = vpack.c.bf16 %v2138, %v2137
  %v2148 = vpack.c.bf16 %v2140, %v2139
  %2149 = vst [vmem:[%s289] sm:$0xff] %v2141
  %2150 = vst [vmem:[%s289 + $0x8] sm:$0xff] %v2142
  %2151 = vst [vmem:[%s289 + $0x10] sm:$0xff] %v2143
  %2152 = vst [vmem:[%s289 + $0x18] sm:$0xff] %v2144
  %2153 = vst [vmem:[%s289 + $0x20] sm:$0xff] %v2145
  %2154 = vst [vmem:[%s289 + $0x28] sm:$0xff] %v2146
  %2155 = vst [vmem:[%s289 + $0x30] sm:$0xff] %v2147
  %2156 = vst [vmem:[%s289 + $0x38] sm:$0xff] %v2148
  %v2157 = vld [vmem:[#allocation2] sm:$0xff]
  %v2158 = vld [vmem:[#allocation2 + $0x8] sm:$0xff]
  %v2159 = vld [vmem:[#allocation2 + $0x10] sm:$0xff]
  %v2160 = vld [vmem:[#allocation2 + $0x18] sm:$0xff]
  %v2161 = vld [vmem:[#allocation2 + $0x20] sm:$0xff]
  %v2162 = vld [vmem:[#allocation2 + $0x28] sm:$0xff]
  %v2163 = vld [vmem:[#allocation2 + $0x30] sm:$0xff]
  %v2164 = vld [vmem:[#allocation2 + $0x38] sm:$0xff]
  %v2165 = vld [vmem:[%s3] sm:$0xf]
  %v2166 = vld [vmem:[%s3 + $0x4] sm:$0xf]
  %v2167 = vld [vmem:[%s3 + $0x8] sm:$0xf]
  %v2168 = vld [vmem:[%s3 + $0xc] sm:$0xf]
  %v2169 = vld [vmem:[%s3 + $0x10] sm:$0xf]
  %v2170 = vld [vmem:[%s3 + $0x14] sm:$0xf]
  %v2171 = vld [vmem:[%s3 + $0x18] sm:$0xf]
  %v2172 = vld [vmem:[%s3 + $0x1c] sm:$0xf]
  %v2173 = vld [vmem:[%s3 + $0x20] sm:$0xf]
  %v2174 = vld [vmem:[%s3 + $0x24] sm:$0xf]
  %v2175 = vld [vmem:[%s3 + $0x28] sm:$0xf]
  %v2176 = vld [vmem:[%s3 + $0x2c] sm:$0xf]
  %v2177 = vld [vmem:[%s3 + $0x30] sm:$0xf]
  %v2178 = vld [vmem:[%s3 + $0x34] sm:$0xf]
  %v2179 = vld [vmem:[%s3 + $0x38] sm:$0xf]
  %v2180 = vld [vmem:[%s3 + $0x3c] sm:$0xf]
  %v2181 = vld [vmem:[%s289] sm:$0xff]
  %v2182 = vld [vmem:[%s289 + $0x8] sm:$0xff]
  %v2183 = vld [vmem:[%s289 + $0x10] sm:$0xff]
  %v2184 = vld [vmem:[%s289 + $0x18] sm:$0xff]
  %v2185 = vld [vmem:[%s289 + $0x20] sm:$0xff]
  %v2186 = vld [vmem:[%s289 + $0x28] sm:$0xff]
  %v2187 = vld [vmem:[%s289 + $0x30] sm:$0xff]
  %v2188 = vld [vmem:[%s289 + $0x38] sm:$0xff]
  %s2189 = scalar_lea.vmem %s3, 192
  %v2190 = vld [vmem:[%s2189] sm:$0xf]
  %v2191 = vld [vmem:[%s2189 + $0x4] sm:$0xf]
  %v2192 = vld [vmem:[%s2189 + $0x8] sm:$0xf]
  %v2193 = vld [vmem:[%s2189 + $0xc] sm:$0xf]
  %v2194 = vld [vmem:[%s2189 + $0x10] sm:$0xf]
  %v2195 = vld [vmem:[%s2189 + $0x14] sm:$0xf]
  %v2196 = vld [vmem:[%s2189 + $0x18] sm:$0xf]
  %v2197 = vld [vmem:[%s2189 + $0x1c] sm:$0xf]
  %v2198 = vld [vmem:[%s2189 + $0x20] sm:$0xf]
  %v2199 = vld [vmem:[%s2189 + $0x24] sm:$0xf]
  %v2200 = vld [vmem:[%s2189 + $0x28] sm:$0xf]
  %v2201 = vld [vmem:[%s2189 + $0x2c] sm:$0xf]
  %v2202 = vld [vmem:[%s2189 + $0x30] sm:$0xf]
  %v2203 = vld [vmem:[%s2189 + $0x34] sm:$0xf]
  %v2204 = vld [vmem:[%s2189 + $0x38] sm:$0xf]
  %v2205 = vld [vmem:[%s2189 + $0x3c] sm:$0xf]
  %v2222 = vunpack.c.l.b16 %v2190
  %v2223 = vunpack.c.l.b16 %v2191
  %v2224 = vunpack.c.l.b16 %v2192
  %v2225 = vunpack.c.l.b16 %v2193
  %v2226 = vunpack.c.l.b16 %v2194
  %v2227 = vunpack.c.l.b16 %v2195
  %v2228 = vunpack.c.l.b16 %v2196
  %v2229 = vunpack.c.l.b16 %v2197
  %v2230 = vunpack.c.l.b16 %v2198
  %v2231 = vunpack.c.l.b16 %v2199
  %v2232 = vunpack.c.l.b16 %v2200
  %v2233 = vunpack.c.l.b16 %v2201
  %v2234 = vunpack.c.l.b16 %v2202
  %v2235 = vunpack.c.l.b16 %v2203
  %v2236 = vunpack.c.l.b16 %v2204
  %v2237 = vunpack.c.l.b16 %v2205
  %v2238 = vpack.c.b16 %v2223, %v2222
  %v2239 = vpack.c.b16 %v2225, %v2224
  %v2240 = vpack.c.b16 %v2227, %v2226
  %v2241 = vpack.c.b16 %v2229, %v2228
  %v2242 = vpack.c.b16 %v2231, %v2230
  %v2243 = vpack.c.b16 %v2233, %v2232
  %v2244 = vpack.c.b16 %v2235, %v2234
  %v2245 = vpack.c.b16 %v2237, %v2236
  %2254 = vmatprep.subr.bf16.mxu0 0
  %2255 = vmatpush1.bf16.msra.mxu0 %v2238
  %2256 = vmatprep.subr.bf16.mxu0 0
  %2257 = vmatpush1.bf16.msra.mxu0 %v2239
  %2258 = vmatprep.subr.bf16.mxu0 0
  %2259 = vmatpush1.bf16.msra.mxu0 %v2240
  %2260 = vmatprep.subr.bf16.mxu0 0
  %2261 = vmatpush1.bf16.msra.mxu0 %v2241
  %2262 = vmatprep.subr.bf16.mxu0 0
  %2263 = vmatpush1.bf16.msra.mxu0 %v2242
  %2264 = vmatprep.subr.bf16.mxu0 0
  %2265 = vmatpush1.bf16.msra.mxu0 %v2243
  %2266 = vmatprep.subr.bf16.mxu0 0
  %2267 = vmatpush1.bf16.msra.mxu0 %v2244
  %2268 = vmatprep.subr.bf16.mxu0 0
  %2269 = vmatpush1.bf16.msra.mxu0 %v2245
  %2270 = vmatprep.subr.bf16.mxu0 0
  %2271 = vmatpush1.bf16.msra.mxu0 0
  %2272 = vmatprep.subr.bf16.mxu0 0
  %2273 = vmatpush1.bf16.msra.mxu0 0
  %2274 = vmatprep.subr.bf16.mxu0 0
  %2275 = vmatpush1.bf16.msra.mxu0 0
  %2276 = vmatprep.subr.bf16.mxu0 0
  %2277 = vmatpush1.bf16.msra.mxu0 0
  %2278 = vmatprep.subr.bf16.mxu0 0
  %2279 = vmatpush1.bf16.msra.mxu0 0
  %2280 = vmatprep.subr.bf16.mxu0 0
  %2281 = vmatpush1.bf16.msra.mxu0 0
  %2282 = vmatprep.subr.bf16.mxu0 0
  %2283 = vmatpush1.bf16.msra.mxu0 0
  %2284 = vmatprep.subr.bf16.mxu0 0
  %2285 = vmatpush1.bf16.msra.mxu0 0
  %2286 = vmatprep.mubr.bf16.mxu0 0
  %2287 = vmatmul.mubr.bf16.gmra.mrb[0].mxu0 %v2181
  %v2288 = vpop.f32.mrb[0].mxu0
  %v2289 = vadd.f32 0.0, %v2288
  %v2290 = vpop.f32.mrb[0].mxu0
  %v2291 = vpop.f32.mrb[0].mxu0
  %v2292 = vadd.f32 0.0, %v2291
  %v2293 = vpop.f32.mrb[0].mxu0
  %2294 = vmatprep.mubr.bf16.mxu0 0
  %2295 = vmatmul.mubr.bf16.gmra.mrb[0].mxu0 %v2182
  %v2296 = vpop.f32.mrb[0].mxu0
  %v2297 = vadd.f32 0.0, %v2296
  %v2298 = vpop.f32.mrb[0].mxu0
  %v2299 = vpop.f32.mrb[0].mxu0
  %v2300 = vadd.f32 0.0, %v2299
  %v2301 = vpop.f32.mrb[0].mxu0
  %2302 = vmatprep.mubr.bf16.mxu0 0
  %2303 = vmatmul.mubr.bf16.gmra.mrb[0].mxu0 %v2183
  %v2304 = vpop.f32.mrb[0].mxu0
  %v2305 = vadd.f32 0.0, %v2304
  %v2306 = vpop.f32.mrb[0].mxu0
  %v2307 = vpop.f32.mrb[0].mxu0
  %v2308 = vadd.f32 0.0, %v2307
  %v2309 = vpop.f32.mrb[0].mxu0
  %2310 = vmatprep.mubr.bf16.mxu0 0
  %2311 = vmatmul.mubr.bf16.gmra.mrb[0].mxu0 %v2184
  %v2312 = vpop.f32.mrb[0].mxu0
  %v2313 = vadd.f32 0.0, %v2312
  %v2314 = vpop.f32.mrb[0].mxu0
  %v2315 = vpop.f32.mrb[0].mxu0
  %v2316 = vadd.f32 0.0, %v2315
  %v2317 = vpop.f32.mrb[0].mxu0
  %2318 = vmatprep.mubr.bf16.mxu0 0
  %2319 = vmatmul.mubr.bf16.gmra.mrb[0].mxu0 %v2185
  %v2320 = vpop.f32.mrb[0].mxu0
  %v2321 = vadd.f32 0.0, %v2320
  %v2322 = vpop.f32.mrb[0].mxu0
  %v2323 = vpop.f32.mrb[0].mxu0
  %v2324 = vadd.f32 0.0, %v2323
  %v2325 = vpop.f32.mrb[0].mxu0
  %2326 = vmatprep.mubr.bf16.mxu0 0
  %2327 = vmatmul.mubr.bf16.gmra.mrb[0].mxu0 %v2186
  %v2328 = vpop.f32.mrb[0].mxu0
  %v2329 = vadd.f32 0.0, %v2328
  %v2330 = vpop.f32.mrb[0].mxu0
  %v2331 = vpop.f32.mrb[0].mxu0
  %v2332 = vadd.f32 0.0, %v2331
  %v2333 = vpop.f32.mrb[0].mxu0
  %2334 = vmatprep.mubr.bf16.mxu0 0
  %2335 = vmatmul.mubr.bf16.gmra.mrb[0].mxu0 %v2187
  %v2336 = vpop.f32.mrb[0].mxu0
  %v2337 = vadd.f32 0.0, %v2336
  %v2338 = vpop.f32.mrb[0].mxu0
  %v2339 = vpop.f32.mrb[0].mxu0
  %v2340 = vadd.f32 0.0, %v2339
  %v2341 = vpop.f32.mrb[0].mxu0
  %2342 = vmatprep.mubr.bf16.mxu0 0
  %2343 = vmatmul.mubr.bf16.gmra.mrb[0].mxu0 %v2188
  %v2344 = vpop.f32.mrb[0].mxu0
  %v2345 = vadd.f32 0.0, %v2344
  %v2346 = vpop.f32.mrb[0].mxu0
  %v2347 = vpop.f32.mrb[0].mxu0
  %v2348 = vadd.f32 0.0, %v2347
  %v2349 = vpop.f32.mrb[0].mxu0
  %2350 = vdwg.mxu0
  %v2367 = vunpack.c.l.b16 %v2165
  %v2368 = vunpack.c.l.b16 %v2166
  %v2369 = vunpack.c.l.b16 %v2167
  %v2370 = vunpack.c.l.b16 %v2168
  %v2371 = vunpack.c.l.b16 %v2169
  %v2372 = vunpack.c.l.b16 %v2170
  %v2373 = vunpack.c.l.b16 %v2171
  %v2374 = vunpack.c.l.b16 %v2172
  %v2375 = vunpack.c.l.b16 %v2173
  %v2376 = vunpack.c.l.b16 %v2174
  %v2377 = vunpack.c.l.b16 %v2175
  %v2378 = vunpack.c.l.b16 %v2176
  %v2379 = vunpack.c.l.b16 %v2177
  %v2380 = vunpack.c.l.b16 %v2178
  %v2381 = vunpack.c.l.b16 %v2179
  %v2382 = vunpack.c.l.b16 %v2180
  %v2383 = vpack.c.b16 %v2368, %v2367
  %v2384 = vpack.c.b16 %v2370, %v2369
  %v2385 = vpack.c.b16 %v2372, %v2371
  %v2386 = vpack.c.b16 %v2374, %v2373
  %v2387 = vpack.c.b16 %v2376, %v2375
  %v2388 = vpack.c.b16 %v2378, %v2377
  %v2389 = vpack.c.b16 %v2380, %v2379
  %v2390 = vpack.c.b16 %v2382, %v2381
  %2399 = vmatprep.subr.bf16.mxu0 0
  %2400 = vmatpush1.bf16.msra.mxu0 %v2383
  %2401 = vmatprep.subr.bf16.mxu0 0
  %2402 = vmatpush1.bf16.msra.mxu0 %v2384
  %2403 = vmatprep.subr.bf16.mxu0 0
  %2404 = vmatpush1.bf16.msra.mxu0 %v2385
  %2405 = vmatprep.subr.bf16.mxu0 0
  %2406 = vmatpush1.bf16.msra.mxu0 %v2386
  %2407 = vmatprep.subr.bf16.mxu0 0
  %2408 = vmatpush1.bf16.msra.mxu0 %v2387
  %2409 = vmatprep.subr.bf16.mxu0 0
  %2410 = vmatpush1.bf16.msra.mxu0 %v2388
  %2411 = vmatprep.subr.bf16.mxu0 0
  %2412 = vmatpush1.bf16.msra.mxu0 %v2389
  %2413 = vmatprep.subr.bf16.mxu0 0
  %2414 = vmatpush1.bf16.msra.mxu0 %v2390
  %2415 = vmatprep.subr.bf16.mxu0 0
  %2416 = vmatpush1.bf16.msra.mxu0 0
  %2417 = vmatprep.subr.bf16.mxu0 0
  %2418 = vmatpush1.bf16.msra.mxu0 0
  %2419 = vmatprep.subr.bf16.mxu0 0
  %2420 = vmatpush1.bf16.msra.mxu0 0
  %2421 = vmatprep.subr.bf16.mxu0 0
  %2422 = vmatpush1.bf16.msra.mxu0 0
  %2423 = vmatprep.subr.bf16.mxu0 0
  %2424 = vmatpush1.bf16.msra.mxu0 0
  %2425 = vmatprep.subr.bf16.mxu0 0
  %2426 = vmatpush1.bf16.msra.mxu0 0
  %2427 = vmatprep.subr.bf16.mxu0 0
  %2428 = vmatpush1.bf16.msra.mxu0 0
  %2429 = vmatprep.subr.bf16.mxu0 0
  %2430 = vmatpush1.bf16.msra.mxu0 0
  %2431 = vmatprep.mubr.bf16.mxu0 0
  %2432 = vmatmul.mubr.bf16.gmra.mrb[0].mxu0 %v2157
  %v2433 = vpop.f32.mrb[0].mxu0
  %v2434 = vadd.f32 %v2289, %v2433
  %v2435 = vpop.f32.mrb[0].mxu0
  %v2436 = vpop.f32.mrb[0].mxu0
  %v2437 = vadd.f32 %v2292, %v2436
  %v2438 = vpop.f32.mrb[0].mxu0
  %2439 = vmatprep.mubr.bf16.mxu0 0
  %2440 = vmatmul.mubr.bf16.gmra.mrb[0].mxu0 %v2158
  %v2441 = vpop.f32.mrb[0].mxu0
  %v2442 = vadd.f32 %v2297, %v2441
  %v2443 = vpop.f32.mrb[0].mxu0
  %v2444 = vpop.f32.mrb[0].mxu0
  %v2445 = vadd.f32 %v2300, %v2444
  %v2446 = vpop.f32.mrb[0].mxu0
  %2447 = vmatprep.mubr.bf16.mxu0 0
  %2448 = vmatmul.mubr.bf16.gmra.mrb[0].mxu0 %v2159
  %v2449 = vpop.f32.mrb[0].mxu0
  %v2450 = vadd.f32 %v2305, %v2449
  %v2451 = vpop.f32.mrb[0].mxu0
  %v2452 = vpop.f32.mrb[0].mxu0
  %v2453 = vadd.f32 %v2308, %v2452
  %v2454 = vpop.f32.mrb[0].mxu0
  %2455 = vmatprep.mubr.bf16.mxu0 0
  %2456 = vmatmul.mubr.bf16.gmra.mrb[0].mxu0 %v2160
  %v2457 = vpop.f32.mrb[0].mxu0
  %v2458 = vadd.f32 %v2313, %v2457
  %v2459 = vpop.f32.mrb[0].mxu0
  %v2460 = vpop.f32.mrb[0].mxu0
  %v2461 = vadd.f32 %v2316, %v2460
  %v2462 = vpop.f32.mrb[0].mxu0
  %2463 = vmatprep.mubr.bf16.mxu0 0
  %2464 = vmatmul.mubr.bf16.gmra.mrb[0].mxu0 %v2161
  %v2465 = vpop.f32.mrb[0].mxu0
  %v2466 = vadd.f32 %v2321, %v2465
  %v2467 = vpop.f32.mrb[0].mxu0
  %v2468 = vpop.f32.mrb[0].mxu0
  %v2469 = vadd.f32 %v2324, %v2468
  %v2470 = vpop.f32.mrb[0].mxu0
  %2471 = vmatprep.mubr.bf16.mxu0 0
  %2472 = vmatmul.mubr.bf16.gmra.mrb[0].mxu0 %v2162
  %v2473 = vpop.f32.mrb[0].mxu0
  %v2474 = vadd.f32 %v2329, %v2473
  %v2475 = vpop.f32.mrb[0].mxu0
  %v2476 = vpop.f32.mrb[0].mxu0
  %v2477 = vadd.f32 %v2332, %v2476
  %v2478 = vpop.f32.mrb[0].mxu0
  %2479 = vmatprep.mubr.bf16.mxu0 0
  %2480 = vmatmul.mubr.bf16.gmra.mrb[0].mxu0 %v2163
  %v2481 = vpop.f32.mrb[0].mxu0
  %v2482 = vadd.f32 %v2337, %v2481
  %v2483 = vpop.f32.mrb[0].mxu0
  %v2484 = vpop.f32.mrb[0].mxu0
  %v2485 = vadd.f32 %v2340, %v2484
  %v2486 = vpop.f32.mrb[0].mxu0
  %2487 = vmatprep.mubr.bf16.mxu0 0
  %2488 = vmatmul.mubr.bf16.gmra.mrb[0].mxu0 %v2164
  %v2489 = vpop.f32.mrb[0].mxu0
  %v2490 = vadd.f32 %v2345, %v2489
  %v2491 = vpop.f32.mrb[0].mxu0
  %v2492 = vpop.f32.mrb[0].mxu0
  %v2493 = vadd.f32 %v2348, %v2492
  %v2494 = vpop.f32.mrb[0].mxu0
  %2495 = vdwg.mxu0
  %v2496 = vld [vmem:[%s637] sm:$0xff]
  %v2497 = vld [vmem:[%s637 + $0x8] sm:$0xff]
  %v2498 = vld [vmem:[%s637 + $0x10] sm:$0xff]
  %v2499 = vld [vmem:[%s637 + $0x18] sm:$0xff]
  %v2500 = vld [vmem:[%s637 + $0x20] sm:$0xff]
  %v2501 = vld [vmem:[%s637 + $0x28] sm:$0xff]
  %v2502 = vld [vmem:[%s637 + $0x30] sm:$0xff]
  %v2503 = vld [vmem:[%s637 + $0x38] sm:$0xff]
  %s2504 = scalar_lea.vmem %s3, 384
  %v2505 = vld [vmem:[%s2504] sm:$0xf]
  %v2506 = vld [vmem:[%s2504 + $0x4] sm:$0xf]
  %v2507 = vld [vmem:[%s2504 + $0x8] sm:$0xf]
  %v2508 = vld [vmem:[%s2504 + $0xc] sm:$0xf]
  %v2509 = vld [vmem:[%s2504 + $0x10] sm:$0xf]
  %v2510 = vld [vmem:[%s2504 + $0x14] sm:$0xf]
  %v2511 = vld [vmem:[%s2504 + $0x18] sm:$0xf]
  %v2512 = vld [vmem:[%s2504 + $0x1c] sm:$0xf]
  %v2513 = vld [vmem:[%s2504 + $0x20] sm:$0xf]
  %v2514 = vld [vmem:[%s2504 + $0x24] sm:$0xf]
  %v2515 = vld [vmem:[%s2504 + $0x28] sm:$0xf]
  %v2516 = vld [vmem:[%s2504 + $0x2c] sm:$0xf]
  %v2517 = vld [vmem:[%s2504 + $0x30] sm:$0xf]
  %v2518 = vld [vmem:[%s2504 + $0x34] sm:$0xf]
  %v2519 = vld [vmem:[%s2504 + $0x38] sm:$0xf]
  %v2520 = vld [vmem:[%s2504 + $0x3c] sm:$0xf]
  %v2537 = vunpack.c.l.b16 %v2505
  %v2538 = vunpack.c.l.b16 %v2506
  %v2539 = vunpack.c.l.b16 %v2507
  %v2540 = vunpack.c.l.b16 %v2508
  %v2541 = vunpack.c.l.b16 %v2509
  %v2542 = vunpack.c.l.b16 %v2510
  %v2543 = vunpack.c.l.b16 %v2511
  %v2544 = vunpack.c.l.b16 %v2512
  %v2545 = vunpack.c.l.b16 %v2513
  %v2546 = vunpack.c.l.b16 %v2514
  %v2547 = vunpack.c.l.b16 %v2515
  %v2548 = vunpack.c.l.b16 %v2516
  %v2549 = vunpack.c.l.b16 %v2517
  %v2550 = vunpack.c.l.b16 %v2518
  %v2551 = vunpack.c.l.b16 %v2519
  %v2552 = vunpack.c.l.b16 %v2520
  %v2553 = vpack.c.b16 %v2538, %v2537
  %v2554 = vpack.c.b16 %v2540, %v2539
  %v2555 = vpack.c.b16 %v2542, %v2541
  %v2556 = vpack.c.b16 %v2544, %v2543
  %v2557 = vpack.c.b16 %v2546, %v2545
  %v2558 = vpack.c.b16 %v2548, %v2547
  %v2559 = vpack.c.b16 %v2550, %v2549
  %v2560 = vpack.c.b16 %v2552, %v2551
  %2569 = vmatprep.subr.bf16.mxu0 0
  %2570 = vmatpush1.bf16.msra.mxu0 %v2553
  %2571 = vmatprep.subr.bf16.mxu0 0
  %2572 = vmatpush1.bf16.msra.mxu0 %v2554
  %2573 = vmatprep.subr.bf16.mxu0 0
  %2574 = vmatpush1.bf16.msra.mxu0 %v2555
  %2575 = vmatprep.subr.bf16.mxu0 0
  %2576 = vmatpush1.bf16.msra.mxu0 %v2556
  %2577 = vmatprep.subr.bf16.mxu0 0
  %2578 = vmatpush1.bf16.msra.mxu0 %v2557
  %2579 = vmatprep.subr.bf16.mxu0 0
  %2580 = vmatpush1.bf16.msra.mxu0 %v2558
  %2581 = vmatprep.subr.bf16.mxu0 0
  %2582 = vmatpush1.bf16.msra.mxu0 %v2559
  %2583 = vmatprep.subr.bf16.mxu0 0
  %2584 = vmatpush1.bf16.msra.mxu0 %v2560
  %2585 = vmatprep.subr.bf16.mxu0 0
  %2586 = vmatpush1.bf16.msra.mxu0 0
  %2587 = vmatprep.subr.bf16.mxu0 0
  %2588 = vmatpush1.bf16.msra.mxu0 0
  %2589 = vmatprep.subr.bf16.mxu0 0
  %2590 = vmatpush1.bf16.msra.mxu0 0
  %2591 = vmatprep.subr.bf16.mxu0 0
  %2592 = vmatpush1.bf16.msra.mxu0 0
  %2593 = vmatprep.subr.bf16.mxu0 0
  %2594 = vmatpush1.bf16.msra.mxu0 0
  %2595 = vmatprep.subr.bf16.mxu0 0
  %2596 = vmatpush1.bf16.msra.mxu0 0
  %2597 = vmatprep.subr.bf16.mxu0 0
  %2598 = vmatpush1.bf16.msra.mxu0 0
  %2599 = vmatprep.subr.bf16.mxu0 0
  %2600 = vmatpush1.bf16.msra.mxu0 0
  %2601 = vmatprep.mubr.bf16.mxu0 0
  %2602 = vmatmul.mubr.bf16.gmra.mrb[0].mxu0 %v2496
  %v2603 = vpop.f32.mrb[0].mxu0
  %v2604 = vadd.f32 0.0, %v2603
  %v2605 = vpop.f32.mrb[0].mxu0
  %v2606 = vpop.f32.mrb[0].mxu0
  %v2607 = vadd.f32 0.0, %v2606
  %v2608 = vpop.f32.mrb[0].mxu0
  %2609 = vmatprep.mubr.bf16.mxu0 0
  %2610 = vmatmul.mubr.bf16.gmra.mrb[0].mxu0 %v2497
  %v2611 = vpop.f32.mrb[0].mxu0
  %v2612 = vadd.f32 0.0, %v2611
  %v2613 = vpop.f32.mrb[0].mxu0
  %v2614 = vpop.f32.mrb[0].mxu0
  %v2615 = vadd.f32 0.0, %v2614
  %v2616 = vpop.f32.mrb[0].mxu0
  %2617 = vmatprep.mubr.bf16.mxu0 0
  %2618 = vmatmul.mubr.bf16.gmra.mrb[0].mxu0 %v2498
  %v2619 = vpop.f32.mrb[0].mxu0
  %v2620 = vadd.f32 0.0, %v2619
  %v2621 = vpop.f32.mrb[0].mxu0
  %v2622 = vpop.f32.mrb[0].mxu0
  %v2623 = vadd.f32 0.0, %v2622
  %v2624 = vpop.f32.mrb[0].mxu0
  %2625 = vmatprep.mubr.bf16.mxu0 0
  %2626 = vmatmul.mubr.bf16.gmra.mrb[0].mxu0 %v2499
  %v2627 = vpop.f32.mrb[0].mxu0
  %v2628 = vadd.f32 0.0, %v2627
  %v2629 = vpop.f32.mrb[0].mxu0
  %v2630 = vpop.f32.mrb[0].mxu0
  %v2631 = vadd.f32 0.0, %v2630
  %v2632 = vpop.f32.mrb[0].mxu0
  %2633 = vmatprep.mubr.bf16.mxu0 0
  %2634 = vmatmul.mubr.bf16.gmra.mrb[0].mxu0 %v2500
  %v2635 = vpop.f32.mrb[0].mxu0
  %v2636 = vadd.f32 0.0, %v2635
  %v2637 = vpop.f32.mrb[0].mxu0
  %v2638 = vpop.f32.mrb[0].mxu0
  %v2639 = vadd.f32 0.0, %v2638
  %v2640 = vpop.f32.mrb[0].mxu0
  %2641 = vmatprep.mubr.bf16.mxu0 0
  %2642 = vmatmul.mubr.bf16.gmra.mrb[0].mxu0 %v2501
  %v2643 = vpop.f32.mrb[0].mxu0
  %v2644 = vadd.f32 0.0, %v2643
  %v2645 = vpop.f32.mrb[0].mxu0
  %v2646 = vpop.f32.mrb[0].mxu0
  %v2647 = vadd.f32 0.0, %v2646
  %v2648 = vpop.f32.mrb[0].mxu0
  %2649 = vmatprep.mubr.bf16.mxu0 0
  %2650 = vmatmul.mubr.bf16.gmra.mrb[0].mxu0 %v2502
  %v2651 = vpop.f32.mrb[0].mxu0
  %v2652 = vadd.f32 0.0, %v2651
  %v2653 = vpop.f32.mrb[0].mxu0
  %v2654 = vpop.f32.mrb[0].mxu0
  %v2655 = vadd.f32 0.0, %v2654
  %v2656 = vpop.f32.mrb[0].mxu0
  %2657 = vmatprep.mubr.bf16.mxu0 0
  %2658 = vmatmul.mubr.bf16.gmra.mrb[0].mxu0 %v2503
  %v2659 = vpop.f32.mrb[0].mxu0
  %v2660 = vadd.f32 0.0, %v2659
  %v2661 = vpop.f32.mrb[0].mxu0
  %v2662 = vpop.f32.mrb[0].mxu0
  %v2663 = vadd.f32 0.0, %v2662
  %v2664 = vpop.f32.mrb[0].mxu0
  %2665 = vdwg.mxu0
  %v2666 = vadd.f32 %v2434, %v2604
  %v2667 = vadd.f32 %v2437, %v2607
  %v2668 = vadd.f32 %v2442, %v2612
  %v2669 = vadd.f32 %v2445, %v2615
  %v2670 = vadd.f32 %v2450, %v2620
  %v2671 = vadd.f32 %v2453, %v2623
  %v2672 = vadd.f32 %v2458, %v2628
  %v2673 = vadd.f32 %v2461, %v2631
  %v2674 = vadd.f32 %v2466, %v2636
  %v2675 = vadd.f32 %v2469, %v2639
  %v2676 = vadd.f32 %v2474, %v2644
  %v2677 = vadd.f32 %v2477, %v2647
  %v2678 = vadd.f32 %v2482, %v2652
  %v2679 = vadd.f32 %v2485, %v2655
  %v2680 = vadd.f32 %v2490, %v2660
  %v2681 = vadd.f32 %v2493, %v2663
  %v2698 = vrot.slane %v2666, 7
  %v2699 = vrot.slane %v2667, 7
  %v2700 = vsel %vm840, %v2698, %v2699
  %v2701 = vrot.slane %v2668, 7
  %v2702 = vsel %vm840, %v2699, %v2701
  %v2703 = vrot.slane %v2669, 7
  %v2704 = vsel %vm840, %v2701, %v2703
  %v2705 = vrot.slane %v2670, 7
  %v2706 = vsel %vm840, %v2703, %v2705
  %v2707 = vrot.slane %v2671, 7
  %v2708 = vsel %vm840, %v2705, %v2707
  %v2709 = vrot.slane %v2672, 7
  %v2710 = vsel %vm840, %v2707, %v2709
  %v2711 = vrot.slane %v2673, 7
  %v2712 = vsel %vm840, %v2709, %v2711
  %v2713 = vrot.slane %v2674, 7
  %v2714 = vsel %vm840, %v2711, %v2713
  %v2715 = vrot.slane %v2675, 7
  %v2716 = vsel %vm840, %v2713, %v2715
  %v2717 = vrot.slane %v2676, 7
  %v2718 = vsel %vm840, %v2715, %v2717
  %v2719 = vrot.slane %v2677, 7
  %v2720 = vsel %vm840, %v2717, %v2719
  %v2721 = vrot.slane %v2678, 7
  %v2722 = vsel %vm840, %v2719, %v2721
  %v2723 = vrot.slane %v2679, 7
  %v2724 = vsel %vm840, %v2721, %v2723
  %v2725 = vrot.slane %v2680, 7
  %v2726 = vsel %vm840, %v2723, %v2725
  %v2727 = vrot.slane %v2681, 7
  %v2728 = vsel %vm840, %v2725, %v2727
  %v2745 = vsel %vm840, 0.0, %v2698
  %v2746 = vsel %vm905, %v2745, 0.0
  %v2747 = vsel %vm906, %v2700, 0.0
  %v2748 = vsel %vm907, %v2702, 0.0
  %v2749 = vsel %vm908, %v2704, 0.0
  %v2750 = vsel %vm909, %v2706, 0.0
  %v2751 = vsel %vm910, %v2708, 0.0
  %v2752 = vsel %vm911, %v2710, 0.0
  %v2753 = vsel %vm912, %v2712, 0.0
  %v2754 = vsel %vm913, %v2714, 0.0
  %v2755 = vsel %vm914, %v2716, 0.0
  %v2756 = vsel %vm915, %v2718, 0.0
  %v2757 = vsel %vm916, %v2720, 0.0
  %v2758 = vsel %vm917, %v2722, 0.0
  %v2759 = vsel %vm918, %v2724, 0.0
  %v2760 = vsel %vm919, %v2726, 0.0
  %v2761 = vsel %vm920, %v2728, 0.0
  %v2762 = vadd.f32 %v2746, 0.0
  %v2763 = vadd.f32 %v2747, 0.0
  %v2764 = vadd.f32 %v2748, 0.0
  %v2765 = vadd.f32 %v2749, 0.0
  %v2766 = vadd.f32 %v2750, 0.0
  %v2767 = vadd.f32 %v2751, 0.0
  %v2768 = vadd.f32 %v2752, 0.0
  %v2769 = vadd.f32 %v2753, 0.0
  %v2770 = vadd.f32 %v2754, 0.0
  %v2771 = vadd.f32 %v2755, 0.0
  %v2772 = vadd.f32 %v2756, 0.0
  %v2773 = vadd.f32 %v2757, 0.0
  %v2774 = vadd.f32 %v2758, 0.0
  %v2775 = vadd.f32 %v2759, 0.0
  %v2776 = vadd.f32 %v2760, 0.0
  %v2777 = vadd.f32 %v2761, 0.0
  %s2778 = scalar_lea.vmem %s3, 64
  %v2779 = vld [vmem:[%s2778] sm:$0xf]
  %v2780 = vld [vmem:[%s2778 + $0x4] sm:$0xf]
  %v2781 = vld [vmem:[%s2778 + $0x8] sm:$0xf]
  %v2782 = vld [vmem:[%s2778 + $0xc] sm:$0xf]
  %v2783 = vld [vmem:[%s2778 + $0x10] sm:$0xf]
  %v2784 = vld [vmem:[%s2778 + $0x14] sm:$0xf]
  %v2785 = vld [vmem:[%s2778 + $0x18] sm:$0xf]
  %v2786 = vld [vmem:[%s2778 + $0x1c] sm:$0xf]
  %v2787 = vld [vmem:[%s2778 + $0x20] sm:$0xf]
  %v2788 = vld [vmem:[%s2778 + $0x24] sm:$0xf]
  %v2789 = vld [vmem:[%s2778 + $0x28] sm:$0xf]
  %v2790 = vld [vmem:[%s2778 + $0x2c] sm:$0xf]
  %v2791 = vld [vmem:[%s2778 + $0x30] sm:$0xf]
  %v2792 = vld [vmem:[%s2778 + $0x34] sm:$0xf]
  %v2793 = vld [vmem:[%s2778 + $0x38] sm:$0xf]
  %v2794 = vld [vmem:[%s2778 + $0x3c] sm:$0xf]
  %s2795 = scalar_lea.vmem %s3, 256
  %v2796 = vld [vmem:[%s2795] sm:$0xf]
  %v2797 = vld [vmem:[%s2795 + $0x4] sm:$0xf]
  %v2798 = vld [vmem:[%s2795 + $0x8] sm:$0xf]
  %v2799 = vld [vmem:[%s2795 + $0xc] sm:$0xf]
  %v2800 = vld [vmem:[%s2795 + $0x10] sm:$0xf]
  %v2801 = vld [vmem:[%s2795 + $0x14] sm:$0xf]
  %v2802 = vld [vmem:[%s2795 + $0x18] sm:$0xf]
  %v2803 = vld [vmem:[%s2795 + $0x1c] sm:$0xf]
  %v2804 = vld [vmem:[%s2795 + $0x20] sm:$0xf]
  %v2805 = vld [vmem:[%s2795 + $0x24] sm:$0xf]
  %v2806 = vld [vmem:[%s2795 + $0x28] sm:$0xf]
  %v2807 = vld [vmem:[%s2795 + $0x2c] sm:$0xf]
  %v2808 = vld [vmem:[%s2795 + $0x30] sm:$0xf]
  %v2809 = vld [vmem:[%s2795 + $0x34] sm:$0xf]
  %v2810 = vld [vmem:[%s2795 + $0x38] sm:$0xf]
  %v2811 = vld [vmem:[%s2795 + $0x3c] sm:$0xf]
  %v2828 = vunpack.c.l.b16 %v2796
  %v2829 = vunpack.c.l.b16 %v2797
  %v2830 = vunpack.c.l.b16 %v2798
  %v2831 = vunpack.c.l.b16 %v2799
  %v2832 = vunpack.c.l.b16 %v2800
  %v2833 = vunpack.c.l.b16 %v2801
  %v2834 = vunpack.c.l.b16 %v2802
  %v2835 = vunpack.c.l.b16 %v2803
  %v2836 = vunpack.c.l.b16 %v2804
  %v2837 = vunpack.c.l.b16 %v2805
  %v2838 = vunpack.c.l.b16 %v2806
  %v2839 = vunpack.c.l.b16 %v2807
  %v2840 = vunpack.c.l.b16 %v2808
  %v2841 = vunpack.c.l.b16 %v2809
  %v2842 = vunpack.c.l.b16 %v2810
  %v2843 = vunpack.c.l.b16 %v2811
  %v2844 = vpack.c.b16 %v2829, %v2828
  %v2845 = vpack.c.b16 %v2831, %v2830
  %v2846 = vpack.c.b16 %v2833, %v2832
  %v2847 = vpack.c.b16 %v2835, %v2834
  %v2848 = vpack.c.b16 %v2837, %v2836
  %v2849 = vpack.c.b16 %v2839, %v2838
  %v2850 = vpack.c.b16 %v2841, %v2840
  %v2851 = vpack.c.b16 %v2843, %v2842
  %2860 = vmatprep.subr.bf16.mxu0 0
  %2861 = vmatpush1.bf16.msra.mxu0 %v2844
  %2862 = vmatprep.subr.bf16.mxu0 0
  %2863 = vmatpush1.bf16.msra.mxu0 %v2845
  %2864 = vmatprep.subr.bf16.mxu0 0
  %2865 = vmatpush1.bf16.msra.mxu0 %v2846
  %2866 = vmatprep.subr.bf16.mxu0 0
  %2867 = vmatpush1.bf16.msra.mxu0 %v2847
  %2868 = vmatprep.subr.bf16.mxu0 0
  %2869 = vmatpush1.bf16.msra.mxu0 %v2848
  %2870 = vmatprep.subr.bf16.mxu0 0
  %2871 = vmatpush1.bf16.msra.mxu0 %v2849
  %2872 = vmatprep.subr.bf16.mxu0 0
  %2873 = vmatpush1.bf16.msra.mxu0 %v2850
  %2874 = vmatprep.subr.bf16.mxu0 0
  %2875 = vmatpush1.bf16.msra.mxu0 %v2851
  %2876 = vmatprep.subr.bf16.mxu0 0
  %2877 = vmatpush1.bf16.msra.mxu0 0
  %2878 = vmatprep.subr.bf16.mxu0 0
  %2879 = vmatpush1.bf16.msra.mxu0 0
  %2880 = vmatprep.subr.bf16.mxu0 0
  %2881 = vmatpush1.bf16.msra.mxu0 0
  %2882 = vmatprep.subr.bf16.mxu0 0
  %2883 = vmatpush1.bf16.msra.mxu0 0
  %2884 = vmatprep.subr.bf16.mxu0 0
  %2885 = vmatpush1.bf16.msra.mxu0 0
  %2886 = vmatprep.subr.bf16.mxu0 0
  %2887 = vmatpush1.bf16.msra.mxu0 0
  %2888 = vmatprep.subr.bf16.mxu0 0
  %2889 = vmatpush1.bf16.msra.mxu0 0
  %2890 = vmatprep.subr.bf16.mxu0 0
  %2891 = vmatpush1.bf16.msra.mxu0 0
  %2892 = vmatprep.mubr.bf16.mxu0 0
  %2893 = vmatmul.mubr.bf16.gmra.mrb[0].mxu0 %v2181
  %v2894 = vpop.f32.mrb[0].mxu0
  %v2895 = vadd.f32 0.0, %v2894
  %v2896 = vpop.f32.mrb[0].mxu0
  %v2897 = vpop.f32.mrb[0].mxu0
  %v2898 = vadd.f32 0.0, %v2897
  %v2899 = vpop.f32.mrb[0].mxu0
  %2900 = vmatprep.mubr.bf16.mxu0 0
  %2901 = vmatmul.mubr.bf16.gmra.mrb[0].mxu0 %v2182
  %v2902 = vpop.f32.mrb[0].mxu0
  %v2903 = vadd.f32 0.0, %v2902
  %v2904 = vpop.f32.mrb[0].mxu0
  %v2905 = vpop.f32.mrb[0].mxu0
  %v2906 = vadd.f32 0.0, %v2905
  %v2907 = vpop.f32.mrb[0].mxu0
  %2908 = vmatprep.mubr.bf16.mxu0 0
  %2909 = vmatmul.mubr.bf16.gmra.mrb[0].mxu0 %v2183
  %v2910 = vpop.f32.mrb[0].mxu0
  %v2911 = vadd.f32 0.0, %v2910
  %v2912 = vpop.f32.mrb[0].mxu0
  %v2913 = vpop.f32.mrb[0].mxu0
  %v2914 = vadd.f32 0.0, %v2913
  %v2915 = vpop.f32.mrb[0].mxu0
  %2916 = vmatprep.mubr.bf16.mxu0 0
  %2917 = vmatmul.mubr.bf16.gmra.mrb[0].mxu0 %v2184
  %v2918 = vpop.f32.mrb[0].mxu0
  %v2919 = vadd.f32 0.0, %v2918
  %v2920 = vpop.f32.mrb[0].mxu0
  %v2921 = vpop.f32.mrb[0].mxu0
  %v2922 = vadd.f32 0.0, %v2921
  %v2923 = vpop.f32.mrb[0].mxu0
  %2924 = vmatprep.mubr.bf16.mxu0 0
  %2925 = vmatmul.mubr.bf16.gmra.mrb[0].mxu0 %v2185
  %v2926 = vpop.f32.mrb[0].mxu0
  %v2927 = vadd.f32 0.0, %v2926
  %v2928 = vpop.f32.mrb[0].mxu0
  %v2929 = vpop.f32.mrb[0].mxu0
  %v2930 = vadd.f32 0.0, %v2929
  %v2931 = vpop.f32.mrb[0].mxu0
  %2932 = vmatprep.mubr.bf16.mxu0 0
  %2933 = vmatmul.mubr.bf16.gmra.mrb[0].mxu0 %v2186
  %v2934 = vpop.f32.mrb[0].mxu0
  %v2935 = vadd.f32 0.0, %v2934
  %v2936 = vpop.f32.mrb[0].mxu0
  %v2937 = vpop.f32.mrb[0].mxu0
  %v2938 = vadd.f32 0.0, %v2937
  %v2939 = vpop.f32.mrb[0].mxu0
  %2940 = vmatprep.mubr.bf16.mxu0 0
  %2941 = vmatmul.mubr.bf16.gmra.mrb[0].mxu0 %v2187
  %v2942 = vpop.f32.mrb[0].mxu0
  %v2943 = vadd.f32 0.0, %v2942
  %v2944 = vpop.f32.mrb[0].mxu0
  %v2945 = vpop.f32.mrb[0].mxu0
  %v2946 = vadd.f32 0.0, %v2945
  %v2947 = vpop.f32.mrb[0].mxu0
  %2948 = vmatprep.mubr.bf16.mxu0 0
  %2949 = vmatmul.mubr.bf16.gmra.mrb[0].mxu0 %v2188
  %v2950 = vpop.f32.mrb[0].mxu0
  %v2951 = vadd.f32 0.0, %v2950
  %v2952 = vpop.f32.mrb[0].mxu0
  %v2953 = vpop.f32.mrb[0].mxu0
  %v2954 = vadd.f32 0.0, %v2953
  %v2955 = vpop.f32.mrb[0].mxu0
  %2956 = vdwg.mxu0
  %v2973 = vunpack.c.l.b16 %v2779
  %v2974 = vunpack.c.l.b16 %v2780
  %v2975 = vunpack.c.l.b16 %v2781
  %v2976 = vunpack.c.l.b16 %v2782
  %v2977 = vunpack.c.l.b16 %v2783
  %v2978 = vunpack.c.l.b16 %v2784
  %v2979 = vunpack.c.l.b16 %v2785
  %v2980 = vunpack.c.l.b16 %v2786
  %v2981 = vunpack.c.l.b16 %v2787
  %v2982 = vunpack.c.l.b16 %v2788
  %v2983 = vunpack.c.l.b16 %v2789
  %v2984 = vunpack.c.l.b16 %v2790
  %v2985 = vunpack.c.l.b16 %v2791
  %v2986 = vunpack.c.l.b16 %v2792
  %v2987 = vunpack.c.l.b16 %v2793
  %v2988 = vunpack.c.l.b16 %v2794
  %v2989 = vpack.c.b16 %v2974, %v2973
  %v2990 = vpack.c.b16 %v2976, %v2975
  %v2991 = vpack.c.b16 %v2978, %v2977
  %v2992 = vpack.c.b16 %v2980, %v2979
  %v2993 = vpack.c.b16 %v2982, %v2981
  %v2994 = vpack.c.b16 %v2984, %v2983
  %v2995 = vpack.c.b16 %v2986, %v2985
  %v2996 = vpack.c.b16 %v2988, %v2987
  %3005 = vmatprep.subr.bf16.mxu0 0
  %3006 = vmatpush1.bf16.msra.mxu0 %v2989
  %3007 = vmatprep.subr.bf16.mxu0 0
  %3008 = vmatpush1.bf16.msra.mxu0 %v2990
  %3009 = vmatprep.subr.bf16.mxu0 0
  %3010 = vmatpush1.bf16.msra.mxu0 %v2991
  %3011 = vmatprep.subr.bf16.mxu0 0
  %3012 = vmatpush1.bf16.msra.mxu0 %v2992
  %3013 = vmatprep.subr.bf16.mxu0 0
  %3014 = vmatpush1.bf16.msra.mxu0 %v2993
  %3015 = vmatprep.subr.bf16.mxu0 0
  %3016 = vmatpush1.bf16.msra.mxu0 %v2994
  %3017 = vmatprep.subr.bf16.mxu0 0
  %3018 = vmatpush1.bf16.msra.mxu0 %v2995
  %3019 = vmatprep.subr.bf16.mxu0 0
  %3020 = vmatpush1.bf16.msra.mxu0 %v2996
  %3021 = vmatprep.subr.bf16.mxu0 0
  %3022 = vmatpush1.bf16.msra.mxu0 0
  %3023 = vmatprep.subr.bf16.mxu0 0
  %3024 = vmatpush1.bf16.msra.mxu0 0
  %3025 = vmatprep.subr.bf16.mxu0 0
  %3026 = vmatpush1.bf16.msra.mxu0 0
  %3027 = vmatprep.subr.bf16.mxu0 0
  %3028 = vmatpush1.bf16.msra.mxu0 0
  %3029 = vmatprep.subr.bf16.mxu0 0
  %3030 = vmatpush1.bf16.msra.mxu0 0
  %3031 = vmatprep.subr.bf16.mxu0 0
  %3032 = vmatpush1.bf16.msra.mxu0 0
  %3033 = vmatprep.subr.bf16.mxu0 0
  %3034 = vmatpush1.bf16.msra.mxu0 0
  %3035 = vmatprep.subr.bf16.mxu0 0
  %3036 = vmatpush1.bf16.msra.mxu0 0
  %3037 = vmatprep.mubr.bf16.mxu0 0
  %3038 = vmatmul.mubr.bf16.gmra.mrb[0].mxu0 %v2157
  %v3039 = vpop.f32.mrb[0].mxu0
  %v3040 = vadd.f32 %v2895, %v3039
  %v3041 = vpop.f32.mrb[0].mxu0
  %v3042 = vpop.f32.mrb[0].mxu0
  %v3043 = vadd.f32 %v2898, %v3042
  %v3044 = vpop.f32.mrb[0].mxu0
  %3045 = vmatprep.mubr.bf16.mxu0 0
  %3046 = vmatmul.mubr.bf16.gmra.mrb[0].mxu0 %v2158
  %v3047 = vpop.f32.mrb[0].mxu0
  %v3048 = vadd.f32 %v2903, %v3047
  %v3049 = vpop.f32.mrb[0].mxu0
  %v3050 = vpop.f32.mrb[0].mxu0
  %v3051 = vadd.f32 %v2906, %v3050
  %v3052 = vpop.f32.mrb[0].mxu0
  %3053 = vmatprep.mubr.bf16.mxu0 0
  %3054 = vmatmul.mubr.bf16.gmra.mrb[0].mxu0 %v2159
  %v3055 = vpop.f32.mrb[0].mxu0
  %v3056 = vadd.f32 %v2911, %v3055
  %v3057 = vpop.f32.mrb[0].mxu0
  %v3058 = vpop.f32.mrb[0].mxu0
  %v3059 = vadd.f32 %v2914, %v3058
  %v3060 = vpop.f32.mrb[0].mxu0
  %3061 = vmatprep.mubr.bf16.mxu0 0
  %3062 = vmatmul.mubr.bf16.gmra.mrb[0].mxu0 %v2160
  %v3063 = vpop.f32.mrb[0].mxu0
  %v3064 = vadd.f32 %v2919, %v3063
  %v3065 = vpop.f32.mrb[0].mxu0
  %v3066 = vpop.f32.mrb[0].mxu0
  %v3067 = vadd.f32 %v2922, %v3066
  %v3068 = vpop.f32.mrb[0].mxu0
  %3069 = vmatprep.mubr.bf16.mxu0 0
  %3070 = vmatmul.mubr.bf16.gmra.mrb[0].mxu0 %v2161
  %v3071 = vpop.f32.mrb[0].mxu0
  %v3072 = vadd.f32 %v2927, %v3071
  %v3073 = vpop.f32.mrb[0].mxu0
  %v3074 = vpop.f32.mrb[0].mxu0
  %v3075 = vadd.f32 %v2930, %v3074
  %v3076 = vpop.f32.mrb[0].mxu0
  %3077 = vmatprep.mubr.bf16.mxu0 0
  %3078 = vmatmul.mubr.bf16.gmra.mrb[0].mxu0 %v2162
  %v3079 = vpop.f32.mrb[0].mxu0
  %v3080 = vadd.f32 %v2935, %v3079
  %v3081 = vpop.f32.mrb[0].mxu0
  %v3082 = vpop.f32.mrb[0].mxu0
  %v3083 = vadd.f32 %v2938, %v3082
  %v3084 = vpop.f32.mrb[0].mxu0
  %3085 = vmatprep.mubr.bf16.mxu0 0
  %3086 = vmatmul.mubr.bf16.gmra.mrb[0].mxu0 %v2163
  %v3087 = vpop.f32.mrb[0].mxu0
  %v3088 = vadd.f32 %v2943, %v3087
  %v3089 = vpop.f32.mrb[0].mxu0
  %v3090 = vpop.f32.mrb[0].mxu0
  %v3091 = vadd.f32 %v2946, %v3090
  %v3092 = vpop.f32.mrb[0].mxu0
  %3093 = vmatprep.mubr.bf16.mxu0 0
  %3094 = vmatmul.mubr.bf16.gmra.mrb[0].mxu0 %v2164
  %v3095 = vpop.f32.mrb[0].mxu0
  %v3096 = vadd.f32 %v2951, %v3095
  %v3097 = vpop.f32.mrb[0].mxu0
  %v3098 = vpop.f32.mrb[0].mxu0
  %v3099 = vadd.f32 %v2954, %v3098
  %v3100 = vpop.f32.mrb[0].mxu0
  %3101 = vdwg.mxu0
  %s3102 = scalar_lea.vmem %s3, 448
  %v3103 = vld [vmem:[%s3102] sm:$0xf]
  %v3104 = vld [vmem:[%s3102 + $0x4] sm:$0xf]
  %v3105 = vld [vmem:[%s3102 + $0x8] sm:$0xf]
  %v3106 = vld [vmem:[%s3102 + $0xc] sm:$0xf]
  %v3107 = vld [vmem:[%s3102 + $0x10] sm:$0xf]
  %v3108 = vld [vmem:[%s3102 + $0x14] sm:$0xf]
  %v3109 = vld [vmem:[%s3102 + $0x18] sm:$0xf]
  %v3110 = vld [vmem:[%s3102 + $0x1c] sm:$0xf]
  %v3111 = vld [vmem:[%s3102 + $0x20] sm:$0xf]
  %v3112 = vld [vmem:[%s3102 + $0x24] sm:$0xf]
  %v3113 = vld [vmem:[%s3102 + $0x28] sm:$0xf]
  %v3114 = vld [vmem:[%s3102 + $0x2c] sm:$0xf]
  %v3115 = vld [vmem:[%s3102 + $0x30] sm:$0xf]
  %v3116 = vld [vmem:[%s3102 + $0x34] sm:$0xf]
  %v3117 = vld [vmem:[%s3102 + $0x38] sm:$0xf]
  %v3118 = vld [vmem:[%s3102 + $0x3c] sm:$0xf]
  %v3135 = vunpack.c.l.b16 %v3103
  %v3136 = vunpack.c.l.b16 %v3104
  %v3137 = vunpack.c.l.b16 %v3105
  %v3138 = vunpack.c.l.b16 %v3106
  %v3139 = vunpack.c.l.b16 %v3107
  %v3140 = vunpack.c.l.b16 %v3108
  %v3141 = vunpack.c.l.b16 %v3109
  %v3142 = vunpack.c.l.b16 %v3110
  %v3143 = vunpack.c.l.b16 %v3111
  %v3144 = vunpack.c.l.b16 %v3112
  %v3145 = vunpack.c.l.b16 %v3113
  %v3146 = vunpack.c.l.b16 %v3114
  %v3147 = vunpack.c.l.b16 %v3115
  %v3148 = vunpack.c.l.b16 %v3116
  %v3149 = vunpack.c.l.b16 %v3117
  %v3150 = vunpack.c.l.b16 %v3118
  %v3151 = vpack.c.b16 %v3136, %v3135
  %v3152 = vpack.c.b16 %v3138, %v3137
  %v3153 = vpack.c.b16 %v3140, %v3139
  %v3154 = vpack.c.b16 %v3142, %v3141
  %v3155 = vpack.c.b16 %v3144, %v3143
  %v3156 = vpack.c.b16 %v3146, %v3145
  %v3157 = vpack.c.b16 %v3148, %v3147
  %v3158 = vpack.c.b16 %v3150, %v3149
  %3167 = vmatprep.subr.bf16.mxu0 0
  %3168 = vmatpush1.bf16.msra.mxu0 %v3151
  %3169 = vmatprep.subr.bf16.mxu0 0
  %3170 = vmatpush1.bf16.msra.mxu0 %v3152
  %3171 = vmatprep.subr.bf16.mxu0 0
  %3172 = vmatpush1.bf16.msra.mxu0 %v3153
  %3173 = vmatprep.subr.bf16.mxu0 0
  %3174 = vmatpush1.bf16.msra.mxu0 %v3154
  %3175 = vmatprep.subr.bf16.mxu0 0
  %3176 = vmatpush1.bf16.msra.mxu0 %v3155
  %3177 = vmatprep.subr.bf16.mxu0 0
  %3178 = vmatpush1.bf16.msra.mxu0 %v3156
  %3179 = vmatprep.subr.bf16.mxu0 0
  %3180 = vmatpush1.bf16.msra.mxu0 %v3157
  %3181 = vmatprep.subr.bf16.mxu0 0
  %3182 = vmatpush1.bf16.msra.mxu0 %v3158
  %3183 = vmatprep.subr.bf16.mxu0 0
  %3184 = vmatpush1.bf16.msra.mxu0 0
  %3185 = vmatprep.subr.bf16.mxu0 0
  %3186 = vmatpush1.bf16.msra.mxu0 0
  %3187 = vmatprep.subr.bf16.mxu0 0
  %3188 = vmatpush1.bf16.msra.mxu0 0
  %3189 = vmatprep.subr.bf16.mxu0 0
  %3190 = vmatpush1.bf16.msra.mxu0 0
  %3191 = vmatprep.subr.bf16.mxu0 0
  %3192 = vmatpush1.bf16.msra.mxu0 0
  %3193 = vmatprep.subr.bf16.mxu0 0
  %3194 = vmatpush1.bf16.msra.mxu0 0
  %3195 = vmatprep.subr.bf16.mxu0 0
  %3196 = vmatpush1.bf16.msra.mxu0 0
  %3197 = vmatprep.subr.bf16.mxu0 0
  %3198 = vmatpush1.bf16.msra.mxu0 0
  %3199 = vmatprep.mubr.bf16.mxu0 0
  %3200 = vmatmul.mubr.bf16.gmra.mrb[0].mxu0 %v2496
  %v3201 = vpop.f32.mrb[0].mxu0
  %v3202 = vadd.f32 0.0, %v3201
  %v3203 = vpop.f32.mrb[0].mxu0
  %v3204 = vpop.f32.mrb[0].mxu0
  %v3205 = vadd.f32 0.0, %v3204
  %v3206 = vpop.f32.mrb[0].mxu0
  %3207 = vmatprep.mubr.bf16.mxu0 0
  %3208 = vmatmul.mubr.bf16.gmra.mrb[0].mxu0 %v2497
  %v3209 = vpop.f32.mrb[0].mxu0
  %v3210 = vadd.f32 0.0, %v3209
  %v3211 = vpop.f32.mrb[0].mxu0
  %v3212 = vpop.f32.mrb[0].mxu0
  %v3213 = vadd.f32 0.0, %v3212
  %v3214 = vpop.f32.mrb[0].mxu0
  %3215 = vmatprep.mubr.bf16.mxu0 0
  %3216 = vmatmul.mubr.bf16.gmra.mrb[0].mxu0 %v2498
  %v3217 = vpop.f32.mrb[0].mxu0
  %v3218 = vadd.f32 0.0, %v3217
  %v3219 = vpop.f32.mrb[0].mxu0
  %v3220 = vpop.f32.mrb[0].mxu0
  %v3221 = vadd.f32 0.0, %v3220
  %v3222 = vpop.f32.mrb[0].mxu0
  %3223 = vmatprep.mubr.bf16.mxu0 0
  %3224 = vmatmul.mubr.bf16.gmra.mrb[0].mxu0 %v2499
  %v3225 = vpop.f32.mrb[0].mxu0
  %v3226 = vadd.f32 0.0, %v3225
  %v3227 = vpop.f32.mrb[0].mxu0
  %v3228 = vpop.f32.mrb[0].mxu0
  %v3229 = vadd.f32 0.0, %v3228
  %v3230 = vpop.f32.mrb[0].mxu0
  %3231 = vmatprep.mubr.bf16.mxu0 0
  %3232 = vmatmul.mubr.bf16.gmra.mrb[0].mxu0 %v2500
  %v3233 = vpop.f32.mrb[0].mxu0
  %v3234 = vadd.f32 0.0, %v3233
  %v3235 = vpop.f32.mrb[0].mxu0
  %v3236 = vpop.f32.mrb[0].mxu0
  %v3237 = vadd.f32 0.0, %v3236
  %v3238 = vpop.f32.mrb[0].mxu0
  %3239 = vmatprep.mubr.bf16.mxu0 0
  %3240 = vmatmul.mubr.bf16.gmra.mrb[0].mxu0 %v2501
  %v3241 = vpop.f32.mrb[0].mxu0
  %v3242 = vadd.f32 0.0, %v3241
  %v3243 = vpop.f32.mrb[0].mxu0
  %v3244 = vpop.f32.mrb[0].mxu0
  %v3245 = vadd.f32 0.0, %v3244
  %v3246 = vpop.f32.mrb[0].mxu0
  %3247 = vmatprep.mubr.bf16.mxu0 0
  %3248 = vmatmul.mubr.bf16.gmra.mrb[0].mxu0 %v2502
  %v3249 = vpop.f32.mrb[0].mxu0
  %v3250 = vadd.f32 0.0, %v3249
  %v3251 = vpop.f32.mrb[0].mxu0
  %v3252 = vpop.f32.mrb[0].mxu0
  %v3253 = vadd.f32 0.0, %v3252
  %v3254 = vpop.f32.mrb[0].mxu0
  %3255 = vmatprep.mubr.bf16.mxu0 0
  %3256 = vmatmul.mubr.bf16.gmra.mrb[0].mxu0 %v2503
  %v3257 = vpop.f32.mrb[0].mxu0
  %v3258 = vadd.f32 0.0, %v3257
  %v3259 = vpop.f32.mrb[0].mxu0
  %v3260 = vpop.f32.mrb[0].mxu0
  %v3261 = vadd.f32 0.0, %v3260
  %v3262 = vpop.f32.mrb[0].mxu0
  %3263 = vdwg.mxu0
  %v3264 = vadd.f32 %v3040, %v3202
  %v3265 = vadd.f32 %v3043, %v3205
  %v3266 = vadd.f32 %v3048, %v3210
  %v3267 = vadd.f32 %v3051, %v3213
  %v3268 = vadd.f32 %v3056, %v3218
  %v3269 = vadd.f32 %v3059, %v3221
  %v3270 = vadd.f32 %v3064, %v3226
  %v3271 = vadd.f32 %v3067, %v3229
  %v3272 = vadd.f32 %v3072, %v3234
  %v3273 = vadd.f32 %v3075, %v3237
  %v3274 = vadd.f32 %v3080, %v3242
  %v3275 = vadd.f32 %v3083, %v3245
  %v3276 = vadd.f32 %v3088, %v3250
  %v3277 = vadd.f32 %v3091, %v3253
  %v3278 = vadd.f32 %v3096, %v3258
  %v3279 = vadd.f32 %v3099, %v3261
  %v3280 = vadd.f32 %v2762, %v3264
  %v3281 = vadd.f32 %v2763, %v3265
  %v3282 = vadd.f32 %v2764, %v3266
  %v3283 = vadd.f32 %v2765, %v3267
  %v3284 = vadd.f32 %v2766, %v3268
  %v3285 = vadd.f32 %v2767, %v3269
  %v3286 = vadd.f32 %v2768, %v3270
  %v3287 = vadd.f32 %v2769, %v3271
  %v3288 = vadd.f32 %v2770, %v3272
  %v3289 = vadd.f32 %v2771, %v3273
  %v3290 = vadd.f32 %v2772, %v3274
  %v3291 = vadd.f32 %v2773, %v3275
  %v3292 = vadd.f32 %v2774, %v3276
  %v3293 = vadd.f32 %v2775, %v3277
  %v3294 = vadd.f32 %v2776, %v3278
  %v3295 = vadd.f32 %v2777, %v3279
  %s3296 = scalar_lea.vmem %s3, 128
  %v3297 = vld [vmem:[%s3296] sm:$0xf]
  %v3298 = vld [vmem:[%s3296 + $0x4] sm:$0xf]
  %v3299 = vld [vmem:[%s3296 + $0x8] sm:$0xf]
  %v3300 = vld [vmem:[%s3296 + $0xc] sm:$0xf]
  %v3301 = vld [vmem:[%s3296 + $0x10] sm:$0xf]
  %v3302 = vld [vmem:[%s3296 + $0x14] sm:$0xf]
  %v3303 = vld [vmem:[%s3296 + $0x18] sm:$0xf]
  %v3304 = vld [vmem:[%s3296 + $0x1c] sm:$0xf]
  %v3305 = vld [vmem:[%s3296 + $0x20] sm:$0xf]
  %v3306 = vld [vmem:[%s3296 + $0x24] sm:$0xf]
  %v3307 = vld [vmem:[%s3296 + $0x28] sm:$0xf]
  %v3308 = vld [vmem:[%s3296 + $0x2c] sm:$0xf]
  %v3309 = vld [vmem:[%s3296 + $0x30] sm:$0xf]
  %v3310 = vld [vmem:[%s3296 + $0x34] sm:$0xf]
  %v3311 = vld [vmem:[%s3296 + $0x38] sm:$0xf]
  %v3312 = vld [vmem:[%s3296 + $0x3c] sm:$0xf]
  %s3313 = scalar_lea.vmem %s3, 320
  %v3314 = vld [vmem:[%s3313] sm:$0xf]
  %v3315 = vld [vmem:[%s3313 + $0x4] sm:$0xf]
  %v3316 = vld [vmem:[%s3313 + $0x8] sm:$0xf]
  %v3317 = vld [vmem:[%s3313 + $0xc] sm:$0xf]
  %v3318 = vld [vmem:[%s3313 + $0x10] sm:$0xf]
  %v3319 = vld [vmem:[%s3313 + $0x14] sm:$0xf]
  %v3320 = vld [vmem:[%s3313 + $0x18] sm:$0xf]
  %v3321 = vld [vmem:[%s3313 + $0x1c] sm:$0xf]
  %v3322 = vld [vmem:[%s3313 + $0x20] sm:$0xf]
  %v3323 = vld [vmem:[%s3313 + $0x24] sm:$0xf]
  %v3324 = vld [vmem:[%s3313 + $0x28] sm:$0xf]
  %v3325 = vld [vmem:[%s3313 + $0x2c] sm:$0xf]
  %v3326 = vld [vmem:[%s3313 + $0x30] sm:$0xf]
  %v3327 = vld [vmem:[%s3313 + $0x34] sm:$0xf]
  %v3328 = vld [vmem:[%s3313 + $0x38] sm:$0xf]
  %v3329 = vld [vmem:[%s3313 + $0x3c] sm:$0xf]
  %v3346 = vunpack.c.l.b16 %v3314
  %v3347 = vunpack.c.l.b16 %v3315
  %v3348 = vunpack.c.l.b16 %v3316
  %v3349 = vunpack.c.l.b16 %v3317
  %v3350 = vunpack.c.l.b16 %v3318
  %v3351 = vunpack.c.l.b16 %v3319
  %v3352 = vunpack.c.l.b16 %v3320
  %v3353 = vunpack.c.l.b16 %v3321
  %v3354 = vunpack.c.l.b16 %v3322
  %v3355 = vunpack.c.l.b16 %v3323
  %v3356 = vunpack.c.l.b16 %v3324
  %v3357 = vunpack.c.l.b16 %v3325
  %v3358 = vunpack.c.l.b16 %v3326
  %v3359 = vunpack.c.l.b16 %v3327
  %v3360 = vunpack.c.l.b16 %v3328
  %v3361 = vunpack.c.l.b16 %v3329
  %v3362 = vpack.c.b16 %v3347, %v3346
  %v3363 = vpack.c.b16 %v3349, %v3348
  %v3364 = vpack.c.b16 %v3351, %v3350
  %v3365 = vpack.c.b16 %v3353, %v3352
  %v3366 = vpack.c.b16 %v3355, %v3354
  %v3367 = vpack.c.b16 %v3357, %v3356
  %v3368 = vpack.c.b16 %v3359, %v3358
  %v3369 = vpack.c.b16 %v3361, %v3360
  %3378 = vmatprep.subr.bf16.mxu0 0
  %3379 = vmatpush1.bf16.msra.mxu0 %v3362
  %3380 = vmatprep.subr.bf16.mxu0 0
  %3381 = vmatpush1.bf16.msra.mxu0 %v3363
  %3382 = vmatprep.subr.bf16.mxu0 0
  %3383 = vmatpush1.bf16.msra.mxu0 %v3364
  %3384 = vmatprep.subr.bf16.mxu0 0
  %3385 = vmatpush1.bf16.msra.mxu0 %v3365
  %3386 = vmatprep.subr.bf16.mxu0 0
  %3387 = vmatpush1.bf16.msra.mxu0 %v3366
  %3388 = vmatprep.subr.bf16.mxu0 0
  %3389 = vmatpush1.bf16.msra.mxu0 %v3367
  %3390 = vmatprep.subr.bf16.mxu0 0
  %3391 = vmatpush1.bf16.msra.mxu0 %v3368
  %3392 = vmatprep.subr.bf16.mxu0 0
  %3393 = vmatpush1.bf16.msra.mxu0 %v3369
  %3394 = vmatprep.subr.bf16.mxu0 0
  %3395 = vmatpush1.bf16.msra.mxu0 0
  %3396 = vmatprep.subr.bf16.mxu0 0
  %3397 = vmatpush1.bf16.msra.mxu0 0
  %3398 = vmatprep.subr.bf16.mxu0 0
  %3399 = vmatpush1.bf16.msra.mxu0 0
  %3400 = vmatprep.subr.bf16.mxu0 0
  %3401 = vmatpush1.bf16.msra.mxu0 0
  %3402 = vmatprep.subr.bf16.mxu0 0
  %3403 = vmatpush1.bf16.msra.mxu0 0
  %3404 = vmatprep.subr.bf16.mxu0 0
  %3405 = vmatpush1.bf16.msra.mxu0 0
  %3406 = vmatprep.subr.bf16.mxu0 0
  %3407 = vmatpush1.bf16.msra.mxu0 0
  %3408 = vmatprep.subr.bf16.mxu0 0
  %3409 = vmatpush1.bf16.msra.mxu0 0
  %3410 = vmatprep.mubr.bf16.mxu0 0
  %3411 = vmatmul.mubr.bf16.gmra.mrb[0].mxu0 %v2181
  %v3412 = vpop.f32.mrb[0].mxu0
  %v3413 = vadd.f32 0.0, %v3412
  %v3414 = vpop.f32.mrb[0].mxu0
  %v3415 = vpop.f32.mrb[0].mxu0
  %v3416 = vadd.f32 0.0, %v3415
  %v3417 = vpop.f32.mrb[0].mxu0
  %3418 = vmatprep.mubr.bf16.mxu0 0
  %3419 = vmatmul.mubr.bf16.gmra.mrb[0].mxu0 %v2182
  %v3420 = vpop.f32.mrb[0].mxu0
  %v3421 = vadd.f32 0.0, %v3420
  %v3422 = vpop.f32.mrb[0].mxu0
  %v3423 = vpop.f32.mrb[0].mxu0
  %v3424 = vadd.f32 0.0, %v3423
  %v3425 = vpop.f32.mrb[0].mxu0
  %3426 = vmatprep.mubr.bf16.mxu0 0
  %3427 = vmatmul.mubr.bf16.gmra.mrb[0].mxu0 %v2183
  %v3428 = vpop.f32.mrb[0].mxu0
  %v3429 = vadd.f32 0.0, %v3428
  %v3430 = vpop.f32.mrb[0].mxu0
  %v3431 = vpop.f32.mrb[0].mxu0
  %v3432 = vadd.f32 0.0, %v3431
  %v3433 = vpop.f32.mrb[0].mxu0
  %3434 = vmatprep.mubr.bf16.mxu0 0
  %3435 = vmatmul.mubr.bf16.gmra.mrb[0].mxu0 %v2184
  %v3436 = vpop.f32.mrb[0].mxu0
  %v3437 = vadd.f32 0.0, %v3436
  %v3438 = vpop.f32.mrb[0].mxu0
  %v3439 = vpop.f32.mrb[0].mxu0
  %v3440 = vadd.f32 0.0, %v3439
  %v3441 = vpop.f32.mrb[0].mxu0
  %3442 = vmatprep.mubr.bf16.mxu0 0
  %3443 = vmatmul.mubr.bf16.gmra.mrb[0].mxu0 %v2185
  %v3444 = vpop.f32.mrb[0].mxu0
  %v3445 = vadd.f32 0.0, %v3444
  %v3446 = vpop.f32.mrb[0].mxu0
  %v3447 = vpop.f32.mrb[0].mxu0
  %v3448 = vadd.f32 0.0, %v3447
  %v3449 = vpop.f32.mrb[0].mxu0
  %3450 = vmatprep.mubr.bf16.mxu0 0
  %3451 = vmatmul.mubr.bf16.gmra.mrb[0].mxu0 %v2186
  %v3452 = vpop.f32.mrb[0].mxu0
  %v3453 = vadd.f32 0.0, %v3452
  %v3454 = vpop.f32.mrb[0].mxu0
  %v3455 = vpop.f32.mrb[0].mxu0
  %v3456 = vadd.f32 0.0, %v3455
  %v3457 = vpop.f32.mrb[0].mxu0
  %3458 = vmatprep.mubr.bf16.mxu0 0
  %3459 = vmatmul.mubr.bf16.gmra.mrb[0].mxu0 %v2187
  %v3460 = vpop.f32.mrb[0].mxu0
  %v3461 = vadd.f32 0.0, %v3460
  %v3462 = vpop.f32.mrb[0].mxu0
  %v3463 = vpop.f32.mrb[0].mxu0
  %v3464 = vadd.f32 0.0, %v3463
  %v3465 = vpop.f32.mrb[0].mxu0
  %3466 = vmatprep.mubr.bf16.mxu0 0
  %3467 = vmatmul.mubr.bf16.gmra.mrb[0].mxu0 %v2188
  %v3468 = vpop.f32.mrb[0].mxu0
  %v3469 = vadd.f32 0.0, %v3468
  %v3470 = vpop.f32.mrb[0].mxu0
  %v3471 = vpop.f32.mrb[0].mxu0
  %v3472 = vadd.f32 0.0, %v3471
  %v3473 = vpop.f32.mrb[0].mxu0
  %3474 = vdwg.mxu0
  %v3491 = vunpack.c.l.b16 %v3297
  %v3492 = vunpack.c.l.b16 %v3298
  %v3493 = vunpack.c.l.b16 %v3299
  %v3494 = vunpack.c.l.b16 %v3300
  %v3495 = vunpack.c.l.b16 %v3301
  %v3496 = vunpack.c.l.b16 %v3302
  %v3497 = vunpack.c.l.b16 %v3303
  %v3498 = vunpack.c.l.b16 %v3304
  %v3499 = vunpack.c.l.b16 %v3305
  %v3500 = vunpack.c.l.b16 %v3306
  %v3501 = vunpack.c.l.b16 %v3307
  %v3502 = vunpack.c.l.b16 %v3308
  %v3503 = vunpack.c.l.b16 %v3309
  %v3504 = vunpack.c.l.b16 %v3310
  %v3505 = vunpack.c.l.b16 %v3311
  %v3506 = vunpack.c.l.b16 %v3312
  %v3507 = vpack.c.b16 %v3492, %v3491
  %v3508 = vpack.c.b16 %v3494, %v3493
  %v3509 = vpack.c.b16 %v3496, %v3495
  %v3510 = vpack.c.b16 %v3498, %v3497
  %v3511 = vpack.c.b16 %v3500, %v3499
  %v3512 = vpack.c.b16 %v3502, %v3501
  %v3513 = vpack.c.b16 %v3504, %v3503
  %v3514 = vpack.c.b16 %v3506, %v3505
  %3523 = vmatprep.subr.bf16.mxu0 0
  %3524 = vmatpush1.bf16.msra.mxu0 %v3507
  %3525 = vmatprep.subr.bf16.mxu0 0
  %3526 = vmatpush1.bf16.msra.mxu0 %v3508
  %3527 = vmatprep.subr.bf16.mxu0 0
  %3528 = vmatpush1.bf16.msra.mxu0 %v3509
  %3529 = vmatprep.subr.bf16.mxu0 0
  %3530 = vmatpush1.bf16.msra.mxu0 %v3510
  %3531 = vmatprep.subr.bf16.mxu0 0
  %3532 = vmatpush1.bf16.msra.mxu0 %v3511
  %3533 = vmatprep.subr.bf16.mxu0 0
  %3534 = vmatpush1.bf16.msra.mxu0 %v3512
  %3535 = vmatprep.subr.bf16.mxu0 0
  %3536 = vmatpush1.bf16.msra.mxu0 %v3513
  %3537 = vmatprep.subr.bf16.mxu0 0
  %3538 = vmatpush1.bf16.msra.mxu0 %v3514
  %3539 = vmatprep.subr.bf16.mxu0 0
  %3540 = vmatpush1.bf16.msra.mxu0 0
  %3541 = vmatprep.subr.bf16.mxu0 0
  %3542 = vmatpush1.bf16.msra.mxu0 0
  %3543 = vmatprep.subr.bf16.mxu0 0
  %3544 = vmatpush1.bf16.msra.mxu0 0
  %3545 = vmatprep.subr.bf16.mxu0 0
  %3546 = vmatpush1.bf16.msra.mxu0 0
  %3547 = vmatprep.subr.bf16.mxu0 0
  %3548 = vmatpush1.bf16.msra.mxu0 0
  %3549 = vmatprep.subr.bf16.mxu0 0
  %3550 = vmatpush1.bf16.msra.mxu0 0
  %3551 = vmatprep.subr.bf16.mxu0 0
  %3552 = vmatpush1.bf16.msra.mxu0 0
  %3553 = vmatprep.subr.bf16.mxu0 0
  %3554 = vmatpush1.bf16.msra.mxu0 0
  %3555 = vmatprep.mubr.bf16.mxu0 0
  %3556 = vmatmul.mubr.bf16.gmra.mrb[0].mxu0 %v2157
  %v3557 = vpop.f32.mrb[0].mxu0
  %v3558 = vadd.f32 %v3413, %v3557
  %v3559 = vpop.f32.mrb[0].mxu0
  %v3560 = vpop.f32.mrb[0].mxu0
  %v3561 = vadd.f32 %v3416, %v3560
  %v3562 = vpop.f32.mrb[0].mxu0
  %3563 = vmatprep.mubr.bf16.mxu0 0
  %3564 = vmatmul.mubr.bf16.gmra.mrb[0].mxu0 %v2158
  %v3565 = vpop.f32.mrb[0].mxu0
  %v3566 = vadd.f32 %v3421, %v3565
  %v3567 = vpop.f32.mrb[0].mxu0
  %v3568 = vpop.f32.mrb[0].mxu0
  %v3569 = vadd.f32 %v3424, %v3568
  %v3570 = vpop.f32.mrb[0].mxu0
  %3571 = vmatprep.mubr.bf16.mxu0 0
  %3572 = vmatmul.mubr.bf16.gmra.mrb[0].mxu0 %v2159
  %v3573 = vpop.f32.mrb[0].mxu0
  %v3574 = vadd.f32 %v3429, %v3573
  %v3575 = vpop.f32.mrb[0].mxu0
  %v3576 = vpop.f32.mrb[0].mxu0
  %v3577 = vadd.f32 %v3432, %v3576
  %v3578 = vpop.f32.mrb[0].mxu0
  %3579 = vmatprep.mubr.bf16.mxu0 0
  %3580 = vmatmul.mubr.bf16.gmra.mrb[0].mxu0 %v2160
  %v3581 = vpop.f32.mrb[0].mxu0
  %v3582 = vadd.f32 %v3437, %v3581
  %v3583 = vpop.f32.mrb[0].mxu0
  %v3584 = vpop.f32.mrb[0].mxu0
  %v3585 = vadd.f32 %v3440, %v3584
  %v3586 = vpop.f32.mrb[0].mxu0
  %3587 = vmatprep.mubr.bf16.mxu0 0
  %3588 = vmatmul.mubr.bf16.gmra.mrb[0].mxu0 %v2161
  %v3589 = vpop.f32.mrb[0].mxu0
  %v3590 = vadd.f32 %v3445, %v3589
  %v3591 = vpop.f32.mrb[0].mxu0
  %v3592 = vpop.f32.mrb[0].mxu0
  %v3593 = vadd.f32 %v3448, %v3592
  %v3594 = vpop.f32.mrb[0].mxu0
  %3595 = vmatprep.mubr.bf16.mxu0 0
  %3596 = vmatmul.mubr.bf16.gmra.mrb[0].mxu0 %v2162
  %v3597 = vpop.f32.mrb[0].mxu0
  %v3598 = vadd.f32 %v3453, %v3597
  %v3599 = vpop.f32.mrb[0].mxu0
  %v3600 = vpop.f32.mrb[0].mxu0
  %v3601 = vadd.f32 %v3456, %v3600
  %v3602 = vpop.f32.mrb[0].mxu0
  %3603 = vmatprep.mubr.bf16.mxu0 0
  %3604 = vmatmul.mubr.bf16.gmra.mrb[0].mxu0 %v2163
  %v3605 = vpop.f32.mrb[0].mxu0
  %v3606 = vadd.f32 %v3461, %v3605
  %v3607 = vpop.f32.mrb[0].mxu0
  %v3608 = vpop.f32.mrb[0].mxu0
  %v3609 = vadd.f32 %v3464, %v3608
  %v3610 = vpop.f32.mrb[0].mxu0
  %3611 = vmatprep.mubr.bf16.mxu0 0
  %3612 = vmatmul.mubr.bf16.gmra.mrb[0].mxu0 %v2164
  %v3613 = vpop.f32.mrb[0].mxu0
  %v3614 = vadd.f32 %v3469, %v3613
  %v3615 = vpop.f32.mrb[0].mxu0
  %v3616 = vpop.f32.mrb[0].mxu0
  %v3617 = vadd.f32 %v3472, %v3616
  %v3618 = vpop.f32.mrb[0].mxu0
  %3619 = vdwg.mxu0
  %s3620 = scalar_lea.vmem %s3, 512
  %v3621 = vld [vmem:[%s3620] sm:$0xf]
  %v3622 = vld [vmem:[%s3620 + $0x4] sm:$0xf]
  %v3623 = vld [vmem:[%s3620 + $0x8] sm:$0xf]
  %v3624 = vld [vmem:[%s3620 + $0xc] sm:$0xf]
  %v3625 = vld [vmem:[%s3620 + $0x10] sm:$0xf]
  %v3626 = vld [vmem:[%s3620 + $0x14] sm:$0xf]
  %v3627 = vld [vmem:[%s3620 + $0x18] sm:$0xf]
  %v3628 = vld [vmem:[%s3620 + $0x1c] sm:$0xf]
  %v3629 = vld [vmem:[%s3620 + $0x20] sm:$0xf]
  %v3630 = vld [vmem:[%s3620 + $0x24] sm:$0xf]
  %v3631 = vld [vmem:[%s3620 + $0x28] sm:$0xf]
  %v3632 = vld [vmem:[%s3620 + $0x2c] sm:$0xf]
  %v3633 = vld [vmem:[%s3620 + $0x30] sm:$0xf]
  %v3634 = vld [vmem:[%s3620 + $0x34] sm:$0xf]
  %v3635 = vld [vmem:[%s3620 + $0x38] sm:$0xf]
  %v3636 = vld [vmem:[%s3620 + $0x3c] sm:$0xf]
  %v3653 = vunpack.c.l.b16 %v3621
  %v3654 = vunpack.c.l.b16 %v3622
  %v3655 = vunpack.c.l.b16 %v3623
  %v3656 = vunpack.c.l.b16 %v3624
  %v3657 = vunpack.c.l.b16 %v3625
  %v3658 = vunpack.c.l.b16 %v3626
  %v3659 = vunpack.c.l.b16 %v3627
  %v3660 = vunpack.c.l.b16 %v3628
  %v3661 = vunpack.c.l.b16 %v3629
  %v3662 = vunpack.c.l.b16 %v3630
  %v3663 = vunpack.c.l.b16 %v3631
  %v3664 = vunpack.c.l.b16 %v3632
  %v3665 = vunpack.c.l.b16 %v3633
  %v3666 = vunpack.c.l.b16 %v3634
  %v3667 = vunpack.c.l.b16 %v3635
  %v3668 = vunpack.c.l.b16 %v3636
  %v3669 = vpack.c.b16 %v3654, %v3653
  %v3670 = vpack.c.b16 %v3656, %v3655
  %v3671 = vpack.c.b16 %v3658, %v3657
  %v3672 = vpack.c.b16 %v3660, %v3659
  %v3673 = vpack.c.b16 %v3662, %v3661
  %v3674 = vpack.c.b16 %v3664, %v3663
  %v3675 = vpack.c.b16 %v3666, %v3665
  %v3676 = vpack.c.b16 %v3668, %v3667
  %3685 = vmatprep.subr.bf16.mxu0 0
  %3686 = vmatpush1.bf16.msra.mxu0 %v3669
  %3687 = vmatprep.subr.bf16.mxu0 0
  %3688 = vmatpush1.bf16.msra.mxu0 %v3670
  %3689 = vmatprep.subr.bf16.mxu0 0
  %3690 = vmatpush1.bf16.msra.mxu0 %v3671
  %3691 = vmatprep.subr.bf16.mxu0 0
  %3692 = vmatpush1.bf16.msra.mxu0 %v3672
  %3693 = vmatprep.subr.bf16.mxu0 0
  %3694 = vmatpush1.bf16.msra.mxu0 %v3673
  %3695 = vmatprep.subr.bf16.mxu0 0
  %3696 = vmatpush1.bf16.msra.mxu0 %v3674
  %3697 = vmatprep.subr.bf16.mxu0 0
  %3698 = vmatpush1.bf16.msra.mxu0 %v3675
  %3699 = vmatprep.subr.bf16.mxu0 0
  %3700 = vmatpush1.bf16.msra.mxu0 %v3676
  %3701 = vmatprep.subr.bf16.mxu0 0
  %3702 = vmatpush1.bf16.msra.mxu0 0
  %3703 = vmatprep.subr.bf16.mxu0 0
  %3704 = vmatpush1.bf16.msra.mxu0 0
  %3705 = vmatprep.subr.bf16.mxu0 0
  %3706 = vmatpush1.bf16.msra.mxu0 0
  %3707 = vmatprep.subr.bf16.mxu0 0
  %3708 = vmatpush1.bf16.msra.mxu0 0
  %3709 = vmatprep.subr.bf16.mxu0 0
  %3710 = vmatpush1.bf16.msra.mxu0 0
  %3711 = vmatprep.subr.bf16.mxu0 0
  %3712 = vmatpush1.bf16.msra.mxu0 0
  %3713 = vmatprep.subr.bf16.mxu0 0
  %3714 = vmatpush1.bf16.msra.mxu0 0
  %3715 = vmatprep.subr.bf16.mxu0 0
  %3716 = vmatpush1.bf16.msra.mxu0 0
  %3717 = vmatprep.mubr.bf16.mxu0 0
  %3718 = vmatmul.mubr.bf16.gmra.mrb[0].mxu0 %v2496
  %v3719 = vpop.f32.mrb[0].mxu0
  %v3720 = vadd.f32 0.0, %v3719
  %v3721 = vpop.f32.mrb[0].mxu0
  %v3722 = vpop.f32.mrb[0].mxu0
  %v3723 = vadd.f32 0.0, %v3722
  %v3724 = vpop.f32.mrb[0].mxu0
  %3725 = vmatprep.mubr.bf16.mxu0 0
  %3726 = vmatmul.mubr.bf16.gmra.mrb[0].mxu0 %v2497
  %v3727 = vpop.f32.mrb[0].mxu0
  %v3728 = vadd.f32 0.0, %v3727
  %v3729 = vpop.f32.mrb[0].mxu0
  %v3730 = vpop.f32.mrb[0].mxu0
  %v3731 = vadd.f32 0.0, %v3730
  %v3732 = vpop.f32.mrb[0].mxu0
  %3733 = vmatprep.mubr.bf16.mxu0 0
  %3734 = vmatmul.mubr.bf16.gmra.mrb[0].mxu0 %v2498
  %v3735 = vpop.f32.mrb[0].mxu0
  %v3736 = vadd.f32 0.0, %v3735
  %v3737 = vpop.f32.mrb[0].mxu0
  %v3738 = vpop.f32.mrb[0].mxu0
  %v3739 = vadd.f32 0.0, %v3738
  %v3740 = vpop.f32.mrb[0].mxu0
  %3741 = vmatprep.mubr.bf16.mxu0 0
  %3742 = vmatmul.mubr.bf16.gmra.mrb[0].mxu0 %v2499
  %v3743 = vpop.f32.mrb[0].mxu0
  %v3744 = vadd.f32 0.0, %v3743
  %v3745 = vpop.f32.mrb[0].mxu0
  %v3746 = vpop.f32.mrb[0].mxu0
  %v3747 = vadd.f32 0.0, %v3746
  %v3748 = vpop.f32.mrb[0].mxu0
  %3749 = vmatprep.mubr.bf16.mxu0 0
  %3750 = vmatmul.mubr.bf16.gmra.mrb[0].mxu0 %v2500
  %v3751 = vpop.f32.mrb[0].mxu0
  %v3752 = vadd.f32 0.0, %v3751
  %v3753 = vpop.f32.mrb[0].mxu0
  %v3754 = vpop.f32.mrb[0].mxu0
  %v3755 = vadd.f32 0.0, %v3754
  %v3756 = vpop.f32.mrb[0].mxu0
  %3757 = vmatprep.mubr.bf16.mxu0 0
  %3758 = vmatmul.mubr.bf16.gmra.mrb[0].mxu0 %v2501
  %v3759 = vpop.f32.mrb[0].mxu0
  %v3760 = vadd.f32 0.0, %v3759
  %v3761 = vpop.f32.mrb[0].mxu0
  %v3762 = vpop.f32.mrb[0].mxu0
  %v3763 = vadd.f32 0.0, %v3762
  %v3764 = vpop.f32.mrb[0].mxu0
  %3765 = vmatprep.mubr.bf16.mxu0 0
  %3766 = vmatmul.mubr.bf16.gmra.mrb[0].mxu0 %v2502
  %v3767 = vpop.f32.mrb[0].mxu0
  %v3768 = vadd.f32 0.0, %v3767
  %v3769 = vpop.f32.mrb[0].mxu0
  %v3770 = vpop.f32.mrb[0].mxu0
  %v3771 = vadd.f32 0.0, %v3770
  %v3772 = vpop.f32.mrb[0].mxu0
  %3773 = vmatprep.mubr.bf16.mxu0 0
  %3774 = vmatmul.mubr.bf16.gmra.mrb[0].mxu0 %v2503
  %v3775 = vpop.f32.mrb[0].mxu0
  %v3776 = vadd.f32 0.0, %v3775
  %v3777 = vpop.f32.mrb[0].mxu0
  %v3778 = vpop.f32.mrb[0].mxu0
  %v3779 = vadd.f32 0.0, %v3778
  %v3780 = vpop.f32.mrb[0].mxu0
  %3781 = vdwg.mxu0
  %v3782 = vadd.f32 %v3558, %v3720
  %v3783 = vadd.f32 %v3561, %v3723
  %v3784 = vadd.f32 %v3566, %v3728
  %v3785 = vadd.f32 %v3569, %v3731
  %v3786 = vadd.f32 %v3574, %v3736
  %v3787 = vadd.f32 %v3577, %v3739
  %v3788 = vadd.f32 %v3582, %v3744
  %v3789 = vadd.f32 %v3585, %v3747
  %v3790 = vadd.f32 %v3590, %v3752
  %v3791 = vadd.f32 %v3593, %v3755
  %v3792 = vadd.f32 %v3598, %v3760
  %v3793 = vadd.f32 %v3601, %v3763
  %v3794 = vadd.f32 %v3606, %v3768
  %v3795 = vadd.f32 %v3609, %v3771
  %v3796 = vadd.f32 %v3614, %v3776
  %v3797 = vadd.f32 %v3617, %v3779
  %v3814 = vrot.slane %v3782, 1
  %v3815 = vrot.slane %v3783, 1
  %v3816 = vsel %vm1989, %v3814, %v3815
  %v3817 = vrot.slane %v3784, 1
  %v3818 = vsel %vm1989, %v3815, %v3817
  %v3819 = vrot.slane %v3785, 1
  %v3820 = vsel %vm1989, %v3817, %v3819
  %v3821 = vrot.slane %v3786, 1
  %v3822 = vsel %vm1989, %v3819, %v3821
  %v3823 = vrot.slane %v3787, 1
  %v3824 = vsel %vm1989, %v3821, %v3823
  %v3825 = vrot.slane %v3788, 1
  %v3826 = vsel %vm1989, %v3823, %v3825
  %v3827 = vrot.slane %v3789, 1
  %v3828 = vsel %vm1989, %v3825, %v3827
  %v3829 = vrot.slane %v3790, 1
  %v3830 = vsel %vm1989, %v3827, %v3829
  %v3831 = vrot.slane %v3791, 1
  %v3832 = vsel %vm1989, %v3829, %v3831
  %v3833 = vrot.slane %v3792, 1
  %v3834 = vsel %vm1989, %v3831, %v3833
  %v3835 = vrot.slane %v3793, 1
  %v3836 = vsel %vm1989, %v3833, %v3835
  %v3837 = vrot.slane %v3794, 1
  %v3838 = vsel %vm1989, %v3835, %v3837
  %v3839 = vrot.slane %v3795, 1
  %v3840 = vsel %vm1989, %v3837, %v3839
  %v3841 = vrot.slane %v3796, 1
  %v3842 = vsel %vm1989, %v3839, %v3841
  %v3843 = vrot.slane %v3797, 1
  %v3844 = vsel %vm1989, %v3841, %v3843
  %v3861 = vsel %vm1989, %v3843, 0.0
  %v3862 = vsel %vm2054, %v3816, 0.0
  %v3863 = vsel %vm2055, %v3818, 0.0
  %v3864 = vsel %vm2056, %v3820, 0.0
  %v3865 = vsel %vm2057, %v3822, 0.0
  %v3866 = vsel %vm2058, %v3824, 0.0
  %v3867 = vsel %vm2059, %v3826, 0.0
  %v3868 = vsel %vm2060, %v3828, 0.0
  %v3869 = vsel %vm2061, %v3830, 0.0
  %v3870 = vsel %vm2062, %v3832, 0.0
  %v3871 = vsel %vm2063, %v3834, 0.0
  %v3872 = vsel %vm2064, %v3836, 0.0
  %v3873 = vsel %vm2065, %v3838, 0.0
  %v3874 = vsel %vm2066, %v3840, 0.0
  %v3875 = vsel %vm2067, %v3842, 0.0
  %v3876 = vsel %vm2068, %v3844, 0.0
  %v3877 = vsel %vm2069, %v3861, 0.0
  %v3878 = vadd.f32 %v3280, %v3862
  %v3879 = vadd.f32 %v3281, %v3863
  %v3880 = vadd.f32 %v3282, %v3864
  %v3881 = vadd.f32 %v3283, %v3865
  %v3882 = vadd.f32 %v3284, %v3866
  %v3883 = vadd.f32 %v3285, %v3867
  %v3884 = vadd.f32 %v3286, %v3868
  %v3885 = vadd.f32 %v3287, %v3869
  %v3886 = vadd.f32 %v3288, %v3870
  %v3887 = vadd.f32 %v3289, %v3871
  %v3888 = vadd.f32 %v3290, %v3872
  %v3889 = vadd.f32 %v3291, %v3873
  %v3890 = vadd.f32 %v3292, %v3874
  %v3891 = vadd.f32 %v3293, %v3875
  %v3892 = vadd.f32 %v3294, %v3876
  %v3893 = vadd.f32 %v3295, %v3877
  %v3894 = vld [vmem:[%s4] sm:$0x1]
  %v3896 = vlaneseq
  %v3897 = vshrl.u32 %v3896, 7
  %v3898 = vsub.s32 0, %v3897
  %v3899 = vrot.slane %v3894, %v3898
  %v3901 = vadd.f32 %v3878, %v3899
  %v3902 = vadd.f32 %v3879, %v3899
  %v3903 = vadd.f32 %v3880, %v3899
  %v3904 = vadd.f32 %v3881, %v3899
  %v3905 = vadd.f32 %v3882, %v3899
  %v3906 = vadd.f32 %v3883, %v3899
  %v3907 = vadd.f32 %v3884, %v3899
  %v3908 = vadd.f32 %v3885, %v3899
  %v3909 = vadd.f32 %v3886, %v3899
  %v3910 = vadd.f32 %v3887, %v3899
  %v3911 = vadd.f32 %v3888, %v3899
  %v3912 = vadd.f32 %v3889, %v3899
  %v3913 = vadd.f32 %v3890, %v3899
  %v3914 = vadd.f32 %v3891, %v3899
  %v3915 = vadd.f32 %v3892, %v3899
  %v3916 = vadd.f32 %v3893, %v3899
  %v3917 = vld [vmem:[%s0] sm:$0xff]
  %v3918 = vld [vmem:[%s0 + $0x8] sm:$0xff]
  %v3919 = vld [vmem:[%s0 + $0x10] sm:$0xff]
  %v3920 = vld [vmem:[%s0 + $0x18] sm:$0xff]
  %v3921 = vld [vmem:[%s0 + $0x20] sm:$0xff]
  %v3922 = vld [vmem:[%s0 + $0x28] sm:$0xff]
  %v3923 = vld [vmem:[%s0 + $0x30] sm:$0xff]
  %v3924 = vld [vmem:[%s0 + $0x38] sm:$0xff]
  %v3925 = vld [vmem:[%s0 + $0x40] sm:$0xff]
  %v3926 = vld [vmem:[%s0 + $0x48] sm:$0xff]
  %v3927 = vld [vmem:[%s0 + $0x50] sm:$0xff]
  %v3928 = vld [vmem:[%s0 + $0x58] sm:$0xff]
  %v3929 = vld [vmem:[%s0 + $0x60] sm:$0xff]
  %v3930 = vld [vmem:[%s0 + $0x68] sm:$0xff]
  %v3931 = vld [vmem:[%s0 + $0x70] sm:$0xff]
  %v3932 = vld [vmem:[%s0 + $0x78] sm:$0xff]
  %v3933 = vadd.f32 %v3901, %v3917
  %v3934 = vadd.f32 %v3902, %v3918
  %v3935 = vadd.f32 %v3903, %v3919
  %v3936 = vadd.f32 %v3904, %v3920
  %v3937 = vadd.f32 %v3905, %v3921
  %v3938 = vadd.f32 %v3906, %v3922
  %v3939 = vadd.f32 %v3907, %v3923
  %v3940 = vadd.f32 %v3908, %v3924
  %v3941 = vadd.f32 %v3909, %v3925
  %v3942 = vadd.f32 %v3910, %v3926
  %v3943 = vadd.f32 %v3911, %v3927
  %v3944 = vadd.f32 %v3912, %v3928
  %v3945 = vadd.f32 %v3913, %v3929
  %v3946 = vadd.f32 %v3914, %v3930
  %v3947 = vadd.f32 %v3915, %v3931
  %v3948 = vadd.f32 %v3916, %v3932
  %v3949 = vmax.f32 %v3933, 0.0
  %v3950 = vmax.f32 %v3934, 0.0
  %v3951 = vmax.f32 %v3935, 0.0
  %v3952 = vmax.f32 %v3936, 0.0
  %v3953 = vmax.f32 %v3937, 0.0
  %v3954 = vmax.f32 %v3938, 0.0
  %v3955 = vmax.f32 %v3939, 0.0
  %v3956 = vmax.f32 %v3940, 0.0
  %v3957 = vmax.f32 %v3941, 0.0
  %v3958 = vmax.f32 %v3942, 0.0
  %v3959 = vmax.f32 %v3943, 0.0
  %v3960 = vmax.f32 %v3944, 0.0
  %v3961 = vmax.f32 %v3945, 0.0
  %v3962 = vmax.f32 %v3946, 0.0
  %v3963 = vmax.f32 %v3947, 0.0
  %v3964 = vmax.f32 %v3948, 0.0
  %3965 = vst [vmem:[%s5] sm:$0xff] %v3949
  %3966 = vst [vmem:[%s5 + $0x8] sm:$0xff] %v3950
  %3967 = vst [vmem:[%s5 + $0x10] sm:$0xff] %v3951
  %3968 = vst [vmem:[%s5 + $0x18] sm:$0xff] %v3952
  %3969 = vst [vmem:[%s5 + $0x20] sm:$0xff] %v3953
  %3970 = vst [vmem:[%s5 + $0x28] sm:$0xff] %v3954
  %3971 = vst [vmem:[%s5 + $0x30] sm:$0xff] %v3955
  %3972 = vst [vmem:[%s5 + $0x38] sm:$0xff] %v3956
  %3973 = vst [vmem:[%s5 + $0x40] sm:$0xff] %v3957
  %3974 = vst [vmem:[%s5 + $0x48] sm:$0xff] %v3958
  %3975 = vst [vmem:[%s5 + $0x50] sm:$0xff] %v3959
  %3976 = vst [vmem:[%s5 + $0x58] sm:$0xff] %v3960
  %3977 = vst [vmem:[%s5 + $0x60] sm:$0xff] %v3961
  %3978 = vst [vmem:[%s5 + $0x68] sm:$0xff] %v3962
  %3979 = vst [vmem:[%s5 + $0x70] sm:$0xff] %v3963
  %3980 = vst [vmem:[%s5 + $0x78] sm:$0xff] %v3964
  // Predicated region
  $region22: #{basic_block_forward.1} parent=0 // pred_check
    _
  $region23: #{basic_block_forward.1} parent=0 // pred_check_branch
    %3982 = sbr.rel (0) target = $region25
  $region24: #{basic_block_forward.1} parent=0 // pred_region
    _
  $region25: #{basic_block_forward.1} parent=0 // pred_fallthru
    _
  // Predicated region
  $region26: #{basic_block_forward.1} parent=0 // pred_check
    _
  $region27: #{basic_block_forward.1} parent=0 // pred_check_branch
    %3984 = sbr.rel (0) target = $region29
  $region28: #{basic_block_forward.1} parent=0 // pred_region
    _
  $region29: #{basic_block_forward.1} parent=0 // pred_fallthru
    _

</llo_original>
